<compile_context>
chip_gen: v7x
topology: tpu7x:2x2x1
jax: 0.10.0
libtpu: 0.0.40
codegen_flags: <defaults>
</compile_context>

<pallas_src>
import functools
import math

import jax
import jax.numpy as jnp
from jax.experimental import pallas as pl
from jax.experimental.pallas import tpu as pltpu

NEG_BIG = -1e30            # finite large-negative mask (avoids NaN on fully-masked rows)
_INV_SQRT2 = 1.0 / math.sqrt(2.0)


def _gelu(y):
    # exact (erf) GELU, matching torch.nn.functional.gelu default, in f32
    return 0.5 * y * (1.0 + jax.lax.erf(y * _INV_SQRT2))


def _tile(dim, prefs):
    """Largest preferred tile that divides `dim`; fall back to the full dim.

    Preferred tiles are 128/256/512 multiples (MXU/lane friendly on
    v5e/v6e/v7x) and small enough that double-buffered blocks stay well under
    v7x's 64 MiB VMEM.
    """
    for p in prefs:
        if dim >= p and dim % p == 0:
            return p
    return dim


# ------------------------------------------------------------------ kernels

def _linear_kernel(x_ref, w_ref, b_ref, o_ref, acc_ref, *, act):
    @pl.when(pl.program_id(2) == 0)
    def _():
        acc_ref[...] = jnp.zeros_like(acc_ref)

    acc_ref[...] += jnp.dot(x_ref[...], w_ref[...],
                            preferred_element_type=jnp.float32)

    @pl.when(pl.program_id(2) == pl.num_programs(2) - 1)
    def _():
        y = acc_ref[...] + b_ref[...]
        if act == "gelu":
            y = _gelu(y)
        o_ref[...] = y.astype(o_ref.dtype)


def pallas_linear(x, w, b=None, act=None, out_dtype=jnp.bfloat16):
    """x: (M, K); w: (K, N) bf16 (pre-transposed from torch layout); b: (N,) f32."""
    M, K = x.shape
    N = w.shape[1]
    if b is None:
        b = jnp.zeros((N,), jnp.float32)
    tm = _tile(M, (256, 128))
    tn = _tile(N, (256, 128))
    tk = _tile(K, (512, 256, 128))
    grid = (M // tm, N // tn, K // tk)
    return pl.pallas_call(
        functools.partial(_linear_kernel, act=act),
        out_shape=jax.ShapeDtypeStruct((M, N), out_dtype),
        grid=grid,
        in_specs=[
            pl.BlockSpec((tm, tk), lambda i, j, k: (i, k)),
            pl.BlockSpec((tk, tn), lambda i, j, k: (k, j)),
            pl.BlockSpec((1, tn), lambda i, j, k: (0, j)),
        ],
        out_specs=pl.BlockSpec((tm, tn), lambda i, j, k: (i, j)),
        scratch_shapes=[pltpu.VMEM((tm, tn), jnp.float32)],
        compiler_params=pltpu.CompilerParams(
            dimension_semantics=("parallel", "parallel", "arbitrary")),
    )(x.astype(jnp.bfloat16), w.astype(jnp.bfloat16),
      b.reshape(1, N).astype(jnp.float32))


def _linear_res_ln_kernel(x_ref, w_ref, b_ref, r_ref, g_ref, be_ref, o_ref,
                          acc_ref, *, eps):
    @pl.when(pl.program_id(1) == 0)
    def _():
        acc_ref[...] = jnp.zeros_like(acc_ref)

    acc_ref[...] += jnp.dot(x_ref[...], w_ref[...],
                            preferred_element_type=jnp.float32)

    @pl.when(pl.program_id(1) == pl.num_programs(1) - 1)
    def _():
        y = acc_ref[...] + b_ref[...] + r_ref[...].astype(jnp.float32)
        mu = jnp.mean(y, axis=-1, keepdims=True)
        d = y - mu
        var = jnp.mean(d * d, axis=-1, keepdims=True)
        yn = d * jax.lax.rsqrt(var + eps)
        o_ref[...] = (yn * g_ref[...] + be_ref[...]).astype(o_ref.dtype)


def pallas_linear_residual_ln(x, w, b, res, ln_w, ln_b, eps=1e-5,
                              out_dtype=jnp.bfloat16):
    """LayerNorm(res + x @ w + b); LN over the full output feature dim (fused epilogue)."""
    M, K = x.shape
    N = w.shape[1]
    tm = _tile(M, (256, 128))
    tk = _tile(K, (512, 256, 128))
    grid = (M // tm, K // tk)
    return pl.pallas_call(
        functools.partial(_linear_res_ln_kernel, eps=eps),
        out_shape=jax.ShapeDtypeStruct((M, N), out_dtype),
        grid=grid,
        in_specs=[
            pl.BlockSpec((tm, tk), lambda i, k: (i, k)),
            pl.BlockSpec((tk, N), lambda i, k: (k, 0)),
            pl.BlockSpec((1, N), lambda i, k: (0, 0)),
            pl.BlockSpec((tm, N), lambda i, k: (i, 0)),
            pl.BlockSpec((1, N), lambda i, k: (0, 0)),
            pl.BlockSpec((1, N), lambda i, k: (0, 0)),
        ],
        out_specs=pl.BlockSpec((tm, N), lambda i, k: (i, 0)),
        scratch_shapes=[pltpu.VMEM((tm, N), jnp.float32)],
        compiler_params=pltpu.CompilerParams(
            dimension_semantics=("parallel", "arbitrary")),
    )(x.astype(jnp.bfloat16), w.astype(jnp.bfloat16),
      b.reshape(1, N).astype(jnp.float32), res.astype(jnp.bfloat16),
      ln_w.reshape(1, N).astype(jnp.float32),
      ln_b.reshape(1, N).astype(jnp.float32))


def _ffn_ln_kernel(x_ref, w1_ref, b1_ref, w2_ref, b2_ref, g_ref, be_ref,
                   o_ref, *, eps):
    x = x_ref[...]                                             # (tm, D) bf16
    h = jnp.dot(x, w1_ref[...], preferred_element_type=jnp.float32) + b1_ref[...]
    h = _gelu(h)                                               # f32
    y = jnp.dot(h.astype(jnp.bfloat16), w2_ref[...],
                preferred_element_type=jnp.float32) + b2_ref[...]
    y = y + x.astype(jnp.float32)                              # residual
    mu = jnp.mean(y, axis=-1, keepdims=True)
    d = y - mu
    var = jnp.mean(d * d, axis=-1, keepdims=True)
    yn = d * jax.lax.rsqrt(var + eps)
    o_ref[...] = (yn * g_ref[...] + be_ref[...]).astype(o_ref.dtype)


def pallas_ffn_ln(x, w1, b1, w2, b2, ln_w, ln_b, eps=1e-5):
    """LayerNorm(x + Linear2(GELU(Linear1(x)))); the (tm, dim_ff) intermediate stays in VMEM."""
    M, D = x.shape
    F = w1.shape[1]
    tm = _tile(M, (256, 128))
    return pl.pallas_call(
        functools.partial(_ffn_ln_kernel, eps=eps),
        out_shape=jax.ShapeDtypeStruct((M, D), jnp.bfloat16),
        grid=(M // tm,),
        in_specs=[
            pl.BlockSpec((tm, D), lambda i: (i, 0)),
            pl.BlockSpec((D, F), lambda i: (0, 0)),
            pl.BlockSpec((1, F), lambda i: (0, 0)),
            pl.BlockSpec((F, D), lambda i: (0, 0)),
            pl.BlockSpec((1, D), lambda i: (0, 0)),
            pl.BlockSpec((1, D), lambda i: (0, 0)),
            pl.BlockSpec((1, D), lambda i: (0, 0)),
        ],
        out_specs=pl.BlockSpec((tm, D), lambda i: (i, 0)),
        compiler_params=pltpu.CompilerParams(dimension_semantics=("parallel",)),
    )(x.astype(jnp.bfloat16), w1.astype(jnp.bfloat16),
      b1.reshape(1, F).astype(jnp.float32), w2.astype(jnp.bfloat16),
      b2.reshape(1, D).astype(jnp.float32),
      ln_w.reshape(1, D).astype(jnp.float32),
      ln_b.reshape(1, D).astype(jnp.float32))


def _ln_kernel(x_ref, g_ref, be_ref, o_ref, *, eps):
    y = x_ref[...].astype(jnp.float32)
    mu = jnp.mean(y, axis=-1, keepdims=True)
    d = y - mu
    var = jnp.mean(d * d, axis=-1, keepdims=True)
    o_ref[...] = (d * jax.lax.rsqrt(var + eps) * g_ref[...]
                  + be_ref[...]).astype(o_ref.dtype)


def pallas_layernorm(x, w, b, eps=1e-5, out_dtype=jnp.bfloat16):
    M, D = x.shape
    tm = _tile(M, (256, 128))
    return pl.pallas_call(
        functools.partial(_ln_kernel, eps=eps),
        out_shape=jax.ShapeDtypeStruct((M, D), out_dtype),
        grid=(M // tm,),
        in_specs=[
            pl.BlockSpec((tm, D), lambda i: (i, 0)),
            pl.BlockSpec((1, D), lambda i: (0, 0)),
            pl.BlockSpec((1, D), lambda i: (0, 0)),
        ],
        out_specs=pl.BlockSpec((tm, D), lambda i: (i, 0)),
        compiler_params=pltpu.CompilerParams(dimension_semantics=("parallel",)),
    )(x, w.reshape(1, D).astype(jnp.float32), b.reshape(1, D).astype(jnp.float32))


def _attn_kernel(q_ref, k_ref, v_ref, kb_ref, o_ref, *, scale, causal):
    q = q_ref[0, 0]            # (L, hd) bf16
    k = k_ref[0, 0]            # (S, hd) bf16
    v = v_ref[0, 0]            # (S, hd) bf16
    s = jax.lax.dot_general(q, k, (((1,), (1,)), ((), ())),
                            preferred_element_type=jnp.float32)   # (L, S) f32
    s = s * scale + kb_ref[0]                                      # + (1, S) pad bias
    if causal:
        L, S = s.shape
        row = jax.lax.broadcasted_iota(jnp.int32, (L, S), 0)
        col = jax.lax.broadcasted_iota(jnp.int32, (L, S), 1)
        s = jnp.where(col <= row, s, NEG_BIG)
    m = jnp.max(s, axis=-1, keepdims=True)
    p = jnp.exp(s - m)
    denom = jnp.sum(p, axis=-1, keepdims=True)
    p = p * pl.reciprocal(denom, approx=True)
    o_ref[0, 0] = jnp.dot(p.astype(v.dtype), v,
                          preferred_element_type=jnp.float32).astype(o_ref.dtype)


def pallas_attention(q, k, v, kpm_bias, *, scale, causal):
    """q: (B, H, L, hd), k/v: (B, H, S, hd) bf16; kpm_bias: (B, 1, S) f32 additive."""
    B, H, L, hd = q.shape
    S = k.shape[2]
    return pl.pallas_call(
        functools.partial(_attn_kernel, scale=scale, causal=causal),
        out_shape=jax.ShapeDtypeStruct((B, H, L, hd), jnp.bfloat16),
        grid=(B, H),
        in_specs=[
            pl.BlockSpec((1, 1, L, hd), lambda b, h: (b, h, 0, 0)),
            pl.BlockSpec((1, 1, S, hd), lambda b, h: (b, h, 0, 0)),
            pl.BlockSpec((1, 1, S, hd), lambda b, h: (b, h, 0, 0)),
            pl.BlockSpec((1, 1, S), lambda b, h: (b, 0, 0)),
        ],
        out_specs=pl.BlockSpec((1, 1, L, hd), lambda b, h: (b, h, 0, 0)),
        compiler_params=pltpu.CompilerParams(
            dimension_semantics=("parallel", "parallel")),
    )(q, k, v, kpm_bias)


# --------------------------------------------------------------- model glue
# Batch-major layout: activations are (B*S, E) with row index b*S + s
# (mathematically identical to nn.Transformer's seq-major layout since every
#  op here is per-token or per-(batch, head)).

def self_attention(x, p, B, S, n_head, kpm_bias, causal):
    E = x.shape[1]
    hd = E // n_head
    qkv = pallas_linear(x, p["in_w_t"], p["in_b"])                    # (B*S, 3E) fused QKV
    qkv = qkv.reshape(B, S, 3, n_head, hd).transpose(2, 0, 3, 1, 4)   # (3, B, H, S, hd)
    o = pallas_attention(qkv[0], qkv[1], qkv[2], kpm_bias,
                         scale=1.0 / math.sqrt(hd), causal=causal)    # (B, H, S, hd)
    return o.transpose(0, 2, 1, 3).reshape(B * S, E)


def project_memory_kv(mem, p, B, S, n_head):
    """Cross-attention K/V projection of the encoder memory (shared weights → done once)."""
    E = mem.shape[1]
    hd = E // n_head
    kv = pallas_linear(mem, p["kv_w_t"], p["kv_b"])                   # (B*S, 2E)
    kv = kv.reshape(B, S, 2, n_head, hd).transpose(2, 0, 3, 1, 4)     # (2, B, H, S, hd)
    return kv[0], kv[1]


def cross_attention(x, mem_k, mem_v, p, B, L, n_head, kpm_bias):
    E = x.shape[1]
    hd = E // n_head
    q = pallas_linear(x, p["q_w_t"], p["q_b"])                        # (B*L, E)
    q = q.reshape(B, L, n_head, hd).transpose(0, 2, 1, 3)             # (B, H, L, hd)
    o = pallas_attention(q, mem_k, mem_v, kpm_bias,
                         scale=1.0 / math.sqrt(hd), causal=False)
    return o.transpose(0, 2, 1, 3).reshape(B * L, E)


def encoder_layer(x, attn_p, lp, src_kpm_bias, B, S, n_head):
    attn = self_attention(x, attn_p, B, S, n_head, src_kpm_bias, causal=False)
    x = pallas_linear_residual_ln(attn, attn_p["out_w_t"], attn_p["out_b"], x,
                                  lp["norm1_w"], lp["norm1_b"])
    x = pallas_ffn_ln(x, lp["lin1_w_t"], lp["lin1_b"], lp["lin2_w_t"], lp["lin2_b"],
                      lp["norm2_w"], lp["norm2_b"])
    return x


def decoder_layer(x, mem_k, mem_v, self_p, cross_p, lp, B, L,
                  tgt_kpm_bias, mem_kpm_bias, n_head):
    attn = self_attention(x, self_p, B, L, n_head, tgt_kpm_bias, causal=True)
    x = pallas_linear_residual_ln(attn, self_p["out_w_t"], self_p["out_b"], x,
                                  lp["norm1_w"], lp["norm1_b"])
    attn = cross_attention(x, mem_k, mem_v, cross_p, B, L, n_head, mem_kpm_bias)
    x = pallas_linear_residual_ln(attn, cross_p["out_w_t"], cross_p["out_b"], x,
                                  lp["norm2_w"], lp["norm2_b"])
    x = pallas_ffn_ln(x, lp["lin1_w_t"], lp["lin1_b"], lp["lin2_w_t"], lp["lin2_b"],
                      lp["norm3_w"], lp["norm3_b"])
    return x


def sinusoidal_pe(max_len, d_model):
    pos = jnp.arange(max_len, dtype=jnp.float32)[:, None]
    i = jnp.arange(0, d_model, 2, dtype=jnp.float32)
    div = jnp.exp(-math.log(10000.0) * i / d_model)
    pe = jnp.zeros((max_len, d_model), jnp.float32)
    pe = pe.at[:, 0::2].set(jnp.sin(pos * div))
    pe = pe.at[:, 1::2].set(jnp.cos(pos * div))
    return pe


def embed(table, ids, pe):
    # TODO(synk): TransformerEmbedding / TransformerEmbedding_bilinear are not
    # defined in the provided source; a plain lookup * sqrt(d_model) +
    # sinusoidal PE is used here as the deterministic stand-in.
    d_model = table.shape[-1]
    return table[ids] * math.sqrt(d_model) + pe[: ids.shape[1]][None]   # (B, S, E)


def transformer_forward(params, src_ids, trg_ids, *, n_head, pad_idx=0):
    B, S = src_ids.shape
    L = trg_ids.shape[1]

    # key-padding masks as tiny additive (B, 1, S) f32 biases (never B*H*L*S)
    src_kpm_bias = jnp.where(src_ids == pad_idx, NEG_BIG, 0.0).astype(jnp.float32).reshape(B, 1, S)
    tgt_kpm_bias = jnp.where(trg_ids == pad_idx, NEG_BIG, 0.0).astype(jnp.float32).reshape(B, 1, L)

    enc = embed(params["src_emb"], src_ids, params["pe_src"])           # (B, S, E) f32
    dec = embed(params["trg_emb"], trg_ids, params["pe_trg"])           # (B, L, E) f32
    E = enc.shape[-1]
    enc = enc.astype(jnp.bfloat16).reshape(B * S, E)
    dec = dec.astype(jnp.bfloat16).reshape(B * L, E)

    for lp in params["enc_layers"]:
        enc = encoder_layer(enc, params["enc_attn"], lp, src_kpm_bias, B, S, n_head)

    # cross-attention weights are shared across decoder layers → project memory K/V once
    mem_k, mem_v = project_memory_kv(enc, params["dec_cross_attn"], B, S, n_head)

    for lp in params["dec_layers"]:
        dec = decoder_layer(dec, mem_k, mem_v, params["dec_self_attn"],
                            params["dec_cross_attn"], lp, B, L,
                            tgt_kpm_bias, src_kpm_bias, n_head)

    # output head: linear(no bias)+GELU -> LayerNorm -> linear(no bias) -> logits (f32)
    x = pallas_linear(dec, params["out_lin1_w_t"], None, act="gelu")     # (B*L, d_emb)
    x = pallas_layernorm(x, params["out_norm_w"], params["out_norm_b"])
    x = pallas_linear(x, params["out_lin2_w_t"], None, out_dtype=jnp.float32)
    return x.reshape(B, L, -1)


# --------------------------------------------------------------- params

def init_params(key, src_vocab, trg_vocab, d_model, d_emb, n_head, dim_ff,
                n_enc, n_dec, src_max_len, trg_max_len):
    keys = iter(jax.random.split(key, 256))
    bf16 = jnp.bfloat16

    def w(shape, scale=0.02):
        return jax.random.normal(next(keys), shape, jnp.float32) * scale

    def mha():
        in_w = w((3 * d_model, d_model))     # torch in_proj_weight layout (3E, E)
        out_w = w((d_model, d_model))
        E = d_model
        return {
            "in_w_t": in_w.T.astype(bf16),               # (E, 3E)  fused QKV (pre-transposed)
            "in_b": jnp.zeros((3 * E,), jnp.float32),
            "q_w_t": in_w[:E].T.astype(bf16),            # (E, E)   cross-attn query
            "q_b": jnp.zeros((E,), jnp.float32),
            "kv_w_t": in_w[E:].T.astype(bf16),           # (E, 2E)  cross-attn key/value
            "kv_b": jnp.zeros((2 * E,), jnp.float32),
            "out_w_t": out_w.T.astype(bf16),
            "out_b": jnp.zeros((E,), jnp.float32),
        }

    def enc_layer():
        return {
            "lin1_w_t": w((dim_ff, d_model)).T.astype(bf16),
            "lin1_b": jnp.zeros((dim_ff,), jnp.float32),
            "lin2_w_t": w((d_model, dim_ff)).T.astype(bf16),
            "lin2_b": jnp.zeros((d_model,), jnp.float32),
            "norm1_w": jnp.ones((d_model,), jnp.float32),
            "norm1_b": jnp.zeros((d_model,), jnp.float32),
            "norm2_w": jnp.ones((d_model,), jnp.float32),
            "norm2_b": jnp.zeros((d_model,), jnp.float32),
        }

    def dec_layer():
        p = enc_layer()
        p["norm3_w"] = jnp.ones((d_model,), jnp.float32)
        p["norm3_b"] = jnp.zeros((d_model,), jnp.float32)
        return p

    return {
        "src_emb": w((src_vocab, d_model), 0.1),
        "trg_emb": w((trg_vocab, d_model), 0.1),
        "pe_src": sinusoidal_pe(src_max_len, d_model),
        "pe_trg": sinusoidal_pe(trg_max_len, d_model),
        "enc_attn": mha(),            # shared across all encoder layers (as in source)
        "dec_self_attn": mha(),       # shared across all decoder layers (as in source)
        "dec_cross_attn": mha(),      # shared across all decoder layers (as in source)
        "enc_layers": [enc_layer() for _ in range(n_enc)],
        "dec_layers": [dec_layer() for _ in range(n_dec)],
        "out_lin1_w_t": w((d_emb, d_model)).T.astype(bf16),    # trg_output_linear (no bias)
        "out_norm_w": jnp.ones((d_emb,), jnp.float32),
        "out_norm_b": jnp.zeros((d_emb,), jnp.float32),
        "out_lin2_w_t": w((trg_vocab, d_emb)).T.astype(bf16),  # trg_output_linear2 (no bias)
    }


# ---------------------------------------------------------------- main

if __name__ == "__main__":
    # small config consistent with the module (scaled down)
    D_MODEL, D_EMB, N_HEAD, DIM_FF = 32, 16, 4, 64
    N_ENC, N_DEC = 2, 2
    SRC_VOCAB, TRG_VOCAB = 23, 29
    PAD, BOS = 0, 1
    B, S_SRC, S_TRG = 2, 10, 8

    key = jax.random.PRNGKey(0)
    kp, ks, kt = jax.random.split(key, 3)

    params = init_params(kp, SRC_VOCAB, TRG_VOCAB, D_MODEL, D_EMB, N_HEAD, DIM_FF,
                         N_ENC, N_DEC, src_max_len=64, trg_max_len=64)

    src_ids = jax.random.randint(ks, (B, S_SRC), 3, SRC_VOCAB, dtype=jnp.int32)
    trg_ids = jax.random.randint(kt, (B, S_TRG), 3, TRG_VOCAB, dtype=jnp.int32)
    src_ids = src_ids.at[:, 0].set(BOS).at[:, -2:].set(PAD)   # some padding at the end
    trg_ids = trg_ids.at[:, 0].set(BOS).at[:, -1:].set(PAD)
    # king_id / non_pad_position are unused in this (baseline, eval) path.

    fwd = jax.jit(functools.partial(transformer_forward, n_head=N_HEAD, pad_idx=PAD))
    out = jax.block_until_ready(fwd(params, src_ids, trg_ids))

    assert out.shape == (B, S_TRG, TRG_VOCAB), out.shape
    assert bool(jnp.all(jnp.isfinite(out)))
    print("KERNEL_OK")
</pallas_src>

<mosaic_0001>
module attributes {stable_mosaic.version = 11 : i64} {
  func.func @_linear_kernel(%arg0: i32, %arg1: i32, %arg2: i32, %arg3: memref<20x32xbf16, #tpu.memory_space<vmem>>, %arg4: memref<32x96xbf16, #tpu.memory_space<vmem>>, %arg5: memref<1x96xf32, #tpu.memory_space<vmem>>, %arg6: memref<20x96xbf16, #tpu.memory_space<vmem>>, %arg7: memref<20x96xf32, #tpu.memory_space<vmem>>) attributes {dimension_semantics = [#tpu.dimension_semantics<parallel>, #tpu.dimension_semantics<parallel>, #tpu.dimension_semantics<arbitrary>], iteration_bounds = array<i64: 1, 1, 1>, scalar_prefetch = 0 : i64, scratch_operands = 1 : i64, tpu.core_type = #tpu.core_type<tc>, window_params = [{transform_indices = @transform_0, window_bounds = array<i64: 20, 32>}, {transform_indices = @transform_1, window_bounds = array<i64: 32, 96>}, {transform_indices = @transform_2, window_bounds = array<i64: 1, 96>}, {transform_indices = @transform_3, window_bounds = array<i64: 20, 96>}]} {
    %c0_i32 = arith.constant 0 : i32
    %0 = arith.cmpi eq, %arg2, %c0_i32 : i32
    %1 = arith.extui %0 : i1 to i32
    %c0_i32_0 = arith.constant 0 : i32
    %2 = arith.cmpi ne, %1, %c0_i32_0 : i32
    scf.if %2 {
      %cst_10 = arith.constant 0.000000e+00 : f32
      %12 = vector.broadcast %cst_10 : f32 to vector<20x96xf32>
      %c0_11 = arith.constant 0 : index
      %c0_12 = arith.constant 0 : index
      %13 = vector.load %arg7[%c0_11, %c0_12] : memref<20x96xf32, #tpu.memory_space<vmem>>, vector<20x96xf32>
      tpu.vector_store %arg7[%c0_11, %c0_12], %12 {strides = array<i32>} : memref<20x96xf32, #tpu.memory_space<vmem>>, vector<20x96xf32>,
    } else {
    }
    %c0 = arith.constant 0 : index
    %c0_1 = arith.constant 0 : index
    %3 = vector.load %arg7[%c0, %c0_1] : memref<20x96xf32, #tpu.memory_space<vmem>>, vector<20x96xf32>
    %c0_2 = arith.constant 0 : index
    %c0_3 = arith.constant 0 : index
    %4 = vector.load %arg3[%c0_2, %c0_3] : memref<20x32xbf16, #tpu.memory_space<vmem>>, vector<20x32xbf16>
    %c0_4 = arith.constant 0 : index
    %c0_5 = arith.constant 0 : index
    %5 = vector.load %arg4[%c0_4, %c0_5] : memref<32x96xbf16, #tpu.memory_space<vmem>>, vector<32x96xbf16>
    %cst = arith.constant dense<0.000000e+00> : vector<20x96xf32>
    %6 = tpu.matmul %4, %5, %cst {dimension_numbers = #tpu.dot_dimension_numbers<[1], [0], [0], [1], [0, 0, 1, 1], [], []>} : vector<20x32xbf16>, vector<32x96xbf16>, vector<20x96xf32> -> vector<20x96xf32>
    %7 = arith.addf %3, %6 : vector<20x96xf32>
    %c0_6 = arith.constant 0 : index
    %c0_7 = arith.constant 0 : index
    %8 = vector.load %arg7[%c0_6, %c0_7] : memref<20x96xf32, #tpu.memory_space<vmem>>, vector<20x96xf32>
    tpu.vector_store %arg7[%c0_6, %c0_7], %7 {strides = array<i32>} : memref<20x96xf32, #tpu.memory_space<vmem>>, vector<20x96xf32>,
    %c0_i32_8 = arith.constant 0 : i32
    %9 = arith.cmpi eq, %arg2, %c0_i32_8 : i32
    %10 = arith.extui %9 : i1 to i32
    %c0_i32_9 = arith.constant 0 : i32
    %11 = arith.cmpi ne, %10, %c0_i32_9 : i32
    scf.if %11 {
      %c0_10 = arith.constant 0 : index
      %c0_11 = arith.constant 0 : index
      %12 = vector.load %arg7[%c0_10, %c0_11] : memref<20x96xf32, #tpu.memory_space<vmem>>, vector<20x96xf32>
      %c0_12 = arith.constant 0 : index
      %c0_13 = arith.constant 0 : index
      %13 = vector.load %arg5[%c0_12, %c0_13] : memref<1x96xf32, #tpu.memory_space<vmem>>, vector<1x96xf32>
      %14 = vector.broadcast %13 : vector<1x96xf32> to vector<20x96xf32>
      %15 = arith.addf %12, %14 : vector<20x96xf32>
      %16 = arith.truncf %15 : vector<20x96xf32> to vector<20x96xbf16>
      %c0_14 = arith.constant 0 : index
      %c0_15 = arith.constant 0 : index
      %17 = vector.load %arg6[%c0_14, %c0_15] : memref<20x96xbf16, #tpu.memory_space<vmem>>, vector<20x96xbf16>
      tpu.vector_store %arg6[%c0_14, %c0_15], %16 {strides = array<i32>} : memref<20x96xbf16, #tpu.memory_space<vmem>>, vector<20x96xbf16>,
    } else {
    }
    return
  }
  func.func @transform_0(%arg0: i32, %arg1: i32, %arg2: i32) -> (i32, i32) {
    %c0_i32 = arith.constant 0 : i32
    return %arg0, %arg2 : i32, i32
  }
  func.func @transform_1(%arg0: i32, %arg1: i32, %arg2: i32) -> (i32, i32) {
    %c0_i32 = arith.constant 0 : i32
    return %arg2, %arg1 : i32, i32
  }
  func.func @transform_2(%arg0: i32, %arg1: i32, %arg2: i32) -> (i32, i32) {
    %c0_i32 = arith.constant 0 : i32
    %c0_i32_0 = arith.constant 0 : i32
    return %c0_i32, %arg1 : i32, i32
  }
  func.func @transform_3(%arg0: i32, %arg1: i32, %arg2: i32) -> (i32, i32) {
    %c0_i32 = arith.constant 0 : i32
    return %arg0, %arg1 : i32, i32
  }
}

module attributes {stable_mosaic.version = 11 : i64} {
  func.func @_attn_kernel(%arg0: i32, %arg1: i32, %arg2: memref<1x1x10x8xbf16, #tpu.memory_space<vmem>>, %arg3: memref<1x1x10x8xbf16, #tpu.memory_space<vmem>>, %arg4: memref<1x1x10x8xbf16, #tpu.memory_space<vmem>>, %arg5: memref<1x1x10xf32, #tpu.memory_space<vmem>>, %arg6: memref<1x1x10x8xbf16, #tpu.memory_space<vmem>>) attributes {dimension_semantics = [#tpu.dimension_semantics<parallel>, #tpu.dimension_semantics<parallel>], iteration_bounds = array<i64: 2, 4>, scalar_prefetch = 0 : i64, scratch_operands = 0 : i64, tpu.core_type = #tpu.core_type<tc>, window_params = [{transform_indices = @transform_0, window_bounds = array<i64: 1, 1, 10, 8>}, {transform_indices = @transform_1, window_bounds = array<i64: 1, 1, 10, 8>}, {transform_indices = @transform_2, window_bounds = array<i64: 1, 1, 10, 8>}, {transform_indices = @transform_3, window_bounds = array<i64: 1, 1, 10>}, {transform_indices = @transform_4, window_bounds = array<i64: 1, 1, 10, 8>}]} {
    %c0 = arith.constant 0 : index
    %c0_0 = arith.constant 0 : index
    %c0_1 = arith.constant 0 : index
    %c0_2 = arith.constant 0 : index
    %0 = vector.load %arg2[%c0, %c0_0, %c0_1, %c0_2] : memref<1x1x10x8xbf16, #tpu.memory_space<vmem>>, vector<1x1x10x8xbf16>
    %1 = vector.shape_cast %0 : vector<1x1x10x8xbf16> to vector<10x8xbf16>
    %c0_3 = arith.constant 0 : index
    %c0_4 = arith.constant 0 : index
    %c0_5 = arith.constant 0 : index
    %c0_6 = arith.constant 0 : index
    %2 = vector.load %arg3[%c0_3, %c0_4, %c0_5, %c0_6] : memref<1x1x10x8xbf16, #tpu.memory_space<vmem>>, vector<1x1x10x8xbf16>
    %3 = vector.shape_cast %2 : vector<1x1x10x8xbf16> to vector<10x8xbf16>
    %c0_7 = arith.constant 0 : index
    %c0_8 = arith.constant 0 : index
    %c0_9 = arith.constant 0 : index
    %c0_10 = arith.constant 0 : index
    %4 = vector.load %arg4[%c0_7, %c0_8, %c0_9, %c0_10] : memref<1x1x10x8xbf16, #tpu.memory_space<vmem>>, vector<1x1x10x8xbf16>
    %5 = vector.shape_cast %4 : vector<1x1x10x8xbf16> to vector<10x8xbf16>
    %cst = arith.constant dense<0.000000e+00> : vector<10x10xf32>
    %6 = tpu.matmul %1, %3, %cst {dimension_numbers = #tpu.dot_dimension_numbers<[1], [1], [0], [0], [0, 0, 1, 0], [], []>} : vector<10x8xbf16>, vector<10x8xbf16>, vector<10x10xf32> -> vector<10x10xf32>
    %cst_11 = arith.constant 0.353553385 : f32
    %7 = vector.broadcast %cst_11 : f32 to vector<10x10xf32>
    %8 = arith.mulf %6, %7 : vector<10x10xf32>
    %c0_12 = arith.constant 0 : index
    %c0_13 = arith.constant 0 : index
    %c0_14 = arith.constant 0 : index
    %9 = vector.load %arg5[%c0_12, %c0_13, %c0_14] : memref<1x1x10xf32, #tpu.memory_space<vmem>>, vector<1x1x10xf32>
    %10 = vector.shape_cast %9 : vector<1x1x10xf32> to vector<1x10xf32>
    %11 = vector.broadcast %10 : vector<1x10xf32> to vector<10x10xf32>
    %12 = arith.addf %8, %11 : vector<10x10xf32>
    %cst_15 = arith.constant dense<0xFF800000> : vector<10xf32>
    %13 = vector.multi_reduction <maximumf>, %12, %cst_15 [1] : vector<10x10xf32> to vector<10xf32>
    %14 = vector.shape_cast %13 : vector<10xf32> to vector<10x1xf32>
    %15 = vector.broadcast %14 : vector<10x1xf32> to vector<10x10xf32>
    %16 = arith.subf %12, %15 : vector<10x10xf32>
    %17 = math.exp %16 : vector<10x10xf32>
    %cst_16 = arith.constant dense<0.000000e+00> : vector<10xf32>
    %18 = vector.multi_reduction <add>, %17, %cst_16 [1] : vector<10x10xf32> to vector<10xf32>
    %19 = vector.shape_cast %18 : vector<10xf32> to vector<10x1xf32>
    %20 = tpu.reciprocal %19 {approx = true} : vector<10x1xf32> -> vector<10x1xf32>
    %21 = vector.broadcast %20 : vector<10x1xf32> to vector<10x10xf32>
    %22 = arith.mulf %17, %21 : vector<10x10xf32>
    %23 = arith.truncf %22 : vector<10x10xf32> to vector<10x10xbf16>
    %cst_17 = arith.constant dense<0.000000e+00> : vector<10x8xf32>
    %24 = tpu.matmul %23, %5, %cst_17 {dimension_numbers = #tpu.dot_dimension_numbers<[1], [0], [0], [1], [0, 0, 1, 1], [], []>} : vector<10x10xbf16>, vector<10x8xbf16>, vector<10x8xf32> -> vector<10x8xf32>
    %25 = arith.truncf %24 : vector<10x8xf32> to vector<10x8xbf16>
    %c0_18 = arith.constant 0 : index
    %c0_19 = arith.constant 0 : index
    %c0_20 = arith.constant 0 : index
    %c0_21 = arith.constant 0 : index
    %26 = vector.load %arg6[%c0_18, %c0_19, %c0_20, %c0_21] : memref<1x1x10x8xbf16, #tpu.memory_space<vmem>>, vector<1x1x10x8xbf16>
    %27 = vector.shape_cast %26 : vector<1x1x10x8xbf16> to vector<10x8xbf16>
    %28 = vector.shape_cast %25 : vector<10x8xbf16> to vector<1x1x10x8xbf16>
    tpu.vector_store %arg6[%c0_18, %c0_19, %c0_20, %c0_21], %28 {strides = array<i32>} : memref<1x1x10x8xbf16, #tpu.memory_space<vmem>>, vector<1x1x10x8xbf16>,
    return
  }
  func.func @transform_0(%arg0: i32, %arg1: i32) -> (i32, i32, i32, i32) {
    %c0_i32 = arith.constant 0 : i32
    %c0_i32_0 = arith.constant 0 : i32
    %c0_i32_1 = arith.constant 0 : i32
    return %arg0, %arg1, %c0_i32, %c0_i32_0 : i32, i32, i32, i32
  }
  func.func @transform_1(%arg0: i32, %arg1: i32) -> (i32, i32, i32, i32) {
    %c0_i32 = arith.constant 0 : i32
    %c0_i32_0 = arith.constant 0 : i32
    %c0_i32_1 = arith.constant 0 : i32
    return %arg0, %arg1, %c0_i32, %c0_i32_0 : i32, i32, i32, i32
  }
  func.func @transform_2(%arg0: i32, %arg1: i32) -> (i32, i32, i32, i32) {
    %c0_i32 = arith.constant 0 : i32
    %c0_i32_0 = arith.constant 0 : i32
    %c0_i32_1 = arith.constant 0 : i32
    return %arg0, %arg1, %c0_i32, %c0_i32_0 : i32, i32, i32, i32
  }
  func.func @transform_3(%arg0: i32, %arg1: i32) -> (i32, i32, i32) {
    %c0_i32 = arith.constant 0 : i32
    %c0_i32_0 = arith.constant 0 : i32
    %c0_i32_1 = arith.constant 0 : i32
    return %arg0, %c0_i32, %c0_i32_0 : i32, i32, i32
  }
  func.func @transform_4(%arg0: i32, %arg1: i32) -> (i32, i32, i32, i32) {
    %c0_i32 = arith.constant 0 : i32
    %c0_i32_0 = arith.constant 0 : i32
    %c0_i32_1 = arith.constant 0 : i32
    return %arg0, %arg1, %c0_i32, %c0_i32_0 : i32, i32, i32, i32
  }
}

module attributes {stable_mosaic.version = 11 : i64} {
  func.func @_linear_res_ln_kernel(%arg0: i32, %arg1: i32, %arg2: memref<20x32xbf16, #tpu.memory_space<vmem>>, %arg3: memref<32x32xbf16, #tpu.memory_space<vmem>>, %arg4: memref<1x32xf32, #tpu.memory_space<vmem>>, %arg5: memref<20x32xbf16, #tpu.memory_space<vmem>>, %arg6: memref<1x32xf32, #tpu.memory_space<vmem>>, %arg7: memref<1x32xf32, #tpu.memory_space<vmem>>, %arg8: memref<20x32xbf16, #tpu.memory_space<vmem>>, %arg9: memref<20x32xf32, #tpu.memory_space<vmem>>) attributes {dimension_semantics = [#tpu.dimension_semantics<parallel>, #tpu.dimension_semantics<arbitrary>], iteration_bounds = array<i64: 1, 1>, scalar_prefetch = 0 : i64, scratch_operands = 1 : i64, tpu.core_type = #tpu.core_type<tc>, window_params = [{transform_indices = @transform_0, window_bounds = array<i64: 20, 32>}, {transform_indices = @transform_1, window_bounds = array<i64: 32, 32>}, {pipeline_mode = #tpu.pipeline_mode<synchronous>, transform_indices = @transform_2, window_bounds = array<i64: 1, 32>}, {transform_indices = @transform_3, window_bounds = array<i64: 20, 32>}, {pipeline_mode = #tpu.pipeline_mode<synchronous>, transform_indices = @transform_4, window_bounds = array<i64: 1, 32>}, {pipeline_mode = #tpu.pipeline_mode<synchronous>, transform_indices = @transform_5, window_bounds = array<i64: 1, 32>}, {transform_indices = @transform_6, window_bounds = array<i64: 20, 32>}]} {
    %c0_i32 = arith.constant 0 : i32
    %0 = arith.cmpi eq, %arg1, %c0_i32 : i32
    %1 = arith.extui %0 : i1 to i32
    %c0_i32_0 = arith.constant 0 : i32
    %2 = arith.cmpi ne, %1, %c0_i32_0 : i32
    scf.if %2 {
      %cst_10 = arith.constant 0.000000e+00 : f32
      %12 = vector.broadcast %cst_10 : f32 to vector<20x32xf32>
      %c0_11 = arith.constant 0 : index
      %c0_12 = arith.constant 0 : index
      %13 = vector.load %arg9[%c0_11, %c0_12] : memref<20x32xf32, #tpu.memory_space<vmem>>, vector<20x32xf32>
      tpu.vector_store %arg9[%c0_11, %c0_12], %12 {strides = array<i32>} : memref<20x32xf32, #tpu.memory_space<vmem>>, vector<20x32xf32>,
    } else {
    }
    %c0 = arith.constant 0 : index
    %c0_1 = arith.constant 0 : index
    %3 = vector.load %arg9[%c0, %c0_1] : memref<20x32xf32, #tpu.memory_space<vmem>>, vector<20x32xf32>
    %c0_2 = arith.constant 0 : index
    %c0_3 = arith.constant 0 : index
    %4 = vector.load %arg2[%c0_2, %c0_3] : memref<20x32xbf16, #tpu.memory_space<vmem>>, vector<20x32xbf16>
    %c0_4 = arith.constant 0 : index
    %c0_5 = arith.constant 0 : index
    %5 = vector.load %arg3[%c0_4, %c0_5] : memref<32x32xbf16, #tpu.memory_space<vmem>>, vector<32x32xbf16>
    %cst = arith.constant dense<0.000000e+00> : vector<20x32xf32>
    %6 = tpu.matmul %4, %5, %cst {dimension_numbers = #tpu.dot_dimension_numbers<[1], [0], [0], [1], [0, 0, 1, 1], [], []>} : vector<20x32xbf16>, vector<32x32xbf16>, vector<20x32xf32> -> vector<20x32xf32>
    %7 = arith.addf %3, %6 : vector<20x32xf32>
    %c0_6 = arith.constant 0 : index
    %c0_7 = arith.constant 0 : index
    %8 = vector.load %arg9[%c0_6, %c0_7] : memref<20x32xf32, #tpu.memory_space<vmem>>, vector<20x32xf32>
    tpu.vector_store %arg9[%c0_6, %c0_7], %7 {strides = array<i32>} : memref<20x32xf32, #tpu.memory_space<vmem>>, vector<20x32xf32>,
    %c0_i32_8 = arith.constant 0 : i32
    %9 = arith.cmpi eq, %arg1, %c0_i32_8 : i32
    %10 = arith.extui %9 : i1 to i32
    %c0_i32_9 = arith.constant 0 : i32
    %11 = arith.cmpi ne, %10, %c0_i32_9 : i32
    scf.if %11 {
      %c0_10 = arith.constant 0 : index
      %c0_11 = arith.constant 0 : index
      %12 = vector.load %arg9[%c0_10, %c0_11] : memref<20x32xf32, #tpu.memory_space<vmem>>, vector<20x32xf32>
      %c0_12 = arith.constant 0 : index
      %c0_13 = arith.constant 0 : index
      %13 = vector.load %arg4[%c0_12, %c0_13] : memref<1x32xf32, #tpu.memory_space<vmem>>, vector<1x32xf32>
      %14 = vector.broadcast %13 : vector<1x32xf32> to vector<20x32xf32>
      %15 = arith.addf %12, %14 : vector<20x32xf32>
      %c0_14 = arith.constant 0 : index
      %c0_15 = arith.constant 0 : index
      %16 = vector.load %arg5[%c0_14, %c0_15] : memref<20x32xbf16, #tpu.memory_space<vmem>>, vector<20x32xbf16>
      %17 = arith.extf %16 : vector<20x32xbf16> to vector<20x32xf32>
      %18 = arith.addf %15, %17 : vector<20x32xf32>
      %cst_16 = arith.constant dense<0.000000e+00> : vector<20xf32>
      %19 = vector.multi_reduction <add>, %18, %cst_16 [1] : vector<20x32xf32> to vector<20xf32>
      %20 = vector.shape_cast %19 : vector<20xf32> to vector<20x1xf32>
      %cst_17 = arith.constant 3.200000e+01 : f32
      %21 = vector.broadcast %cst_17 : f32 to vector<20x1xf32>
      %22 = arith.divf %20, %21 : vector<20x1xf32>
      %23 = vector.broadcast %22 : vector<20x1xf32> to vector<20x32xf32>
      %24 = arith.subf %18, %23 : vector<20x32xf32>
      %25 = arith.mulf %24, %24 : vector<20x32xf32>
      %cst_18 = arith.constant dense<0.000000e+00> : vector<20xf32>
      %26 = vector.multi_reduction <add>, %25, %cst_18 [1] : vector<20x32xf32> to vector<20xf32>
      %27 = vector.shape_cast %26 : vector<20xf32> to vector<20x1xf32>
      %cst_19 = arith.constant 3.200000e+01 : f32
      %28 = vector.broadcast %cst_19 : f32 to vector<20x1xf32>
      %29 = arith.divf %27, %28 : vector<20x1xf32>
      %cst_20 = arith.constant 9.99999974E-6 : f32
      %30 = vector.broadcast %cst_20 : f32 to vector<20x1xf32>
      %31 = arith.addf %29, %30 : vector<20x1xf32>
      %32 = math.rsqrt %31 : vector<20x1xf32>
      %33 = vector.broadcast %32 : vector<20x1xf32> to vector<20x32xf32>
      %34 = arith.mulf %24, %33 : vector<20x32xf32>
      %c0_21 = arith.constant 0 : index
      %c0_22 = arith.constant 0 : index
      %35 = vector.load %arg6[%c0_21, %c0_22] : memref<1x32xf32, #tpu.memory_space<vmem>>, vector<1x32xf32>
      %36 = vector.broadcast %35 : vector<1x32xf32> to vector<20x32xf32>
      %37 = arith.mulf %34, %36 : vector<20x32xf32>
      %c0_23 = arith.constant 0 : index
      %c0_24 = arith.constant 0 : index
      %38 = vector.load %arg7[%c0_23, %c0_24] : memref<1x32xf32, #tpu.memory_space<vmem>>, vector<1x32xf32>
      %39 = vector.broadcast %38 : vector<1x32xf32> to vector<20x32xf32>
      %40 = arith.addf %37, %39 : vector<20x32xf32>
      %41 = arith.truncf %40 : vector<20x32xf32> to vector<20x32xbf16>
      %c0_25 = arith.constant 0 : index
      %c0_26 = arith.constant 0 : index
      %42 = vector.load %arg8[%c0_25, %c0_26] : memref<20x32xbf16, #tpu.memory_space<vmem>>, vector<20x32xbf16>
      tpu.vector_store %arg8[%c0_25, %c0_26], %41 {strides = array<i32>} : memref<20x32xbf16, #tpu.memory_space<vmem>>, vector<20x32xbf16>,
    } else {
    }
    return
  }
  func.func @transform_0(%arg0: i32, %arg1: i32) -> (i32, i32) {
    %c0_i32 = arith.constant 0 : i32
    return %arg0, %arg1 : i32, i32
  }
  func.func @transform_1(%arg0: i32, %arg1: i32) -> (i32, i32) {
    %c0_i32 = arith.constant 0 : i32
    %c0_i32_0 = arith.constant 0 : i32
    return %arg1, %c0_i32 : i32, i32
  }
  func.func @transform_2(%arg0: i32, %arg1: i32) -> (i32, i32) {
    %c0_i32 = arith.constant 0 : i32
    %c0_i32_0 = arith.constant 0 : i32
    %c0_i32_1 = arith.constant 0 : i32
    return %c0_i32, %c0_i32_0 : i32, i32
  }
  func.func @transform_3(%arg0: i32, %arg1: i32) -> (i32, i32) {
    %c0_i32 = arith.constant 0 : i32
    %c0_i32_0 = arith.constant 0 : i32
    return %arg0, %c0_i32 : i32, i32
  }
  func.func @transform_4(%arg0: i32, %arg1: i32) -> (i32, i32) {
    %c0_i32 = arith.constant 0 : i32
    %c0_i32_0 = arith.constant 0 : i32
    %c0_i32_1 = arith.constant 0 : i32
    return %c0_i32, %c0_i32_0 : i32, i32
  }
  func.func @transform_5(%arg0: i32, %arg1: i32) -> (i32, i32) {
    %c0_i32 = arith.constant 0 : i32
    %c0_i32_0 = arith.constant 0 : i32
    %c0_i32_1 = arith.constant 0 : i32
    return %c0_i32, %c0_i32_0 : i32, i32
  }
  func.func @transform_6(%arg0: i32, %arg1: i32) -> (i32, i32) {
    %c0_i32 = arith.constant 0 : i32
    %c0_i32_0 = arith.constant 0 : i32
    return %arg0, %c0_i32 : i32, i32
  }
}

module attributes {stable_mosaic.version = 11 : i64} {
  func.func @_ffn_ln_kernel(%arg0: i32, %arg1: memref<20x32xbf16, #tpu.memory_space<vmem>>, %arg2: memref<32x64xbf16, #tpu.memory_space<vmem>>, %arg3: memref<1x64xf32, #tpu.memory_space<vmem>>, %arg4: memref<64x32xbf16, #tpu.memory_space<vmem>>, %arg5: memref<1x32xf32, #tpu.memory_space<vmem>>, %arg6: memref<1x32xf32, #tpu.memory_space<vmem>>, %arg7: memref<1x32xf32, #tpu.memory_space<vmem>>, %arg8: memref<20x32xbf16, #tpu.memory_space<vmem>>) attributes {dimension_semantics = [#tpu.dimension_semantics<parallel>], iteration_bounds = array<i64: 1>, scalar_prefetch = 0 : i64, scratch_operands = 0 : i64, tpu.core_type = #tpu.core_type<tc>, window_params = [{transform_indices = @transform_0, window_bounds = array<i64: 20, 32>}, {pipeline_mode = #tpu.pipeline_mode<synchronous>, transform_indices = @transform_1, window_bounds = array<i64: 32, 64>}, {pipeline_mode = #tpu.pipeline_mode<synchronous>, transform_indices = @transform_2, window_bounds = array<i64: 1, 64>}, {pipeline_mode = #tpu.pipeline_mode<synchronous>, transform_indices = @transform_3, window_bounds = array<i64: 64, 32>}, {pipeline_mode = #tpu.pipeline_mode<synchronous>, transform_indices = @transform_4, window_bounds = array<i64: 1, 32>}, {pipeline_mode = #tpu.pipeline_mode<synchronous>, transform_indices = @transform_5, window_bounds = array<i64: 1, 32>}, {pipeline_mode = #tpu.pipeline_mode<synchronous>, transform_indices = @transform_6, window_bounds = array<i64: 1, 32>}, {transform_indices = @transform_7, window_bounds = array<i64: 20, 32>}]} {
    %c0 = arith.constant 0 : index
    %c0_0 = arith.constant 0 : index
    %0 = vector.load %arg1[%c0, %c0_0] : memref<20x32xbf16, #tpu.memory_space<vmem>>, vector<20x32xbf16>
    %c0_1 = arith.constant 0 : index
    %c0_2 = arith.constant 0 : index
    %1 = vector.load %arg2[%c0_1, %c0_2] : memref<32x64xbf16, #tpu.memory_space<vmem>>, vector<32x64xbf16>
    %cst = arith.constant dense<0.000000e+00> : vector<20x64xf32>
    %2 = tpu.matmul %0, %1, %cst {dimension_numbers = #tpu.dot_dimension_numbers<[1], [0], [0], [1], [0, 0, 1, 1], [], []>} : vector<20x32xbf16>, vector<32x64xbf16>, vector<20x64xf32> -> vector<20x64xf32>
    %c0_3 = arith.constant 0 : index
    %c0_4 = arith.constant 0 : index
    %3 = vector.load %arg3[%c0_3, %c0_4] : memref<1x64xf32, #tpu.memory_space<vmem>>, vector<1x64xf32>
    %4 = vector.broadcast %3 : vector<1x64xf32> to vector<20x64xf32>
    %5 = arith.addf %2, %4 : vector<20x64xf32>
    %cst_5 = arith.constant 5.000000e-01 : f32
    %6 = vector.broadcast %cst_5 : f32 to vector<20x64xf32>
    %7 = arith.mulf %6, %5 : vector<20x64xf32>
    %cst_6 = arith.constant 0.707106769 : f32
    %8 = vector.broadcast %cst_6 : f32 to vector<20x64xf32>
    %9 = arith.mulf %5, %8 : vector<20x64xf32>
    %10 = math.erf %9 : vector<20x64xf32>
    %cst_7 = arith.constant 1.000000e+00 : f32
    %11 = vector.broadcast %cst_7 : f32 to vector<20x64xf32>
    %12 = arith.addf %11, %10 : vector<20x64xf32>
    %13 = arith.mulf %7, %12 : vector<20x64xf32>
    %14 = arith.truncf %13 : vector<20x64xf32> to vector<20x64xbf16>
    %c0_8 = arith.constant 0 : index
    %c0_9 = arith.constant 0 : index
    %15 = vector.load %arg4[%c0_8, %c0_9] : memref<64x32xbf16, #tpu.memory_space<vmem>>, vector<64x32xbf16>
    %cst_10 = arith.constant dense<0.000000e+00> : vector<20x32xf32>
    %16 = tpu.matmul %14, %15, %cst_10 {dimension_numbers = #tpu.dot_dimension_numbers<[1], [0], [0], [1], [0, 0, 1, 1], [], []>} : vector<20x64xbf16>, vector<64x32xbf16>, vector<20x32xf32> -> vector<20x32xf32>
    %c0_11 = arith.constant 0 : index
    %c0_12 = arith.constant 0 : index
    %17 = vector.load %arg5[%c0_11, %c0_12] : memref<1x32xf32, #tpu.memory_space<vmem>>, vector<1x32xf32>
    %18 = vector.broadcast %17 : vector<1x32xf32> to vector<20x32xf32>
    %19 = arith.addf %16, %18 : vector<20x32xf32>
    %20 = arith.extf %0 : vector<20x32xbf16> to vector<20x32xf32>
    %21 = arith.addf %19, %20 : vector<20x32xf32>
    %cst_13 = arith.constant dense<0.000000e+00> : vector<20xf32>
    %22 = vector.multi_reduction <add>, %21, %cst_13 [1] : vector<20x32xf32> to vector<20xf32>
    %23 = vector.shape_cast %22 : vector<20xf32> to vector<20x1xf32>
    %cst_14 = arith.constant 3.200000e+01 : f32
    %24 = vector.broadcast %cst_14 : f32 to vector<20x1xf32>
    %25 = arith.divf %23, %24 : vector<20x1xf32>
    %26 = vector.broadcast %25 : vector<20x1xf32> to vector<20x32xf32>
    %27 = arith.subf %21, %26 : vector<20x32xf32>
    %28 = arith.mulf %27, %27 : vector<20x32xf32>
    %cst_15 = arith.constant dense<0.000000e+00> : vector<20xf32>
    %29 = vector.multi_reduction <add>, %28, %cst_15 [1] : vector<20x32xf32> to vector<20xf32>
    %30 = vector.shape_cast %29 : vector<20xf32> to vector<20x1xf32>
    %cst_16 = arith.constant 3.200000e+01 : f32
    %31 = vector.broadcast %cst_16 : f32 to vector<20x1xf32>
    %32 = arith.divf %30, %31 : vector<20x1xf32>
    %cst_17 = arith.constant 9.99999974E-6 : f32
    %33 = vector.broadcast %cst_17 : f32 to vector<20x1xf32>
    %34 = arith.addf %32, %33 : vector<20x1xf32>
    %35 = math.rsqrt %34 : vector<20x1xf32>
    %36 = vector.broadcast %35 : vector<20x1xf32> to vector<20x32xf32>
    %37 = arith.mulf %27, %36 : vector<20x32xf32>
    %c0_18 = arith.constant 0 : index
    %c0_19 = arith.constant 0 : index
    %38 = vector.load %arg6[%c0_18, %c0_19] : memref<1x32xf32, #tpu.memory_space<vmem>>, vector<1x32xf32>
    %39 = vector.broadcast %38 : vector<1x32xf32> to vector<20x32xf32>
    %40 = arith.mulf %37, %39 : vector<20x32xf32>
    %c0_20 = arith.constant 0 : index
    %c0_21 = arith.constant 0 : index
    %41 = vector.load %arg7[%c0_20, %c0_21] : memref<1x32xf32, #tpu.memory_space<vmem>>, vector<1x32xf32>
    %42 = vector.broadcast %41 : vector<1x32xf32> to vector<20x32xf32>
    %43 = arith.addf %40, %42 : vector<20x32xf32>
    %44 = arith.truncf %43 : vector<20x32xf32> to vector<20x32xbf16>
    %c0_22 = arith.constant 0 : index
    %c0_23 = arith.constant 0 : index
    %45 = vector.load %arg8[%c0_22, %c0_23] : memref<20x32xbf16, #tpu.memory_space<vmem>>, vector<20x32xbf16>
    tpu.vector_store %arg8[%c0_22, %c0_23], %44 {strides = array<i32>} : memref<20x32xbf16, #tpu.memory_space<vmem>>, vector<20x32xbf16>,
    return
  }
  func.func @transform_0(%arg0: i32) -> (i32, i32) {
    %c0_i32 = arith.constant 0 : i32
    %c0_i32_0 = arith.constant 0 : i32
    return %arg0, %c0_i32 : i32, i32
  }
  func.func @transform_1(%arg0: i32) -> (i32, i32) {
    %c0_i32 = arith.constant 0 : i32
    %c0_i32_0 = arith.constant 0 : i32
    %c0_i32_1 = arith.constant 0 : i32
    return %c0_i32, %c0_i32_0 : i32, i32
  }
  func.func @transform_2(%arg0: i32) -> (i32, i32) {
    %c0_i32 = arith.constant 0 : i32
    %c0_i32_0 = arith.constant 0 : i32
    %c0_i32_1 = arith.constant 0 : i32
    return %c0_i32, %c0_i32_0 : i32, i32
  }
  func.func @transform_3(%arg0: i32) -> (i32, i32) {
    %c0_i32 = arith.constant 0 : i32
    %c0_i32_0 = arith.constant 0 : i32
    %c0_i32_1 = arith.constant 0 : i32
    return %c0_i32, %c0_i32_0 : i32, i32
  }
  func.func @transform_4(%arg0: i32) -> (i32, i32) {
    %c0_i32 = arith.constant 0 : i32
    %c0_i32_0 = arith.constant 0 : i32
    %c0_i32_1 = arith.constant 0 : i32
    return %c0_i32, %c0_i32_0 : i32, i32
  }
  func.func @transform_5(%arg0: i32) -> (i32, i32) {
    %c0_i32 = arith.constant 0 : i32
    %c0_i32_0 = arith.constant 0 : i32
    %c0_i32_1 = arith.constant 0 : i32
    return %c0_i32, %c0_i32_0 : i32, i32
  }
  func.func @transform_6(%arg0: i32) -> (i32, i32) {
    %c0_i32 = arith.constant 0 : i32
    %c0_i32_0 = arith.constant 0 : i32
    %c0_i32_1 = arith.constant 0 : i32
    return %c0_i32, %c0_i32_0 : i32, i32
  }
  func.func @transform_7(%arg0: i32) -> (i32, i32) {
    %c0_i32 = arith.constant 0 : i32
    %c0_i32_0 = arith.constant 0 : i32
    return %arg0, %c0_i32 : i32, i32
  }
}

module attributes {stable_mosaic.version = 11 : i64} {
  func.func @_linear_kernel(%arg0: i32, %arg1: i32, %arg2: i32, %arg3: memref<20x32xbf16, #tpu.memory_space<vmem>>, %arg4: memref<32x64xbf16, #tpu.memory_space<vmem>>, %arg5: memref<1x64xf32, #tpu.memory_space<vmem>>, %arg6: memref<20x64xbf16, #tpu.memory_space<vmem>>, %arg7: memref<20x64xf32, #tpu.memory_space<vmem>>) attributes {dimension_semantics = [#tpu.dimension_semantics<parallel>, #tpu.dimension_semantics<parallel>, #tpu.dimension_semantics<arbitrary>], iteration_bounds = array<i64: 1, 1, 1>, scalar_prefetch = 0 : i64, scratch_operands = 1 : i64, tpu.core_type = #tpu.core_type<tc>, window_params = [{transform_indices = @transform_0, window_bounds = array<i64: 20, 32>}, {transform_indices = @transform_1, window_bounds = array<i64: 32, 64>}, {transform_indices = @transform_2, window_bounds = array<i64: 1, 64>}, {transform_indices = @transform_3, window_bounds = array<i64: 20, 64>}]} {
    %c0_i32 = arith.constant 0 : i32
    %0 = arith.cmpi eq, %arg2, %c0_i32 : i32
    %1 = arith.extui %0 : i1 to i32
    %c0_i32_0 = arith.constant 0 : i32
    %2 = arith.cmpi ne, %1, %c0_i32_0 : i32
    scf.if %2 {
      %cst_10 = arith.constant 0.000000e+00 : f32
      %12 = vector.broadcast %cst_10 : f32 to vector<20x64xf32>
      %c0_11 = arith.constant 0 : index
      %c0_12 = arith.constant 0 : index
      %13 = vector.load %arg7[%c0_11, %c0_12] : memref<20x64xf32, #tpu.memory_space<vmem>>, vector<20x64xf32>
      tpu.vector_store %arg7[%c0_11, %c0_12], %12 {strides = array<i32>} : memref<20x64xf32, #tpu.memory_space<vmem>>, vector<20x64xf32>,
    } else {
    }
    %c0 = arith.constant 0 : index
    %c0_1 = arith.constant 0 : index
    %3 = vector.load %arg7[%c0, %c0_1] : memref<20x64xf32, #tpu.memory_space<vmem>>, vector<20x64xf32>
    %c0_2 = arith.constant 0 : index
    %c0_3 = arith.constant 0 : index
    %4 = vector.load %arg3[%c0_2, %c0_3] : memref<20x32xbf16, #tpu.memory_space<vmem>>, vector<20x32xbf16>
    %c0_4 = arith.constant 0 : index
    %c0_5 = arith.constant 0 : index
    %5 = vector.load %arg4[%c0_4, %c0_5] : memref<32x64xbf16, #tpu.memory_space<vmem>>, vector<32x64xbf16>
    %cst = arith.constant dense<0.000000e+00> : vector<20x64xf32>
    %6 = tpu.matmul %4, %5, %cst {dimension_numbers = #tpu.dot_dimension_numbers<[1], [0], [0], [1], [0, 0, 1, 1], [], []>} : vector<20x32xbf16>, vector<32x64xbf16>, vector<20x64xf32> -> vector<20x64xf32>
    %7 = arith.addf %3, %6 : vector<20x64xf32>
    %c0_6 = arith.constant 0 : index
    %c0_7 = arith.constant 0 : index
    %8 = vector.load %arg7[%c0_6, %c0_7] : memref<20x64xf32, #tpu.memory_space<vmem>>, vector<20x64xf32>
    tpu.vector_store %arg7[%c0_6, %c0_7], %7 {strides = array<i32>} : memref<20x64xf32, #tpu.memory_space<vmem>>, vector<20x64xf32>,
    %c0_i32_8 = arith.constant 0 : i32
    %9 = arith.cmpi eq, %arg2, %c0_i32_8 : i32
    %10 = arith.extui %9 : i1 to i32
    %c0_i32_9 = arith.constant 0 : i32
    %11 = arith.cmpi ne, %10, %c0_i32_9 : i32
    scf.if %11 {
      %c0_10 = arith.constant 0 : index
      %c0_11 = arith.constant 0 : index
      %12 = vector.load %arg7[%c0_10, %c0_11] : memref<20x64xf32, #tpu.memory_space<vmem>>, vector<20x64xf32>
      %c0_12 = arith.constant 0 : index
      %c0_13 = arith.constant 0 : index
      %13 = vector.load %arg5[%c0_12, %c0_13] : memref<1x64xf32, #tpu.memory_space<vmem>>, vector<1x64xf32>
      %14 = vector.broadcast %13 : vector<1x64xf32> to vector<20x64xf32>
      %15 = arith.addf %12, %14 : vector<20x64xf32>
      %16 = arith.truncf %15 : vector<20x64xf32> to vector<20x64xbf16>
      %c0_14 = arith.constant 0 : index
      %c0_15 = arith.constant 0 : index
      %17 = vector.load %arg6[%c0_14, %c0_15] : memref<20x64xbf16, #tpu.memory_space<vmem>>, vector<20x64xbf16>
      tpu.vector_store %arg6[%c0_14, %c0_15], %16 {strides = array<i32>} : memref<20x64xbf16, #tpu.memory_space<vmem>>, vector<20x64xbf16>,
    } else {
    }
    return
  }
  func.func @transform_0(%arg0: i32, %arg1: i32, %arg2: i32) -> (i32, i32) {
    %c0_i32 = arith.constant 0 : i32
    return %arg0, %arg2 : i32, i32
  }
  func.func @transform_1(%arg0: i32, %arg1: i32, %arg2: i32) -> (i32, i32) {
    %c0_i32 = arith.constant 0 : i32
    return %arg2, %arg1 : i32, i32
  }
  func.func @transform_2(%arg0: i32, %arg1: i32, %arg2: i32) -> (i32, i32) {
    %c0_i32 = arith.constant 0 : i32
    %c0_i32_0 = arith.constant 0 : i32
    return %c0_i32, %arg1 : i32, i32
  }
  func.func @transform_3(%arg0: i32, %arg1: i32, %arg2: i32) -> (i32, i32) {
    %c0_i32 = arith.constant 0 : i32
    return %arg0, %arg1 : i32, i32
  }
}

module attributes {stable_mosaic.version = 11 : i64} {
  func.func @_linear_kernel(%arg0: i32, %arg1: i32, %arg2: i32, %arg3: memref<16x32xbf16, #tpu.memory_space<vmem>>, %arg4: memref<32x96xbf16, #tpu.memory_space<vmem>>, %arg5: memref<1x96xf32, #tpu.memory_space<vmem>>, %arg6: memref<16x96xbf16, #tpu.memory_space<vmem>>, %arg7: memref<16x96xf32, #tpu.memory_space<vmem>>) attributes {dimension_semantics = [#tpu.dimension_semantics<parallel>, #tpu.dimension_semantics<parallel>, #tpu.dimension_semantics<arbitrary>], iteration_bounds = array<i64: 1, 1, 1>, scalar_prefetch = 0 : i64, scratch_operands = 1 : i64, tpu.core_type = #tpu.core_type<tc>, window_params = [{transform_indices = @transform_0, window_bounds = array<i64: 16, 32>}, {transform_indices = @transform_1, window_bounds = array<i64: 32, 96>}, {transform_indices = @transform_2, window_bounds = array<i64: 1, 96>}, {transform_indices = @transform_3, window_bounds = array<i64: 16, 96>}]} {
    %c0_i32 = arith.constant 0 : i32
    %0 = arith.cmpi eq, %arg2, %c0_i32 : i32
    %1 = arith.extui %0 : i1 to i32
    %c0_i32_0 = arith.constant 0 : i32
    %2 = arith.cmpi ne, %1, %c0_i32_0 : i32
    scf.if %2 {
      %cst_10 = arith.constant 0.000000e+00 : f32
      %12 = vector.broadcast %cst_10 : f32 to vector<16x96xf32>
      %c0_11 = arith.constant 0 : index
      %c0_12 = arith.constant 0 : index
      %13 = vector.load %arg7[%c0_11, %c0_12] : memref<16x96xf32, #tpu.memory_space<vmem>>, vector<16x96xf32>
      tpu.vector_store %arg7[%c0_11, %c0_12], %12 {strides = array<i32>} : memref<16x96xf32, #tpu.memory_space<vmem>>, vector<16x96xf32>,
    } else {
    }
    %c0 = arith.constant 0 : index
    %c0_1 = arith.constant 0 : index
    %3 = vector.load %arg7[%c0, %c0_1] : memref<16x96xf32, #tpu.memory_space<vmem>>, vector<16x96xf32>
    %c0_2 = arith.constant 0 : index
    %c0_3 = arith.constant 0 : index
    %4 = vector.load %arg3[%c0_2, %c0_3] : memref<16x32xbf16, #tpu.memory_space<vmem>>, vector<16x32xbf16>
    %c0_4 = arith.constant 0 : index
    %c0_5 = arith.constant 0 : index
    %5 = vector.load %arg4[%c0_4, %c0_5] : memref<32x96xbf16, #tpu.memory_space<vmem>>, vector<32x96xbf16>
    %cst = arith.constant dense<0.000000e+00> : vector<16x96xf32>
    %6 = tpu.matmul %4, %5, %cst {dimension_numbers = #tpu.dot_dimension_numbers<[1], [0], [0], [1], [0, 0, 1, 1], [], []>} : vector<16x32xbf16>, vector<32x96xbf16>, vector<16x96xf32> -> vector<16x96xf32>
    %7 = arith.addf %3, %6 : vector<16x96xf32>
    %c0_6 = arith.constant 0 : index
    %c0_7 = arith.constant 0 : index
    %8 = vector.load %arg7[%c0_6, %c0_7] : memref<16x96xf32, #tpu.memory_space<vmem>>, vector<16x96xf32>
    tpu.vector_store %arg7[%c0_6, %c0_7], %7 {strides = array<i32>} : memref<16x96xf32, #tpu.memory_space<vmem>>, vector<16x96xf32>,
    %c0_i32_8 = arith.constant 0 : i32
    %9 = arith.cmpi eq, %arg2, %c0_i32_8 : i32
    %10 = arith.extui %9 : i1 to i32
    %c0_i32_9 = arith.constant 0 : i32
    %11 = arith.cmpi ne, %10, %c0_i32_9 : i32
    scf.if %11 {
      %c0_10 = arith.constant 0 : index
      %c0_11 = arith.constant 0 : index
      %12 = vector.load %arg7[%c0_10, %c0_11] : memref<16x96xf32, #tpu.memory_space<vmem>>, vector<16x96xf32>
      %c0_12 = arith.constant 0 : index
      %c0_13 = arith.constant 0 : index
      %13 = vector.load %arg5[%c0_12, %c0_13] : memref<1x96xf32, #tpu.memory_space<vmem>>, vector<1x96xf32>
      %14 = vector.broadcast %13 : vector<1x96xf32> to vector<16x96xf32>
      %15 = arith.addf %12, %14 : vector<16x96xf32>
      %16 = arith.truncf %15 : vector<16x96xf32> to vector<16x96xbf16>
      %c0_14 = arith.constant 0 : index
      %c0_15 = arith.constant 0 : index
      %17 = vector.load %arg6[%c0_14, %c0_15] : memref<16x96xbf16, #tpu.memory_space<vmem>>, vector<16x96xbf16>
      tpu.vector_store %arg6[%c0_14, %c0_15], %16 {strides = array<i32>} : memref<16x96xbf16, #tpu.memory_space<vmem>>, vector<16x96xbf16>,
    } else {
    }
    return
  }
  func.func @transform_0(%arg0: i32, %arg1: i32, %arg2: i32) -> (i32, i32) {
    %c0_i32 = arith.constant 0 : i32
    return %arg0, %arg2 : i32, i32
  }
  func.func @transform_1(%arg0: i32, %arg1: i32, %arg2: i32) -> (i32, i32) {
    %c0_i32 = arith.constant 0 : i32
    return %arg2, %arg1 : i32, i32
  }
  func.func @transform_2(%arg0: i32, %arg1: i32, %arg2: i32) -> (i32, i32) {
    %c0_i32 = arith.constant 0 : i32
    %c0_i32_0 = arith.constant 0 : i32
    return %c0_i32, %arg1 : i32, i32
  }
  func.func @transform_3(%arg0: i32, %arg1: i32, %arg2: i32) -> (i32, i32) {
    %c0_i32 = arith.constant 0 : i32
    return %arg0, %arg1 : i32, i32
  }
}

module attributes {stable_mosaic.version = 11 : i64} {
  func.func @_attn_kernel(%arg0: i32, %arg1: i32, %arg2: memref<1x1x8x8xbf16, #tpu.memory_space<vmem>>, %arg3: memref<1x1x8x8xbf16, #tpu.memory_space<vmem>>, %arg4: memref<1x1x8x8xbf16, #tpu.memory_space<vmem>>, %arg5: memref<1x1x8xf32, #tpu.memory_space<vmem>>, %arg6: memref<1x1x8x8xbf16, #tpu.memory_space<vmem>>) attributes {dimension_semantics = [#tpu.dimension_semantics<parallel>, #tpu.dimension_semantics<parallel>], iteration_bounds = array<i64: 2, 4>, scalar_prefetch = 0 : i64, scratch_operands = 0 : i64, tpu.core_type = #tpu.core_type<tc>, window_params = [{transform_indices = @transform_0, window_bounds = array<i64: 1, 1, 8, 8>}, {transform_indices = @transform_1, window_bounds = array<i64: 1, 1, 8, 8>}, {transform_indices = @transform_2, window_bounds = array<i64: 1, 1, 8, 8>}, {transform_indices = @transform_3, window_bounds = array<i64: 1, 1, 8>}, {transform_indices = @transform_4, window_bounds = array<i64: 1, 1, 8, 8>}]} {
    %c0 = arith.constant 0 : index
    %c0_0 = arith.constant 0 : index
    %c0_1 = arith.constant 0 : index
    %c0_2 = arith.constant 0 : index
    %0 = vector.load %arg2[%c0, %c0_0, %c0_1, %c0_2] : memref<1x1x8x8xbf16, #tpu.memory_space<vmem>>, vector<1x1x8x8xbf16>
    %1 = vector.shape_cast %0 : vector<1x1x8x8xbf16> to vector<8x8xbf16>
    %c0_3 = arith.constant 0 : index
    %c0_4 = arith.constant 0 : index
    %c0_5 = arith.constant 0 : index
    %c0_6 = arith.constant 0 : index
    %2 = vector.load %arg3[%c0_3, %c0_4, %c0_5, %c0_6] : memref<1x1x8x8xbf16, #tpu.memory_space<vmem>>, vector<1x1x8x8xbf16>
    %3 = vector.shape_cast %2 : vector<1x1x8x8xbf16> to vector<8x8xbf16>
    %c0_7 = arith.constant 0 : index
    %c0_8 = arith.constant 0 : index
    %c0_9 = arith.constant 0 : index
    %c0_10 = arith.constant 0 : index
    %4 = vector.load %arg4[%c0_7, %c0_8, %c0_9, %c0_10] : memref<1x1x8x8xbf16, #tpu.memory_space<vmem>>, vector<1x1x8x8xbf16>
    %5 = vector.shape_cast %4 : vector<1x1x8x8xbf16> to vector<8x8xbf16>
    %cst = arith.constant dense<0.000000e+00> : vector<8x8xf32>
    %6 = tpu.matmul %1, %3, %cst {dimension_numbers = #tpu.dot_dimension_numbers<[1], [1], [0], [0], [0, 0, 1, 0], [], []>} : vector<8x8xbf16>, vector<8x8xbf16>, vector<8x8xf32> -> vector<8x8xf32>
    %cst_11 = arith.constant 0.353553385 : f32
    %7 = vector.broadcast %cst_11 : f32 to vector<8x8xf32>
    %8 = arith.mulf %6, %7 : vector<8x8xf32>
    %c0_12 = arith.constant 0 : index
    %c0_13 = arith.constant 0 : index
    %c0_14 = arith.constant 0 : index
    %9 = vector.load %arg5[%c0_12, %c0_13, %c0_14] : memref<1x1x8xf32, #tpu.memory_space<vmem>>, vector<1x1x8xf32>
    %10 = vector.shape_cast %9 : vector<1x1x8xf32> to vector<1x8xf32>
    %11 = vector.broadcast %10 : vector<1x8xf32> to vector<8x8xf32>
    %12 = arith.addf %8, %11 : vector<8x8xf32>
    %13 = tpu.iota {dimensions = array<i32: 0>} : vector<8x8xi32>
    %14 = tpu.iota {dimensions = array<i32: 1>} : vector<8x8xi32>
    %15 = arith.cmpi sle, %14, %13 : vector<8x8xi32>
    %cst_15 = arith.constant -1.000000e+30 : f32
    %16 = vector.broadcast %cst_15 : f32 to vector<8x8xf32>
    %17 = arith.select %15, %12, %16 : vector<8x8xi1>, vector<8x8xf32>
    %cst_16 = arith.constant dense<0xFF800000> : vector<8xf32>
    %18 = vector.multi_reduction <maximumf>, %17, %cst_16 [1] : vector<8x8xf32> to vector<8xf32>
    %19 = vector.shape_cast %18 : vector<8xf32> to vector<8x1xf32>
    %20 = vector.broadcast %19 : vector<8x1xf32> to vector<8x8xf32>
    %21 = arith.subf %17, %20 : vector<8x8xf32>
    %22 = math.exp %21 : vector<8x8xf32>
    %cst_17 = arith.constant dense<0.000000e+00> : vector<8xf32>
    %23 = vector.multi_reduction <add>, %22, %cst_17 [1] : vector<8x8xf32> to vector<8xf32>
    %24 = vector.shape_cast %23 : vector<8xf32> to vector<8x1xf32>
    %25 = tpu.reciprocal %24 {approx = true} : vector<8x1xf32> -> vector<8x1xf32>
    %26 = vector.broadcast %25 : vector<8x1xf32> to vector<8x8xf32>
    %27 = arith.mulf %22, %26 : vector<8x8xf32>
    %28 = arith.truncf %27 : vector<8x8xf32> to vector<8x8xbf16>
    %cst_18 = arith.constant dense<0.000000e+00> : vector<8x8xf32>
    %29 = tpu.matmul %28, %5, %cst_18 {dimension_numbers = #tpu.dot_dimension_numbers<[1], [0], [0], [1], [0, 0, 1, 1], [], []>} : vector<8x8xbf16>, vector<8x8xbf16>, vector<8x8xf32> -> vector<8x8xf32>
    %30 = arith.truncf %29 : vector<8x8xf32> to vector<8x8xbf16>
    %c0_19 = arith.constant 0 : index
    %c0_20 = arith.constant 0 : index
    %c0_21 = arith.constant 0 : index
    %c0_22 = arith.constant 0 : index
    %31 = vector.load %arg6[%c0_19, %c0_20, %c0_21, %c0_22] : memref<1x1x8x8xbf16, #tpu.memory_space<vmem>>, vector<1x1x8x8xbf16>
    %32 = vector.shape_cast %31 : vector<1x1x8x8xbf16> to vector<8x8xbf16>
    %33 = vector.shape_cast %30 : vector<8x8xbf16> to vector<1x1x8x8xbf16>
    tpu.vector_store %arg6[%c0_19, %c0_20, %c0_21, %c0_22], %33 {strides = array<i32>} : memref<1x1x8x8xbf16, #tpu.memory_space<vmem>>, vector<1x1x8x8xbf16>,
    return
  }
  func.func @transform_0(%arg0: i32, %arg1: i32) -> (i32, i32, i32, i32) {
    %c0_i32 = arith.constant 0 : i32
    %c0_i32_0 = arith.constant 0 : i32
    %c0_i32_1 = arith.constant 0 : i32
    return %arg0, %arg1, %c0_i32, %c0_i32_0 : i32, i32, i32, i32
  }
  func.func @transform_1(%arg0: i32, %arg1: i32) -> (i32, i32, i32, i32) {
    %c0_i32 = arith.constant 0 : i32
    %c0_i32_0 = arith.constant 0 : i32
    %c0_i32_1 = arith.constant 0 : i32
    return %arg0, %arg1, %c0_i32, %c0_i32_0 : i32, i32, i32, i32
  }
  func.func @transform_2(%arg0: i32, %arg1: i32) -> (i32, i32, i32, i32) {
    %c0_i32 = arith.constant 0 : i32
    %c0_i32_0 = arith.constant 0 : i32
    %c0_i32_1 = arith.constant 0 : i32
    return %arg0, %arg1, %c0_i32, %c0_i32_0 : i32, i32, i32, i32
  }
  func.func @transform_3(%arg0: i32, %arg1: i32) -> (i32, i32, i32) {
    %c0_i32 = arith.constant 0 : i32
    %c0_i32_0 = arith.constant 0 : i32
    %c0_i32_1 = arith.constant 0 : i32
    return %arg0, %c0_i32, %c0_i32_0 : i32, i32, i32
  }
  func.func @transform_4(%arg0: i32, %arg1: i32) -> (i32, i32, i32, i32) {
    %c0_i32 = arith.constant 0 : i32
    %c0_i32_0 = arith.constant 0 : i32
    %c0_i32_1 = arith.constant 0 : i32
    return %arg0, %arg1, %c0_i32, %c0_i32_0 : i32, i32, i32, i32
  }
}

module attributes {stable_mosaic.version = 11 : i64} {
  func.func @_linear_res_ln_kernel(%arg0: i32, %arg1: i32, %arg2: memref<16x32xbf16, #tpu.memory_space<vmem>>, %arg3: memref<32x32xbf16, #tpu.memory_space<vmem>>, %arg4: memref<1x32xf32, #tpu.memory_space<vmem>>, %arg5: memref<16x32xbf16, #tpu.memory_space<vmem>>, %arg6: memref<1x32xf32, #tpu.memory_space<vmem>>, %arg7: memref<1x32xf32, #tpu.memory_space<vmem>>, %arg8: memref<16x32xbf16, #tpu.memory_space<vmem>>, %arg9: memref<16x32xf32, #tpu.memory_space<vmem>>) attributes {dimension_semantics = [#tpu.dimension_semantics<parallel>, #tpu.dimension_semantics<arbitrary>], iteration_bounds = array<i64: 1, 1>, scalar_prefetch = 0 : i64, scratch_operands = 1 : i64, tpu.core_type = #tpu.core_type<tc>, window_params = [{transform_indices = @transform_0, window_bounds = array<i64: 16, 32>}, {transform_indices = @transform_1, window_bounds = array<i64: 32, 32>}, {pipeline_mode = #tpu.pipeline_mode<synchronous>, transform_indices = @transform_2, window_bounds = array<i64: 1, 32>}, {transform_indices = @transform_3, window_bounds = array<i64: 16, 32>}, {pipeline_mode = #tpu.pipeline_mode<synchronous>, transform_indices = @transform_4, window_bounds = array<i64: 1, 32>}, {pipeline_mode = #tpu.pipeline_mode<synchronous>, transform_indices = @transform_5, window_bounds = array<i64: 1, 32>}, {transform_indices = @transform_6, window_bounds = array<i64: 16, 32>}]} {
    %c0_i32 = arith.constant 0 : i32
    %0 = arith.cmpi eq, %arg1, %c0_i32 : i32
    %1 = arith.extui %0 : i1 to i32
    %c0_i32_0 = arith.constant 0 : i32
    %2 = arith.cmpi ne, %1, %c0_i32_0 : i32
    scf.if %2 {
      %cst_10 = arith.constant 0.000000e+00 : f32
      %12 = vector.broadcast %cst_10 : f32 to vector<16x32xf32>
      %c0_11 = arith.constant 0 : index
      %c0_12 = arith.constant 0 : index
      %13 = vector.load %arg9[%c0_11, %c0_12] : memref<16x32xf32, #tpu.memory_space<vmem>>, vector<16x32xf32>
      tpu.vector_store %arg9[%c0_11, %c0_12], %12 {strides = array<i32>} : memref<16x32xf32, #tpu.memory_space<vmem>>, vector<16x32xf32>,
    } else {
    }
    %c0 = arith.constant 0 : index
    %c0_1 = arith.constant 0 : index
    %3 = vector.load %arg9[%c0, %c0_1] : memref<16x32xf32, #tpu.memory_space<vmem>>, vector<16x32xf32>
    %c0_2 = arith.constant 0 : index
    %c0_3 = arith.constant 0 : index
    %4 = vector.load %arg2[%c0_2, %c0_3] : memref<16x32xbf16, #tpu.memory_space<vmem>>, vector<16x32xbf16>
    %c0_4 = arith.constant 0 : index
    %c0_5 = arith.constant 0 : index
    %5 = vector.load %arg3[%c0_4, %c0_5] : memref<32x32xbf16, #tpu.memory_space<vmem>>, vector<32x32xbf16>
    %cst = arith.constant dense<0.000000e+00> : vector<16x32xf32>
    %6 = tpu.matmul %4, %5, %cst {dimension_numbers = #tpu.dot_dimension_numbers<[1], [0], [0], [1], [0, 0, 1, 1], [], []>} : vector<16x32xbf16>, vector<32x32xbf16>, vector<16x32xf32> -> vector<16x32xf32>
    %7 = arith.addf %3, %6 : vector<16x32xf32>
    %c0_6 = arith.constant 0 : index
    %c0_7 = arith.constant 0 : index
    %8 = vector.load %arg9[%c0_6, %c0_7] : memref<16x32xf32, #tpu.memory_space<vmem>>, vector<16x32xf32>
    tpu.vector_store %arg9[%c0_6, %c0_7], %7 {strides = array<i32>} : memref<16x32xf32, #tpu.memory_space<vmem>>, vector<16x32xf32>,
    %c0_i32_8 = arith.constant 0 : i32
    %9 = arith.cmpi eq, %arg1, %c0_i32_8 : i32
    %10 = arith.extui %9 : i1 to i32
    %c0_i32_9 = arith.constant 0 : i32
    %11 = arith.cmpi ne, %10, %c0_i32_9 : i32
    scf.if %11 {
      %c0_10 = arith.constant 0 : index
      %c0_11 = arith.constant 0 : index
      %12 = vector.load %arg9[%c0_10, %c0_11] : memref<16x32xf32, #tpu.memory_space<vmem>>, vector<16x32xf32>
      %c0_12 = arith.constant 0 : index
      %c0_13 = arith.constant 0 : index
      %13 = vector.load %arg4[%c0_12, %c0_13] : memref<1x32xf32, #tpu.memory_space<vmem>>, vector<1x32xf32>
      %14 = vector.broadcast %13 : vector<1x32xf32> to vector<16x32xf32>
      %15 = arith.addf %12, %14 : vector<16x32xf32>
      %c0_14 = arith.constant 0 : index
      %c0_15 = arith.constant 0 : index
      %16 = vector.load %arg5[%c0_14, %c0_15] : memref<16x32xbf16, #tpu.memory_space<vmem>>, vector<16x32xbf16>
      %17 = arith.extf %16 : vector<16x32xbf16> to vector<16x32xf32>
      %18 = arith.addf %15, %17 : vector<16x32xf32>
      %cst_16 = arith.constant dense<0.000000e+00> : vector<16xf32>
      %19 = vector.multi_reduction <add>, %18, %cst_16 [1] : vector<16x32xf32> to vector<16xf32>
      %20 = vector.shape_cast %19 : vector<16xf32> to vector<16x1xf32>
      %cst_17 = arith.constant 3.200000e+01 : f32
      %21 = vector.broadcast %cst_17 : f32 to vector<16x1xf32>
      %22 = arith.divf %20, %21 : vector<16x1xf32>
      %23 = vector.broadcast %22 : vector<16x1xf32> to vector<16x32xf32>
      %24 = arith.subf %18, %23 : vector<16x32xf32>
      %25 = arith.mulf %24, %24 : vector<16x32xf32>
      %cst_18 = arith.constant dense<0.000000e+00> : vector<16xf32>
      %26 = vector.multi_reduction <add>, %25, %cst_18 [1] : vector<16x32xf32> to vector<16xf32>
      %27 = vector.shape_cast %26 : vector<16xf32> to vector<16x1xf32>
      %cst_19 = arith.constant 3.200000e+01 : f32
      %28 = vector.broadcast %cst_19 : f32 to vector<16x1xf32>
      %29 = arith.divf %27, %28 : vector<16x1xf32>
      %cst_20 = arith.constant 9.99999974E-6 : f32
      %30 = vector.broadcast %cst_20 : f32 to vector<16x1xf32>
      %31 = arith.addf %29, %30 : vector<16x1xf32>
      %32 = math.rsqrt %31 : vector<16x1xf32>
      %33 = vector.broadcast %32 : vector<16x1xf32> to vector<16x32xf32>
      %34 = arith.mulf %24, %33 : vector<16x32xf32>
      %c0_21 = arith.constant 0 : index
      %c0_22 = arith.constant 0 : index
      %35 = vector.load %arg6[%c0_21, %c0_22] : memref<1x32xf32, #tpu.memory_space<vmem>>, vector<1x32xf32>
      %36 = vector.broadcast %35 : vector<1x32xf32> to vector<16x32xf32>
      %37 = arith.mulf %34, %36 : vector<16x32xf32>
      %c0_23 = arith.constant 0 : index
      %c0_24 = arith.constant 0 : index
      %38 = vector.load %arg7[%c0_23, %c0_24] : memref<1x32xf32, #tpu.memory_space<vmem>>, vector<1x32xf32>
      %39 = vector.broadcast %38 : vector<1x32xf32> to vector<16x32xf32>
      %40 = arith.addf %37, %39 : vector<16x32xf32>
      %41 = arith.truncf %40 : vector<16x32xf32> to vector<16x32xbf16>
      %c0_25 = arith.constant 0 : index
      %c0_26 = arith.constant 0 : index
      %42 = vector.load %arg8[%c0_25, %c0_26] : memref<16x32xbf16, #tpu.memory_space<vmem>>, vector<16x32xbf16>
      tpu.vector_store %arg8[%c0_25, %c0_26], %41 {strides = array<i32>} : memref<16x32xbf16, #tpu.memory_space<vmem>>, vector<16x32xbf16>,
    } else {
    }
    return
  }
  func.func @transform_0(%arg0: i32, %arg1: i32) -> (i32, i32) {
    %c0_i32 = arith.constant 0 : i32
    return %arg0, %arg1 : i32, i32
  }
  func.func @transform_1(%arg0: i32, %arg1: i32) -> (i32, i32) {
    %c0_i32 = arith.constant 0 : i32
    %c0_i32_0 = arith.constant 0 : i32
    return %arg1, %c0_i32 : i32, i32
  }
  func.func @transform_2(%arg0: i32, %arg1: i32) -> (i32, i32) {
    %c0_i32 = arith.constant 0 : i32
    %c0_i32_0 = arith.constant 0 : i32
    %c0_i32_1 = arith.constant 0 : i32
    return %c0_i32, %c0_i32_0 : i32, i32
  }
  func.func @transform_3(%arg0: i32, %arg1: i32) -> (i32, i32) {
    %c0_i32 = arith.constant 0 : i32
    %c0_i32_0 = arith.constant 0 : i32
    return %arg0, %c0_i32 : i32, i32
  }
  func.func @transform_4(%arg0: i32, %arg1: i32) -> (i32, i32) {
    %c0_i32 = arith.constant 0 : i32
    %c0_i32_0 = arith.constant 0 : i32
    %c0_i32_1 = arith.constant 0 : i32
    return %c0_i32, %c0_i32_0 : i32, i32
  }
  func.func @transform_5(%arg0: i32, %arg1: i32) -> (i32, i32) {
    %c0_i32 = arith.constant 0 : i32
    %c0_i32_0 = arith.constant 0 : i32
    %c0_i32_1 = arith.constant 0 : i32
    return %c0_i32, %c0_i32_0 : i32, i32
  }
  func.func @transform_6(%arg0: i32, %arg1: i32) -> (i32, i32) {
    %c0_i32 = arith.constant 0 : i32
    %c0_i32_0 = arith.constant 0 : i32
    return %arg0, %c0_i32 : i32, i32
  }
}

module attributes {stable_mosaic.version = 11 : i64} {
  func.func @_linear_kernel(%arg0: i32, %arg1: i32, %arg2: i32, %arg3: memref<16x32xbf16, #tpu.memory_space<vmem>>, %arg4: memref<32x32xbf16, #tpu.memory_space<vmem>>, %arg5: memref<1x32xf32, #tpu.memory_space<vmem>>, %arg6: memref<16x32xbf16, #tpu.memory_space<vmem>>, %arg7: memref<16x32xf32, #tpu.memory_space<vmem>>) attributes {dimension_semantics = [#tpu.dimension_semantics<parallel>, #tpu.dimension_semantics<parallel>, #tpu.dimension_semantics<arbitrary>], iteration_bounds = array<i64: 1, 1, 1>, scalar_prefetch = 0 : i64, scratch_operands = 1 : i64, tpu.core_type = #tpu.core_type<tc>, window_params = [{transform_indices = @transform_0, window_bounds = array<i64: 16, 32>}, {transform_indices = @transform_1, window_bounds = array<i64: 32, 32>}, {transform_indices = @transform_2, window_bounds = array<i64: 1, 32>}, {transform_indices = @transform_3, window_bounds = array<i64: 16, 32>}]} {
    %c0_i32 = arith.constant 0 : i32
    %0 = arith.cmpi eq, %arg2, %c0_i32 : i32
    %1 = arith.extui %0 : i1 to i32
    %c0_i32_0 = arith.constant 0 : i32
    %2 = arith.cmpi ne, %1, %c0_i32_0 : i32
    scf.if %2 {
      %cst_10 = arith.constant 0.000000e+00 : f32
      %12 = vector.broadcast %cst_10 : f32 to vector<16x32xf32>
      %c0_11 = arith.constant 0 : index
      %c0_12 = arith.constant 0 : index
      %13 = vector.load %arg7[%c0_11, %c0_12] : memref<16x32xf32, #tpu.memory_space<vmem>>, vector<16x32xf32>
      tpu.vector_store %arg7[%c0_11, %c0_12], %12 {strides = array<i32>} : memref<16x32xf32, #tpu.memory_space<vmem>>, vector<16x32xf32>,
    } else {
    }
    %c0 = arith.constant 0 : index
    %c0_1 = arith.constant 0 : index
    %3 = vector.load %arg7[%c0, %c0_1] : memref<16x32xf32, #tpu.memory_space<vmem>>, vector<16x32xf32>
    %c0_2 = arith.constant 0 : index
    %c0_3 = arith.constant 0 : index
    %4 = vector.load %arg3[%c0_2, %c0_3] : memref<16x32xbf16, #tpu.memory_space<vmem>>, vector<16x32xbf16>
    %c0_4 = arith.constant 0 : index
    %c0_5 = arith.constant 0 : index
    %5 = vector.load %arg4[%c0_4, %c0_5] : memref<32x32xbf16, #tpu.memory_space<vmem>>, vector<32x32xbf16>
    %cst = arith.constant dense<0.000000e+00> : vector<16x32xf32>
    %6 = tpu.matmul %4, %5, %cst {dimension_numbers = #tpu.dot_dimension_numbers<[1], [0], [0], [1], [0, 0, 1, 1], [], []>} : vector<16x32xbf16>, vector<32x32xbf16>, vector<16x32xf32> -> vector<16x32xf32>
    %7 = arith.addf %3, %6 : vector<16x32xf32>
    %c0_6 = arith.constant 0 : index
    %c0_7 = arith.constant 0 : index
    %8 = vector.load %arg7[%c0_6, %c0_7] : memref<16x32xf32, #tpu.memory_space<vmem>>, vector<16x32xf32>
    tpu.vector_store %arg7[%c0_6, %c0_7], %7 {strides = array<i32>} : memref<16x32xf32, #tpu.memory_space<vmem>>, vector<16x32xf32>,
    %c0_i32_8 = arith.constant 0 : i32
    %9 = arith.cmpi eq, %arg2, %c0_i32_8 : i32
    %10 = arith.extui %9 : i1 to i32
    %c0_i32_9 = arith.constant 0 : i32
    %11 = arith.cmpi ne, %10, %c0_i32_9 : i32
    scf.if %11 {
      %c0_10 = arith.constant 0 : index
      %c0_11 = arith.constant 0 : index
      %12 = vector.load %arg7[%c0_10, %c0_11] : memref<16x32xf32, #tpu.memory_space<vmem>>, vector<16x32xf32>
      %c0_12 = arith.constant 0 : index
      %c0_13 = arith.constant 0 : index
      %13 = vector.load %arg5[%c0_12, %c0_13] : memref<1x32xf32, #tpu.memory_space<vmem>>, vector<1x32xf32>
      %14 = vector.broadcast %13 : vector<1x32xf32> to vector<16x32xf32>
      %15 = arith.addf %12, %14 : vector<16x32xf32>
      %16 = arith.truncf %15 : vector<16x32xf32> to vector<16x32xbf16>
      %c0_14 = arith.constant 0 : index
      %c0_15 = arith.constant 0 : index
      %17 = vector.load %arg6[%c0_14, %c0_15] : memref<16x32xbf16, #tpu.memory_space<vmem>>, vector<16x32xbf16>
      tpu.vector_store %arg6[%c0_14, %c0_15], %16 {strides = array<i32>} : memref<16x32xbf16, #tpu.memory_space<vmem>>, vector<16x32xbf16>,
    } else {
    }
    return
  }
  func.func @transform_0(%arg0: i32, %arg1: i32, %arg2: i32) -> (i32, i32) {
    %c0_i32 = arith.constant 0 : i32
    return %arg0, %arg2 : i32, i32
  }
  func.func @transform_1(%arg0: i32, %arg1: i32, %arg2: i32) -> (i32, i32) {
    %c0_i32 = arith.constant 0 : i32
    return %arg2, %arg1 : i32, i32
  }
  func.func @transform_2(%arg0: i32, %arg1: i32, %arg2: i32) -> (i32, i32) {
    %c0_i32 = arith.constant 0 : i32
    %c0_i32_0 = arith.constant 0 : i32
    return %c0_i32, %arg1 : i32, i32
  }
  func.func @transform_3(%arg0: i32, %arg1: i32, %arg2: i32) -> (i32, i32) {
    %c0_i32 = arith.constant 0 : i32
    return %arg0, %arg1 : i32, i32
  }
}

module attributes {stable_mosaic.version = 11 : i64} {
  func.func @_attn_kernel(%arg0: i32, %arg1: i32, %arg2: memref<1x1x8x8xbf16, #tpu.memory_space<vmem>>, %arg3: memref<1x1x10x8xbf16, #tpu.memory_space<vmem>>, %arg4: memref<1x1x10x8xbf16, #tpu.memory_space<vmem>>, %arg5: memref<1x1x10xf32, #tpu.memory_space<vmem>>, %arg6: memref<1x1x8x8xbf16, #tpu.memory_space<vmem>>) attributes {dimension_semantics = [#tpu.dimension_semantics<parallel>, #tpu.dimension_semantics<parallel>], iteration_bounds = array<i64: 2, 4>, scalar_prefetch = 0 : i64, scratch_operands = 0 : i64, tpu.core_type = #tpu.core_type<tc>, window_params = [{transform_indices = @transform_0, window_bounds = array<i64: 1, 1, 8, 8>}, {transform_indices = @transform_1, window_bounds = array<i64: 1, 1, 10, 8>}, {transform_indices = @transform_2, window_bounds = array<i64: 1, 1, 10, 8>}, {transform_indices = @transform_3, window_bounds = array<i64: 1, 1, 10>}, {transform_indices = @transform_4, window_bounds = array<i64: 1, 1, 8, 8>}]} {
    %c0 = arith.constant 0 : index
    %c0_0 = arith.constant 0 : index
    %c0_1 = arith.constant 0 : index
    %c0_2 = arith.constant 0 : index
    %0 = vector.load %arg2[%c0, %c0_0, %c0_1, %c0_2] : memref<1x1x8x8xbf16, #tpu.memory_space<vmem>>, vector<1x1x8x8xbf16>
    %1 = vector.shape_cast %0 : vector<1x1x8x8xbf16> to vector<8x8xbf16>
    %c0_3 = arith.constant 0 : index
    %c0_4 = arith.constant 0 : index
    %c0_5 = arith.constant 0 : index
    %c0_6 = arith.constant 0 : index
    %2 = vector.load %arg3[%c0_3, %c0_4, %c0_5, %c0_6] : memref<1x1x10x8xbf16, #tpu.memory_space<vmem>>, vector<1x1x10x8xbf16>
    %3 = vector.shape_cast %2 : vector<1x1x10x8xbf16> to vector<10x8xbf16>
    %c0_7 = arith.constant 0 : index
    %c0_8 = arith.constant 0 : index
    %c0_9 = arith.constant 0 : index
    %c0_10 = arith.constant 0 : index
    %4 = vector.load %arg4[%c0_7, %c0_8, %c0_9, %c0_10] : memref<1x1x10x8xbf16, #tpu.memory_space<vmem>>, vector<1x1x10x8xbf16>
    %5 = vector.shape_cast %4 : vector<1x1x10x8xbf16> to vector<10x8xbf16>
    %cst = arith.constant dense<0.000000e+00> : vector<8x10xf32>
    %6 = tpu.matmul %1, %3, %cst {dimension_numbers = #tpu.dot_dimension_numbers<[1], [1], [0], [0], [0, 0, 1, 0], [], []>} : vector<8x8xbf16>, vector<10x8xbf16>, vector<8x10xf32> -> vector<8x10xf32>
    %cst_11 = arith.constant 0.353553385 : f32
    %7 = vector.broadcast %cst_11 : f32 to vector<8x10xf32>
    %8 = arith.mulf %6, %7 : vector<8x10xf32>
    %c0_12 = arith.constant 0 : index
    %c0_13 = arith.constant 0 : index
    %c0_14 = arith.constant 0 : index
    %9 = vector.load %arg5[%c0_12, %c0_13, %c0_14] : memref<1x1x10xf32, #tpu.memory_space<vmem>>, vector<1x1x10xf32>
    %10 = vector.shape_cast %9 : vector<1x1x10xf32> to vector<1x10xf32>
    %11 = vector.broadcast %10 : vector<1x10xf32> to vector<8x10xf32>
    %12 = arith.addf %8, %11 : vector<8x10xf32>
    %cst_15 = arith.constant dense<0xFF800000> : vector<8xf32>
    %13 = vector.multi_reduction <maximumf>, %12, %cst_15 [1] : vector<8x10xf32> to vector<8xf32>
    %14 = vector.shape_cast %13 : vector<8xf32> to vector<8x1xf32>
    %15 = vector.broadcast %14 : vector<8x1xf32> to vector<8x10xf32>
    %16 = arith.subf %12, %15 : vector<8x10xf32>
    %17 = math.exp %16 : vector<8x10xf32>
    %cst_16 = arith.constant dense<0.000000e+00> : vector<8xf32>
    %18 = vector.multi_reduction <add>, %17, %cst_16 [1] : vector<8x10xf32> to vector<8xf32>
    %19 = vector.shape_cast %18 : vector<8xf32> to vector<8x1xf32>
    %20 = tpu.reciprocal %19 {approx = true} : vector<8x1xf32> -> vector<8x1xf32>
    %21 = vector.broadcast %20 : vector<8x1xf32> to vector<8x10xf32>
    %22 = arith.mulf %17, %21 : vector<8x10xf32>
    %23 = arith.truncf %22 : vector<8x10xf32> to vector<8x10xbf16>
    %cst_17 = arith.constant dense<0.000000e+00> : vector<8x8xf32>
    %24 = tpu.matmul %23, %5, %cst_17 {dimension_numbers = #tpu.dot_dimension_numbers<[1], [0], [0], [1], [0, 0, 1, 1], [], []>} : vector<8x10xbf16>, vector<10x8xbf16>, vector<8x8xf32> -> vector<8x8xf32>
    %25 = arith.truncf %24 : vector<8x8xf32> to vector<8x8xbf16>
    %c0_18 = arith.constant 0 : index
    %c0_19 = arith.constant 0 : index
    %c0_20 = arith.constant 0 : index
    %c0_21 = arith.constant 0 : index
    %26 = vector.load %arg6[%c0_18, %c0_19, %c0_20, %c0_21] : memref<1x1x8x8xbf16, #tpu.memory_space<vmem>>, vector<1x1x8x8xbf16>
    %27 = vector.shape_cast %26 : vector<1x1x8x8xbf16> to vector<8x8xbf16>
    %28 = vector.shape_cast %25 : vector<8x8xbf16> to vector<1x1x8x8xbf16>
    tpu.vector_store %arg6[%c0_18, %c0_19, %c0_20, %c0_21], %28 {strides = array<i32>} : memref<1x1x8x8xbf16, #tpu.memory_space<vmem>>, vector<1x1x8x8xbf16>,
    return
  }
  func.func @transform_0(%arg0: i32, %arg1: i32) -> (i32, i32, i32, i32) {
    %c0_i32 = arith.constant 0 : i32
    %c0_i32_0 = arith.constant 0 : i32
    %c0_i32_1 = arith.constant 0 : i32
    return %arg0, %arg1, %c0_i32, %c0_i32_0 : i32, i32, i32, i32
  }
  func.func @transform_1(%arg0: i32, %arg1: i32) -> (i32, i32, i32, i32) {
    %c0_i32 = arith.constant 0 : i32
    %c0_i32_0 = arith.constant 0 : i32
    %c0_i32_1 = arith.constant 0 : i32
    return %arg0, %arg1, %c0_i32, %c0_i32_0 : i32, i32, i32, i32
  }
  func.func @transform_2(%arg0: i32, %arg1: i32) -> (i32, i32, i32, i32) {
    %c0_i32 = arith.constant 0 : i32
    %c0_i32_0 = arith.constant 0 : i32
    %c0_i32_1 = arith.constant 0 : i32
    return %arg0, %arg1, %c0_i32, %c0_i32_0 : i32, i32, i32, i32
  }
  func.func @transform_3(%arg0: i32, %arg1: i32) -> (i32, i32, i32) {
    %c0_i32 = arith.constant 0 : i32
    %c0_i32_0 = arith.constant 0 : i32
    %c0_i32_1 = arith.constant 0 : i32
    return %arg0, %c0_i32, %c0_i32_0 : i32, i32, i32
  }
  func.func @transform_4(%arg0: i32, %arg1: i32) -> (i32, i32, i32, i32) {
    %c0_i32 = arith.constant 0 : i32
    %c0_i32_0 = arith.constant 0 : i32
    %c0_i32_1 = arith.constant 0 : i32
    return %arg0, %arg1, %c0_i32, %c0_i32_0 : i32, i32, i32, i32
  }
}

module attributes {stable_mosaic.version = 11 : i64} {
  func.func @_ffn_ln_kernel(%arg0: i32, %arg1: memref<16x32xbf16, #tpu.memory_space<vmem>>, %arg2: memref<32x64xbf16, #tpu.memory_space<vmem>>, %arg3: memref<1x64xf32, #tpu.memory_space<vmem>>, %arg4: memref<64x32xbf16, #tpu.memory_space<vmem>>, %arg5: memref<1x32xf32, #tpu.memory_space<vmem>>, %arg6: memref<1x32xf32, #tpu.memory_space<vmem>>, %arg7: memref<1x32xf32, #tpu.memory_space<vmem>>, %arg8: memref<16x32xbf16, #tpu.memory_space<vmem>>) attributes {dimension_semantics = [#tpu.dimension_semantics<parallel>], iteration_bounds = array<i64: 1>, scalar_prefetch = 0 : i64, scratch_operands = 0 : i64, tpu.core_type = #tpu.core_type<tc>, window_params = [{transform_indices = @transform_0, window_bounds = array<i64: 16, 32>}, {pipeline_mode = #tpu.pipeline_mode<synchronous>, transform_indices = @transform_1, window_bounds = array<i64: 32, 64>}, {pipeline_mode = #tpu.pipeline_mode<synchronous>, transform_indices = @transform_2, window_bounds = array<i64: 1, 64>}, {pipeline_mode = #tpu.pipeline_mode<synchronous>, transform_indices = @transform_3, window_bounds = array<i64: 64, 32>}, {pipeline_mode = #tpu.pipeline_mode<synchronous>, transform_indices = @transform_4, window_bounds = array<i64: 1, 32>}, {pipeline_mode = #tpu.pipeline_mode<synchronous>, transform_indices = @transform_5, window_bounds = array<i64: 1, 32>}, {pipeline_mode = #tpu.pipeline_mode<synchronous>, transform_indices = @transform_6, window_bounds = array<i64: 1, 32>}, {transform_indices = @transform_7, window_bounds = array<i64: 16, 32>}]} {
    %c0 = arith.constant 0 : index
    %c0_0 = arith.constant 0 : index
    %0 = vector.load %arg1[%c0, %c0_0] : memref<16x32xbf16, #tpu.memory_space<vmem>>, vector<16x32xbf16>
    %c0_1 = arith.constant 0 : index
    %c0_2 = arith.constant 0 : index
    %1 = vector.load %arg2[%c0_1, %c0_2] : memref<32x64xbf16, #tpu.memory_space<vmem>>, vector<32x64xbf16>
    %cst = arith.constant dense<0.000000e+00> : vector<16x64xf32>
    %2 = tpu.matmul %0, %1, %cst {dimension_numbers = #tpu.dot_dimension_numbers<[1], [0], [0], [1], [0, 0, 1, 1], [], []>} : vector<16x32xbf16>, vector<32x64xbf16>, vector<16x64xf32> -> vector<16x64xf32>
    %c0_3 = arith.constant 0 : index
    %c0_4 = arith.constant 0 : index
    %3 = vector.load %arg3[%c0_3, %c0_4] : memref<1x64xf32, #tpu.memory_space<vmem>>, vector<1x64xf32>
    %4 = vector.broadcast %3 : vector<1x64xf32> to vector<16x64xf32>
    %5 = arith.addf %2, %4 : vector<16x64xf32>
    %cst_5 = arith.constant 5.000000e-01 : f32
    %6 = vector.broadcast %cst_5 : f32 to vector<16x64xf32>
    %7 = arith.mulf %6, %5 : vector<16x64xf32>
    %cst_6 = arith.constant 0.707106769 : f32
    %8 = vector.broadcast %cst_6 : f32 to vector<16x64xf32>
    %9 = arith.mulf %5, %8 : vector<16x64xf32>
    %10 = math.erf %9 : vector<16x64xf32>
    %cst_7 = arith.constant 1.000000e+00 : f32
    %11 = vector.broadcast %cst_7 : f32 to vector<16x64xf32>
    %12 = arith.addf %11, %10 : vector<16x64xf32>
    %13 = arith.mulf %7, %12 : vector<16x64xf32>
    %14 = arith.truncf %13 : vector<16x64xf32> to vector<16x64xbf16>
    %c0_8 = arith.constant 0 : index
    %c0_9 = arith.constant 0 : index
    %15 = vector.load %arg4[%c0_8, %c0_9] : memref<64x32xbf16, #tpu.memory_space<vmem>>, vector<64x32xbf16>
    %cst_10 = arith.constant dense<0.000000e+00> : vector<16x32xf32>
    %16 = tpu.matmul %14, %15, %cst_10 {dimension_numbers = #tpu.dot_dimension_numbers<[1], [0], [0], [1], [0, 0, 1, 1], [], []>} : vector<16x64xbf16>, vector<64x32xbf16>, vector<16x32xf32> -> vector<16x32xf32>
    %c0_11 = arith.constant 0 : index
    %c0_12 = arith.constant 0 : index
    %17 = vector.load %arg5[%c0_11, %c0_12] : memref<1x32xf32, #tpu.memory_space<vmem>>, vector<1x32xf32>
    %18 = vector.broadcast %17 : vector<1x32xf32> to vector<16x32xf32>
    %19 = arith.addf %16, %18 : vector<16x32xf32>
    %20 = arith.extf %0 : vector<16x32xbf16> to vector<16x32xf32>
    %21 = arith.addf %19, %20 : vector<16x32xf32>
    %cst_13 = arith.constant dense<0.000000e+00> : vector<16xf32>
    %22 = vector.multi_reduction <add>, %21, %cst_13 [1] : vector<16x32xf32> to vector<16xf32>
    %23 = vector.shape_cast %22 : vector<16xf32> to vector<16x1xf32>
    %cst_14 = arith.constant 3.200000e+01 : f32
    %24 = vector.broadcast %cst_14 : f32 to vector<16x1xf32>
    %25 = arith.divf %23, %24 : vector<16x1xf32>
    %26 = vector.broadcast %25 : vector<16x1xf32> to vector<16x32xf32>
    %27 = arith.subf %21, %26 : vector<16x32xf32>
    %28 = arith.mulf %27, %27 : vector<16x32xf32>
    %cst_15 = arith.constant dense<0.000000e+00> : vector<16xf32>
    %29 = vector.multi_reduction <add>, %28, %cst_15 [1] : vector<16x32xf32> to vector<16xf32>
    %30 = vector.shape_cast %29 : vector<16xf32> to vector<16x1xf32>
    %cst_16 = arith.constant 3.200000e+01 : f32
    %31 = vector.broadcast %cst_16 : f32 to vector<16x1xf32>
    %32 = arith.divf %30, %31 : vector<16x1xf32>
    %cst_17 = arith.constant 9.99999974E-6 : f32
    %33 = vector.broadcast %cst_17 : f32 to vector<16x1xf32>
    %34 = arith.addf %32, %33 : vector<16x1xf32>
    %35 = math.rsqrt %34 : vector<16x1xf32>
    %36 = vector.broadcast %35 : vector<16x1xf32> to vector<16x32xf32>
    %37 = arith.mulf %27, %36 : vector<16x32xf32>
    %c0_18 = arith.constant 0 : index
    %c0_19 = arith.constant 0 : index
    %38 = vector.load %arg6[%c0_18, %c0_19] : memref<1x32xf32, #tpu.memory_space<vmem>>, vector<1x32xf32>
    %39 = vector.broadcast %38 : vector<1x32xf32> to vector<16x32xf32>
    %40 = arith.mulf %37, %39 : vector<16x32xf32>
    %c0_20 = arith.constant 0 : index
    %c0_21 = arith.constant 0 : index
    %41 = vector.load %arg7[%c0_20, %c0_21] : memref<1x32xf32, #tpu.memory_space<vmem>>, vector<1x32xf32>
    %42 = vector.broadcast %41 : vector<1x32xf32> to vector<16x32xf32>
    %43 = arith.addf %40, %42 : vector<16x32xf32>
    %44 = arith.truncf %43 : vector<16x32xf32> to vector<16x32xbf16>
    %c0_22 = arith.constant 0 : index
    %c0_23 = arith.constant 0 : index
    %45 = vector.load %arg8[%c0_22, %c0_23] : memref<16x32xbf16, #tpu.memory_space<vmem>>, vector<16x32xbf16>
    tpu.vector_store %arg8[%c0_22, %c0_23], %44 {strides = array<i32>} : memref<16x32xbf16, #tpu.memory_space<vmem>>, vector<16x32xbf16>,
    return
  }
  func.func @transform_0(%arg0: i32) -> (i32, i32) {
    %c0_i32 = arith.constant 0 : i32
    %c0_i32_0 = arith.constant 0 : i32
    return %arg0, %c0_i32 : i32, i32
  }
  func.func @transform_1(%arg0: i32) -> (i32, i32) {
    %c0_i32 = arith.constant 0 : i32
    %c0_i32_0 = arith.constant 0 : i32
    %c0_i32_1 = arith.constant 0 : i32
    return %c0_i32, %c0_i32_0 : i32, i32
  }
  func.func @transform_2(%arg0: i32) -> (i32, i32) {
    %c0_i32 = arith.constant 0 : i32
    %c0_i32_0 = arith.constant 0 : i32
    %c0_i32_1 = arith.constant 0 : i32
    return %c0_i32, %c0_i32_0 : i32, i32
  }
  func.func @transform_3(%arg0: i32) -> (i32, i32) {
    %c0_i32 = arith.constant 0 : i32
    %c0_i32_0 = arith.constant 0 : i32
    %c0_i32_1 = arith.constant 0 : i32
    return %c0_i32, %c0_i32_0 : i32, i32
  }
  func.func @transform_4(%arg0: i32) -> (i32, i32) {
    %c0_i32 = arith.constant 0 : i32
    %c0_i32_0 = arith.constant 0 : i32
    %c0_i32_1 = arith.constant 0 : i32
    return %c0_i32, %c0_i32_0 : i32, i32
  }
  func.func @transform_5(%arg0: i32) -> (i32, i32) {
    %c0_i32 = arith.constant 0 : i32
    %c0_i32_0 = arith.constant 0 : i32
    %c0_i32_1 = arith.constant 0 : i32
    return %c0_i32, %c0_i32_0 : i32, i32
  }
  func.func @transform_6(%arg0: i32) -> (i32, i32) {
    %c0_i32 = arith.constant 0 : i32
    %c0_i32_0 = arith.constant 0 : i32
    %c0_i32_1 = arith.constant 0 : i32
    return %c0_i32, %c0_i32_0 : i32, i32
  }
  func.func @transform_7(%arg0: i32) -> (i32, i32) {
    %c0_i32 = arith.constant 0 : i32
    %c0_i32_0 = arith.constant 0 : i32
    return %arg0, %c0_i32 : i32, i32
  }
}

module attributes {stable_mosaic.version = 11 : i64} {
  func.func @_ln_kernel(%arg0: i32, %arg1: memref<16x16xbf16, #tpu.memory_space<vmem>>, %arg2: memref<1x16xf32, #tpu.memory_space<vmem>>, %arg3: memref<1x16xf32, #tpu.memory_space<vmem>>, %arg4: memref<16x16xbf16, #tpu.memory_space<vmem>>) attributes {dimension_semantics = [#tpu.dimension_semantics<parallel>], iteration_bounds = array<i64: 1>, scalar_prefetch = 0 : i64, scratch_operands = 0 : i64, tpu.core_type = #tpu.core_type<tc>, window_params = [{transform_indices = @transform_0, window_bounds = array<i64: 16, 16>}, {pipeline_mode = #tpu.pipeline_mode<synchronous>, transform_indices = @transform_1, window_bounds = array<i64: 1, 16>}, {pipeline_mode = #tpu.pipeline_mode<synchronous>, transform_indices = @transform_2, window_bounds = array<i64: 1, 16>}, {transform_indices = @transform_3, window_bounds = array<i64: 16, 16>}]} {
    %c0 = arith.constant 0 : index
    %c0_0 = arith.constant 0 : index
    %0 = vector.load %arg1[%c0, %c0_0] : memref<16x16xbf16, #tpu.memory_space<vmem>>, vector<16x16xbf16>
    %1 = arith.extf %0 : vector<16x16xbf16> to vector<16x16xf32>
    %cst = arith.constant dense<0.000000e+00> : vector<16xf32>
    %2 = vector.multi_reduction <add>, %1, %cst [1] : vector<16x16xf32> to vector<16xf32>
    %3 = vector.shape_cast %2 : vector<16xf32> to vector<16x1xf32>
    %cst_1 = arith.constant 1.600000e+01 : f32
    %4 = vector.broadcast %cst_1 : f32 to vector<16x1xf32>
    %5 = arith.divf %3, %4 : vector<16x1xf32>
    %6 = vector.broadcast %5 : vector<16x1xf32> to vector<16x16xf32>
    %7 = arith.subf %1, %6 : vector<16x16xf32>
    %8 = arith.mulf %7, %7 : vector<16x16xf32>
    %cst_2 = arith.constant dense<0.000000e+00> : vector<16xf32>
    %9 = vector.multi_reduction <add>, %8, %cst_2 [1] : vector<16x16xf32> to vector<16xf32>
    %10 = vector.shape_cast %9 : vector<16xf32> to vector<16x1xf32>
    %cst_3 = arith.constant 1.600000e+01 : f32
    %11 = vector.broadcast %cst_3 : f32 to vector<16x1xf32>
    %12 = arith.divf %10, %11 : vector<16x1xf32>
    %cst_4 = arith.constant 9.99999974E-6 : f32
    %13 = vector.broadcast %cst_4 : f32 to vector<16x1xf32>
    %14 = arith.addf %12, %13 : vector<16x1xf32>
    %15 = math.rsqrt %14 : vector<16x1xf32>
    %16 = vector.broadcast %15 : vector<16x1xf32> to vector<16x16xf32>
    %17 = arith.mulf %7, %16 : vector<16x16xf32>
    %c0_5 = arith.constant 0 : index
    %c0_6 = arith.constant 0 : index
    %18 = vector.load %arg2[%c0_5, %c0_6] : memref<1x16xf32, #tpu.memory_space<vmem>>, vector<1x16xf32>
    %19 = vector.broadcast %18 : vector<1x16xf32> to vector<16x16xf32>
    %20 = arith.mulf %17, %19 : vector<16x16xf32>
    %c0_7 = arith.constant 0 : index
    %c0_8 = arith.constant 0 : index
    %21 = vector.load %arg3[%c0_7, %c0_8] : memref<1x16xf32, #tpu.memory_space<vmem>>, vector<1x16xf32>
    %22 = vector.broadcast %21 : vector<1x16xf32> to vector<16x16xf32>
    %23 = arith.addf %20, %22 : vector<16x16xf32>
    %24 = arith.truncf %23 : vector<16x16xf32> to vector<16x16xbf16>
    %c0_9 = arith.constant 0 : index
    %c0_10 = arith.constant 0 : index
    %25 = vector.load %arg4[%c0_9, %c0_10] : memref<16x16xbf16, #tpu.memory_space<vmem>>, vector<16x16xbf16>
    tpu.vector_store %arg4[%c0_9, %c0_10], %24 {strides = array<i32>} : memref<16x16xbf16, #tpu.memory_space<vmem>>, vector<16x16xbf16>,
    return
  }
  func.func @transform_0(%arg0: i32) -> (i32, i32) {
    %c0_i32 = arith.constant 0 : i32
    %c0_i32_0 = arith.constant 0 : i32
    return %arg0, %c0_i32 : i32, i32
  }
  func.func @transform_1(%arg0: i32) -> (i32, i32) {
    %c0_i32 = arith.constant 0 : i32
    %c0_i32_0 = arith.constant 0 : i32
    %c0_i32_1 = arith.constant 0 : i32
    return %c0_i32, %c0_i32_0 : i32, i32
  }
  func.func @transform_2(%arg0: i32) -> (i32, i32) {
    %c0_i32 = arith.constant 0 : i32
    %c0_i32_0 = arith.constant 0 : i32
    %c0_i32_1 = arith.constant 0 : i32
    return %c0_i32, %c0_i32_0 : i32, i32
  }
  func.func @transform_3(%arg0: i32) -> (i32, i32) {
    %c0_i32 = arith.constant 0 : i32
    %c0_i32_0 = arith.constant 0 : i32
    return %arg0, %c0_i32 : i32, i32
  }
}

module attributes {stable_mosaic.version = 11 : i64} {
  func.func @_linear_kernel(%arg0: i32, %arg1: i32, %arg2: i32, %arg3: memref<16x32xbf16, #tpu.memory_space<vmem>>, %arg4: memref<32x16xbf16, #tpu.memory_space<vmem>>, %arg5: memref<1x16xf32, #tpu.memory_space<vmem>>, %arg6: memref<16x16xbf16, #tpu.memory_space<vmem>>, %arg7: memref<16x16xf32, #tpu.memory_space<vmem>>) attributes {dimension_semantics = [#tpu.dimension_semantics<parallel>, #tpu.dimension_semantics<parallel>, #tpu.dimension_semantics<arbitrary>], iteration_bounds = array<i64: 1, 1, 1>, scalar_prefetch = 0 : i64, scratch_operands = 1 : i64, tpu.core_type = #tpu.core_type<tc>, window_params = [{transform_indices = @transform_0, window_bounds = array<i64: 16, 32>}, {transform_indices = @transform_1, window_bounds = array<i64: 32, 16>}, {transform_indices = @transform_2, window_bounds = array<i64: 1, 16>}, {transform_indices = @transform_3, window_bounds = array<i64: 16, 16>}]} {
    %c0_i32 = arith.constant 0 : i32
    %0 = arith.cmpi eq, %arg2, %c0_i32 : i32
    %1 = arith.extui %0 : i1 to i32
    %c0_i32_0 = arith.constant 0 : i32
    %2 = arith.cmpi ne, %1, %c0_i32_0 : i32
    scf.if %2 {
      %cst_10 = arith.constant 0.000000e+00 : f32
      %12 = vector.broadcast %cst_10 : f32 to vector<16x16xf32>
      %c0_11 = arith.constant 0 : index
      %c0_12 = arith.constant 0 : index
      %13 = vector.load %arg7[%c0_11, %c0_12] : memref<16x16xf32, #tpu.memory_space<vmem>>, vector<16x16xf32>
      tpu.vector_store %arg7[%c0_11, %c0_12], %12 {strides = array<i32>} : memref<16x16xf32, #tpu.memory_space<vmem>>, vector<16x16xf32>,
    } else {
    }
    %c0 = arith.constant 0 : index
    %c0_1 = arith.constant 0 : index
    %3 = vector.load %arg7[%c0, %c0_1] : memref<16x16xf32, #tpu.memory_space<vmem>>, vector<16x16xf32>
    %c0_2 = arith.constant 0 : index
    %c0_3 = arith.constant 0 : index
    %4 = vector.load %arg3[%c0_2, %c0_3] : memref<16x32xbf16, #tpu.memory_space<vmem>>, vector<16x32xbf16>
    %c0_4 = arith.constant 0 : index
    %c0_5 = arith.constant 0 : index
    %5 = vector.load %arg4[%c0_4, %c0_5] : memref<32x16xbf16, #tpu.memory_space<vmem>>, vector<32x16xbf16>
    %cst = arith.constant dense<0.000000e+00> : vector<16x16xf32>
    %6 = tpu.matmul %4, %5, %cst {dimension_numbers = #tpu.dot_dimension_numbers<[1], [0], [0], [1], [0, 0, 1, 1], [], []>} : vector<16x32xbf16>, vector<32x16xbf16>, vector<16x16xf32> -> vector<16x16xf32>
    %7 = arith.addf %3, %6 : vector<16x16xf32>
    %c0_6 = arith.constant 0 : index
    %c0_7 = arith.constant 0 : index
    %8 = vector.load %arg7[%c0_6, %c0_7] : memref<16x16xf32, #tpu.memory_space<vmem>>, vector<16x16xf32>
    tpu.vector_store %arg7[%c0_6, %c0_7], %7 {strides = array<i32>} : memref<16x16xf32, #tpu.memory_space<vmem>>, vector<16x16xf32>,
    %c0_i32_8 = arith.constant 0 : i32
    %9 = arith.cmpi eq, %arg2, %c0_i32_8 : i32
    %10 = arith.extui %9 : i1 to i32
    %c0_i32_9 = arith.constant 0 : i32
    %11 = arith.cmpi ne, %10, %c0_i32_9 : i32
    scf.if %11 {
      %c0_10 = arith.constant 0 : index
      %c0_11 = arith.constant 0 : index
      %12 = vector.load %arg7[%c0_10, %c0_11] : memref<16x16xf32, #tpu.memory_space<vmem>>, vector<16x16xf32>
      %c0_12 = arith.constant 0 : index
      %c0_13 = arith.constant 0 : index
      %13 = vector.load %arg5[%c0_12, %c0_13] : memref<1x16xf32, #tpu.memory_space<vmem>>, vector<1x16xf32>
      %14 = vector.broadcast %13 : vector<1x16xf32> to vector<16x16xf32>
      %15 = arith.addf %12, %14 : vector<16x16xf32>
      %cst_14 = arith.constant 5.000000e-01 : f32
      %16 = vector.broadcast %cst_14 : f32 to vector<16x16xf32>
      %17 = arith.mulf %16, %15 : vector<16x16xf32>
      %cst_15 = arith.constant 0.707106769 : f32
      %18 = vector.broadcast %cst_15 : f32 to vector<16x16xf32>
      %19 = arith.mulf %15, %18 : vector<16x16xf32>
      %20 = math.erf %19 : vector<16x16xf32>
      %cst_16 = arith.constant 1.000000e+00 : f32
      %21 = vector.broadcast %cst_16 : f32 to vector<16x16xf32>
      %22 = arith.addf %21, %20 : vector<16x16xf32>
      %23 = arith.mulf %17, %22 : vector<16x16xf32>
      %24 = arith.truncf %23 : vector<16x16xf32> to vector<16x16xbf16>
      %c0_17 = arith.constant 0 : index
      %c0_18 = arith.constant 0 : index
      %25 = vector.load %arg6[%c0_17, %c0_18] : memref<16x16xbf16, #tpu.memory_space<vmem>>, vector<16x16xbf16>
      tpu.vector_store %arg6[%c0_17, %c0_18], %24 {strides = array<i32>} : memref<16x16xbf16, #tpu.memory_space<vmem>>, vector<16x16xbf16>,
    } else {
    }
    return
  }
  func.func @transform_0(%arg0: i32, %arg1: i32, %arg2: i32) -> (i32, i32) {
    %c0_i32 = arith.constant 0 : i32
    return %arg0, %arg2 : i32, i32
  }
  func.func @transform_1(%arg0: i32, %arg1: i32, %arg2: i32) -> (i32, i32) {
    %c0_i32 = arith.constant 0 : i32
    return %arg2, %arg1 : i32, i32
  }
  func.func @transform_2(%arg0: i32, %arg1: i32, %arg2: i32) -> (i32, i32) {
    %c0_i32 = arith.constant 0 : i32
    %c0_i32_0 = arith.constant 0 : i32
    return %c0_i32, %arg1 : i32, i32
  }
  func.func @transform_3(%arg0: i32, %arg1: i32, %arg2: i32) -> (i32, i32) {
    %c0_i32 = arith.constant 0 : i32
    return %arg0, %arg1 : i32, i32
  }
}

module attributes {stable_mosaic.version = 11 : i64} {
  func.func @_linear_kernel(%arg0: i32, %arg1: i32, %arg2: i32, %arg3: memref<16x16xbf16, #tpu.memory_space<vmem>>, %arg4: memref<16x29xbf16, #tpu.memory_space<vmem>>, %arg5: memref<1x29xf32, #tpu.memory_space<vmem>>, %arg6: memref<16x29xf32, #tpu.memory_space<vmem>>, %arg7: memref<16x29xf32, #tpu.memory_space<vmem>>) attributes {dimension_semantics = [#tpu.dimension_semantics<parallel>, #tpu.dimension_semantics<parallel>, #tpu.dimension_semantics<arbitrary>], iteration_bounds = array<i64: 1, 1, 1>, scalar_prefetch = 0 : i64, scratch_operands = 1 : i64, tpu.core_type = #tpu.core_type<tc>, window_params = [{transform_indices = @transform_0, window_bounds = array<i64: 16, 16>}, {transform_indices = @transform_1, window_bounds = array<i64: 16, 29>}, {transform_indices = @transform_2, window_bounds = array<i64: 1, 29>}, {transform_indices = @transform_3, window_bounds = array<i64: 16, 29>}]} {
    %c0_i32 = arith.constant 0 : i32
    %0 = arith.cmpi eq, %arg2, %c0_i32 : i32
    %1 = arith.extui %0 : i1 to i32
    %c0_i32_0 = arith.constant 0 : i32
    %2 = arith.cmpi ne, %1, %c0_i32_0 : i32
    scf.if %2 {
      %cst_10 = arith.constant 0.000000e+00 : f32
      %12 = vector.broadcast %cst_10 : f32 to vector<16x29xf32>
      %c0_11 = arith.constant 0 : index
      %c0_12 = arith.constant 0 : index
      %13 = vector.load %arg7[%c0_11, %c0_12] : memref<16x29xf32, #tpu.memory_space<vmem>>, vector<16x29xf32>
      tpu.vector_store %arg7[%c0_11, %c0_12], %12 {strides = array<i32>} : memref<16x29xf32, #tpu.memory_space<vmem>>, vector<16x29xf32>,
    } else {
    }
    %c0 = arith.constant 0 : index
    %c0_1 = arith.constant 0 : index
    %3 = vector.load %arg7[%c0, %c0_1] : memref<16x29xf32, #tpu.memory_space<vmem>>, vector<16x29xf32>
    %c0_2 = arith.constant 0 : index
    %c0_3 = arith.constant 0 : index
    %4 = vector.load %arg3[%c0_2, %c0_3] : memref<16x16xbf16, #tpu.memory_space<vmem>>, vector<16x16xbf16>
    %c0_4 = arith.constant 0 : index
    %c0_5 = arith.constant 0 : index
    %5 = vector.load %arg4[%c0_4, %c0_5] : memref<16x29xbf16, #tpu.memory_space<vmem>>, vector<16x29xbf16>
    %cst = arith.constant dense<0.000000e+00> : vector<16x29xf32>
    %6 = tpu.matmul %4, %5, %cst {dimension_numbers = #tpu.dot_dimension_numbers<[1], [0], [0], [1], [0, 0, 1, 1], [], []>} : vector<16x16xbf16>, vector<16x29xbf16>, vector<16x29xf32> -> vector<16x29xf32>
    %7 = arith.addf %3, %6 : vector<16x29xf32>
    %c0_6 = arith.constant 0 : index
    %c0_7 = arith.constant 0 : index
    %8 = vector.load %arg7[%c0_6, %c0_7] : memref<16x29xf32, #tpu.memory_space<vmem>>, vector<16x29xf32>
    tpu.vector_store %arg7[%c0_6, %c0_7], %7 {strides = array<i32>} : memref<16x29xf32, #tpu.memory_space<vmem>>, vector<16x29xf32>,
    %c0_i32_8 = arith.constant 0 : i32
    %9 = arith.cmpi eq, %arg2, %c0_i32_8 : i32
    %10 = arith.extui %9 : i1 to i32
    %c0_i32_9 = arith.constant 0 : i32
    %11 = arith.cmpi ne, %10, %c0_i32_9 : i32
    scf.if %11 {
      %c0_10 = arith.constant 0 : index
      %c0_11 = arith.constant 0 : index
      %12 = vector.load %arg7[%c0_10, %c0_11] : memref<16x29xf32, #tpu.memory_space<vmem>>, vector<16x29xf32>
      %c0_12 = arith.constant 0 : index
      %c0_13 = arith.constant 0 : index
      %13 = vector.load %arg5[%c0_12, %c0_13] : memref<1x29xf32, #tpu.memory_space<vmem>>, vector<1x29xf32>
      %14 = vector.broadcast %13 : vector<1x29xf32> to vector<16x29xf32>
      %15 = arith.addf %12, %14 : vector<16x29xf32>
      %c0_14 = arith.constant 0 : index
      %c0_15 = arith.constant 0 : index
      %16 = vector.load %arg6[%c0_14, %c0_15] : memref<16x29xf32, #tpu.memory_space<vmem>>, vector<16x29xf32>
      tpu.vector_store %arg6[%c0_14, %c0_15], %15 {strides = array<i32>} : memref<16x29xf32, #tpu.memory_space<vmem>>, vector<16x29xf32>,
    } else {
    }
    return
  }
  func.func @transform_0(%arg0: i32, %arg1: i32, %arg2: i32) -> (i32, i32) {
    %c0_i32 = arith.constant 0 : i32
    return %arg0, %arg2 : i32, i32
  }
  func.func @transform_1(%arg0: i32, %arg1: i32, %arg2: i32) -> (i32, i32) {
    %c0_i32 = arith.constant 0 : i32
    return %arg2, %arg1 : i32, i32
  }
  func.func @transform_2(%arg0: i32, %arg1: i32, %arg2: i32) -> (i32, i32) {
    %c0_i32 = arith.constant 0 : i32
    %c0_i32_0 = arith.constant 0 : i32
    return %c0_i32, %arg1 : i32, i32
  }
  func.func @transform_3(%arg0: i32, %arg1: i32, %arg2: i32) -> (i32, i32) {
    %c0_i32 = arith.constant 0 : i32
    return %arg0, %arg1 : i32, i32
  }
}

</mosaic_0001>

<llo_original>
// kernel: transformer_forward.26
$region0: #{transformer_forward.26}
  #allocation0 [shape = 'u32[]', space=smem, size = 0x4, offset = 0x4, fixed_abs, tag = 'smem constant byte address 0x4 - core index']
  #allocation1 [shape = 'u32[144,128]{1,0:T(1,128)}', space=vmem, size = 0x12000, scoped, tag = 'internal scratch']
  #allocation2 [shape = 'f32[20,96]{1,0:T(8,128)}', space=vmem, size = 0x3000, scoped, tag = 'scratch operand']
  %s0 = inlined_call_operand.vmem [shape: bf16[20,32], index: 0, kind: input, shape index: {}]
  %s1 = inlined_call_operand.vmem [shape: bf16[32,96], index: 1, kind: input, shape index: {}]
  %s2 = inlined_call_operand.vmem [shape: f32[1,96], index: 2, kind: input, shape index: {}]
  %s3 = inlined_call_operand.vmem [shape: bf16[20,96], index: 3, kind: output, shape index: {}]
  %s4 = sld [smem:[#allocation0]]
  $region30: #{transformer_forward.26} parent=0
    _
  %s6 = ssub.s32 1, %s4
  %s7 = scalar_select 0, %s6, %s4
  // Predicated region
  $region2: #{transformer_forward.26} parent=0 // pred_check
    _
  $region3: #{transformer_forward.26} parent=0 // pred_check_branch
    %9 = sbr.rel (0) target = $region5
  $region4: #{transformer_forward.26} parent=0 // pred_region
    _
  $region5: #{transformer_forward.26} parent=0 // pred_fallthru
    _
  // Predicated region
  $region6: #{transformer_forward.26} parent=0 // pred_check
    _
  $region7: #{transformer_forward.26} parent=0 // pred_check_branch
    %11 = sbr.rel (0) target = $region9
  $region8: #{transformer_forward.26} parent=0 // pred_region
    _
  $region9: #{transformer_forward.26} parent=0 // pred_fallthru
    _
  // Predicated region
  $region10: #{transformer_forward.26} parent=0 // pred_check
    _
  $region11: #{transformer_forward.26} parent=0 // pred_check_branch
    %13 = sbr.rel (0) target = $region13
  $region12: #{transformer_forward.26} parent=0 // pred_region
    _
  $region13: #{transformer_forward.26} parent=0 // pred_fallthru
    _
  %p15 = scmp.eq.s32.totalorder 0, 0
  // Predicated region
  $region14: #{transformer_forward.26} parent=0 // pred_check
    %p16 = pneg %p15
  $region15: #{transformer_forward.26} parent=0 // pred_check_branch
    %18 = sbr.rel (%p16) target = $region17
  $region16: #{transformer_forward.26} parent=0 // pred_region
    %vm19 = vcmask 785408
    %20 = vst.msk [vmem:[#allocation2] sm:$0xff] %vm19, 0.0
    %21 = vst.msk [vmem:[#allocation2 + $0x8] sm:$0xff] %vm19, 0.0
    %vm22 = vcmask 781312
    %23 = vst.msk [vmem:[#allocation2 + $0x10] sm:$0xf] %vm22, 0.0
  $region17: #{transformer_forward.26} parent=0 // pred_fallthru
    _
  %v24 = vld [vmem:[#allocation2] sm:$0xff]
  %v25 = vld [vmem:[#allocation2 + $0x8] sm:$0xff]
  %v26 = vld [vmem:[#allocation2 + $0x10] sm:$0xf]
  %v27 = vld [vmem:[%s0] sm:$0xf]
  %v28 = vld [vmem:[%s0 + $0x4] sm:$0xf]
  %v29 = vld [vmem:[%s0 + $0x8] sm:$0x3]
  %v30 = vld [vmem:[%s1] sm:$0xf]
  %v31 = vld [vmem:[%s1 + $0x4] sm:$0xf]
  %v32 = vld [vmem:[%s1 + $0x8] sm:$0xf]
  %v33 = vld [vmem:[%s1 + $0xc] sm:$0xf]
  %v37 = vunpack.c.l.b16 %v27
  %v38 = vunpack.c.l.b16 %v28
  %v39 = vunpack.c.l.b16 %v29
  %v40 = vpack.c.b16 %v38, %v37
  %v41 = vpack.c.b16 %v39, %v39
  %v46 = vunpack.c.l.b16 %v30
  %v47 = vunpack.c.l.b16 %v31
  %v48 = vunpack.c.l.b16 %v32
  %v49 = vunpack.c.l.b16 %v33
  %v50 = vpack.c.b16 %v47, %v46
  %v51 = vpack.c.b16 %v49, %v48
  %vm54 = vcmask 261120
  %v56 = vsel %vm54, %v40, 0
  %v59 = vsel %vm54, %v41, 0
  %61 = vmatprep.subr.bf16.mxu0 0
  %62 = vmatpush1.bf16.msra.mxu0 %v50
  %63 = vmatprep.subr.bf16.mxu0 0
  %64 = vmatpush1.bf16.msra.mxu0 %v51
  %65 = vmatprep.subr.bf16.mxu0 0
  %66 = vmatpush1.bf16.msra.mxu0 0
  %67 = vmatprep.subr.bf16.mxu0 0
  %68 = vmatpush1.bf16.msra.mxu0 0
  %69 = vmatprep.subr.bf16.mxu0 0
  %70 = vmatpush1.bf16.msra.mxu0 0
  %71 = vmatprep.subr.bf16.mxu0 0
  %72 = vmatpush1.bf16.msra.mxu0 0
  %73 = vmatprep.subr.bf16.mxu0 0
  %74 = vmatpush1.bf16.msra.mxu0 0
  %75 = vmatprep.subr.bf16.mxu0 0
  %76 = vmatpush1.bf16.msra.mxu0 0
  %77 = vmatprep.subr.bf16.mxu0 0
  %78 = vmatpush1.bf16.msra.mxu0 0
  %79 = vmatprep.subr.bf16.mxu0 0
  %80 = vmatpush1.bf16.msra.mxu0 0
  %81 = vmatprep.subr.bf16.mxu0 0
  %82 = vmatpush1.bf16.msra.mxu0 0
  %83 = vmatprep.subr.bf16.mxu0 0
  %84 = vmatpush1.bf16.msra.mxu0 0
  %85 = vmatprep.subr.bf16.mxu0 0
  %86 = vmatpush1.bf16.msra.mxu0 0
  %87 = vmatprep.subr.bf16.mxu0 0
  %88 = vmatpush1.bf16.msra.mxu0 0
  %89 = vmatprep.subr.bf16.mxu0 0
  %90 = vmatpush1.bf16.msra.mxu0 0
  %91 = vmatprep.subr.bf16.mxu0 0
  %92 = vmatpush1.bf16.msra.mxu0 0
  %93 = vmatprep.mubr.bf16.mxu0 0
  %94 = vmatmul.mubr.bf16.gmra.mrb[0].mxu0 %v56
  %v95 = vpop.f32.mrb[0].mxu0
  %v96 = vadd.f32 0.0, %v95
  %v97 = vpop.f32.mrb[0].mxu0
  %v98 = vpop.f32.mrb[0].mxu0
  %v99 = vadd.f32 0.0, %v98
  %v100 = vpop.f32.mrb[0].mxu0
  %101 = vmatprep.mubr.bf16.mxu0 0
  %102 = vmatmul.mubr.bf16.gmra.mrb[0].mxu0 %v59
  %v103 = vpop.f32.mrb[0].mxu0
  %v104 = vadd.f32 0.0, %v103
  %v105 = vpop.f32.mrb[0].mxu0
  %v106 = vpop.f32.mrb[0].mxu0
  %v107 = vpop.f32.mrb[0].mxu0
  %108 = vdwg.mxu0
  %v109 = vadd.f32 %v24, %v96
  %v110 = vadd.f32 %v25, %v99
  %v111 = vadd.f32 %v26, %v104
  %vm112 = vcmask 785408
  %113 = vst.msk [vmem:[#allocation2] sm:$0xff] %vm112, %v109
  %114 = vst.msk [vmem:[#allocation2 + $0x8] sm:$0xff] %vm112, %v110
  %vm115 = vcmask 781312
  %116 = vst.msk [vmem:[#allocation2 + $0x10] sm:$0xf] %vm115, %v111
  // Predicated region
  $region18: #{transformer_forward.26} parent=0 // pred_check
    %p117 = pneg %p15
  $region19: #{transformer_forward.26} parent=0 // pred_check_branch
    %119 = sbr.rel (%p117) target = $region21
  $region20: #{transformer_forward.26} parent=0 // pred_region
    %v120 = vld [vmem:[#allocation2] sm:$0xff]
    %v121 = vld [vmem:[#allocation2 + $0x8] sm:$0xff]
    %v122 = vld [vmem:[#allocation2 + $0x10] sm:$0xf]
    %v123 = vld [vmem:[%s2] sm:$0x1]
    %v125 = vlaneseq
    %v126 = vshrl.u32 %v125, 7
    %v127 = vsub.s32 0, %v126
    %v128 = vrot.slane %v123, %v127
    %v130 = vadd.f32 %v120, %v128
    %v131 = vadd.f32 %v121, %v128
    %v132 = vadd.f32 %v122, %v128
    %v133 = vpack.c.bf16 %v131, %v130
    %v134 = vpack.c.bf16 %v132, %v132
    %v137 = vunpack.c.l.b16 %v133
    %v138 = vunpack.c.h.b16 %v133
    %v139 = vunpack.c.l.b16 %v134
    %v140 = vpack.c.b16 %v137, %v137
    %v141 = vpack.c.b16 %v138, %v138
    %v142 = vpack.c.b16 %v139, %v139
    %146 = vst.msk [vmem:[%s3] sm:$0xf] %vm115, %v140
    %147 = vst.msk [vmem:[%s3 + $0x4] sm:$0xf] %vm115, %v141
    %vm148 = vcmask 779264
    %149 = vst.msk [vmem:[%s3 + $0x8] sm:$0x3] %vm148, %v142
  $region21: #{transformer_forward.26} parent=0 // pred_fallthru
    _
  // Predicated region
  $region22: #{transformer_forward.26} parent=0 // pred_check
    _
  $region23: #{transformer_forward.26} parent=0 // pred_check_branch
    %151 = sbr.rel (0) target = $region25
  $region24: #{transformer_forward.26} parent=0 // pred_region
    _
  $region25: #{transformer_forward.26} parent=0 // pred_fallthru
    _
  // Predicated region
  $region26: #{transformer_forward.26} parent=0 // pred_check
    _
  $region27: #{transformer_forward.26} parent=0 // pred_check_branch
    %153 = sbr.rel (0) target = $region29
  $region28: #{transformer_forward.26} parent=0 // pred_region
    _
  $region29: #{transformer_forward.26} parent=0 // pred_fallthru
    _

// kernel: transformer_forward.27
$region0: #{transformer_forward.27}
  #allocation0 [shape = 'u32[]', space=smem, size = 0x4, offset = 0x4, fixed_abs, tag = 'smem constant byte address 0x4 - core index']
  #allocation1 [shape = 'u32[144,128]{1,0:T(1,128)}', space=vmem, size = 0x12000, scoped, tag = 'internal scratch']
  %s0 = inlined_call_operand.vmem [shape: bf16[2,4,10,8], index: 0, kind: input, shape index: {}]
  %s1 = inlined_call_operand.vmem [shape: bf16[2,4,10,8], index: 1, kind: input, shape index: {}]
  %s2 = inlined_call_operand.vmem [shape: bf16[2,4,10,8], index: 2, kind: input, shape index: {}]
  %s3 = inlined_call_operand.vmem [shape: f32[2,1,10], index: 3, kind: input, shape index: {}]
  %s4 = inlined_call_operand.vmem [shape: bf16[2,4,10,8], index: 4, kind: output, shape index: {}]
  %s5 = sld [smem:[#allocation0]]
  $region49: #{transformer_forward.27} parent=0
    _
  %s7 = ssub.s32 1, %s5
  %s8 = scalar_select 0, %s7, %s5
  loop: start=0, step=1, limit=10
  $region2: #{transformer_forward.27} parent=0 // loop_pre_header
    _
  $region3: #{transformer_forward.27} parent=0 // loop_header
    %s10 = sphi 0, %s14
    %p11 = scmp.ge.s32.totalorder %s10, 10
    %s17 = sphi 0, %s29
    %s18 = sphi 0, %s25
    %s19 = sphi 0, %s17
    %s20 = sphi 0, %s18
    %s21 = sphi 0, %s19
    %s22 = sphi 0, %s20
    %s34 = sphi 0, %s36
    %s37 = sphi 0, %s34
    %s38 = sphi 0, %s37
    %s54 = sphi 0, %s38
    %s62 = sphi 0, %s64
    %s65 = sphi 0, %s62
    %s66 = sphi 0, %s65
    %s82 = sphi 0, %s66
    %s90 = sphi 0, %s92
    %s93 = sphi 0, %s90
    %s94 = sphi 0, %s93
    %s110 = sphi 0, %s94
    %s116 = sphi 0, %s118
    %s119 = sphi 0, %s116
    %s120 = sphi 0, %s119
    %s136 = sphi 0, %s120
    %s144 = sphi 0, %s146
    %s147 = sphi 0, %s144
    %s148 = sphi 0, %s147
    %s164 = sphi 0, %s148
  $region4: #{transformer_forward.27} parent=0 // loop_header_branch
    %13 = sbr.rel (%p11) target = $region8
  $region5: #{transformer_forward.27} parent=0 // loop_body
    %s15 = ssub.s32 %s10, 1
    %s16 = ssub.s32 %s10, 2
    %s23 = sadd.s32 1, %s18
    %p24 = scmp.ge.s32.totalorder %s23, 4
    %s25 = scalar_select %p24, 0, %s23
    %s26 = sadd.s32 1, %s17
    %s27 = scalar_select %p24, %s26, %s17
    %p28 = scmp.ge.s32.totalorder %s27, 2
    %s29 = scalar_select %p28, 0, %s27
    %s30 = ssub.s32 %s17, %s29
    %s31 = ssub.s32 %s18, %s25
    %s32 = sor.u32 %s30, %s31
    %p33 = scmp.eq.s32.totalorder %s32, 0
    %s35 = sadd.s32 %s34, 1
    %s36 = scalar_select %p33, %s34, %s35
    %p39 = pneg %p33
    %p40 = scmp.eq.s32.totalorder %s10, 7
    %p41 = por %p39, %p40
    %p42 = scmp.ne.s32.totalorder %s34, %s37
    %p43 = scmp.eq.s32.totalorder %s10, 0
    %p44 = por %p42, %p43
    %p45 = scmp.ne.s32.totalorder %s34, %s37
    %p46 = scmp.eq.s32.totalorder %s15, 7
    %p47 = por %p45, %p46
    %p48 = scmp.ne.s32.totalorder %s37, %s38
    %p49 = scmp.eq.s32.totalorder %s15, 0
    %p50 = por %p48, %p49
    %p51 = scmp.ne.s32.totalorder %s37, %s38
    %p52 = scmp.eq.s32.totalorder %s16, 7
    %p53 = por %p51, %p52
    %p55 = scmp.ne.s32.totalorder %s38, %s54
    %p56 = scmp.eq.s32.totalorder %s16, 0
    %p57 = por %p55, %p56
    %s58 = ssub.s32 %s17, %s29
    %s59 = ssub.s32 %s18, %s25
    %s60 = sor.u32 %s58, %s59
    %p61 = scmp.eq.s32.totalorder %s60, 0
    %s63 = sadd.s32 %s62, 1
    %s64 = scalar_select %p61, %s62, %s63
    %p67 = pneg %p61
    %p68 = scmp.eq.s32.totalorder %s10, 7
    %p69 = por %p67, %p68
    %p70 = scmp.ne.s32.totalorder %s62, %s65
    %p71 = scmp.eq.s32.totalorder %s10, 0
    %p72 = por %p70, %p71
    %p73 = scmp.ne.s32.totalorder %s62, %s65
    %p74 = scmp.eq.s32.totalorder %s15, 7
    %p75 = por %p73, %p74
    %p76 = scmp.ne.s32.totalorder %s65, %s66
    %p77 = scmp.eq.s32.totalorder %s15, 0
    %p78 = por %p76, %p77
    %p79 = scmp.ne.s32.totalorder %s65, %s66
    %p80 = scmp.eq.s32.totalorder %s16, 7
    %p81 = por %p79, %p80
    %p83 = scmp.ne.s32.totalorder %s66, %s82
    %p84 = scmp.eq.s32.totalorder %s16, 0
    %p85 = por %p83, %p84
    %s86 = ssub.s32 %s17, %s29
    %s87 = ssub.s32 %s18, %s25
    %s88 = sor.u32 %s86, %s87
    %p89 = scmp.eq.s32.totalorder %s88, 0
    %s91 = sadd.s32 %s90, 1
    %s92 = scalar_select %p89, %s90, %s91
    %p95 = pneg %p89
    %p96 = scmp.eq.s32.totalorder %s10, 7
    %p97 = por %p95, %p96
    %p98 = scmp.ne.s32.totalorder %s90, %s93
    %p99 = scmp.eq.s32.totalorder %s10, 0
    %p100 = por %p98, %p99
    %p101 = scmp.ne.s32.totalorder %s90, %s93
    %p102 = scmp.eq.s32.totalorder %s15, 7
    %p103 = por %p101, %p102
    %p104 = scmp.ne.s32.totalorder %s93, %s94
    %p105 = scmp.eq.s32.totalorder %s15, 0
    %p106 = por %p104, %p105
    %p107 = scmp.ne.s32.totalorder %s93, %s94
    %p108 = scmp.eq.s32.totalorder %s16, 7
    %p109 = por %p107, %p108
    %p111 = scmp.ne.s32.totalorder %s94, %s110
    %p112 = scmp.eq.s32.totalorder %s16, 0
    %p113 = por %p111, %p112
    %s114 = ssub.s32 %s17, %s29
    %p115 = scmp.eq.s32.totalorder %s114, 0
    %s117 = sadd.s32 %s116, 1
    %s118 = scalar_select %p115, %s116, %s117
    %p121 = pneg %p115
    %p122 = scmp.eq.s32.totalorder %s10, 7
    %p123 = por %p121, %p122
    %p124 = scmp.ne.s32.totalorder %s116, %s119
    %p125 = scmp.eq.s32.totalorder %s10, 0
    %p126 = por %p124, %p125
    %p127 = scmp.ne.s32.totalorder %s116, %s119
    %p128 = scmp.eq.s32.totalorder %s15, 7
    %p129 = por %p127, %p128
    %p130 = scmp.ne.s32.totalorder %s119, %s120
    %p131 = scmp.eq.s32.totalorder %s15, 0
    %p132 = por %p130, %p131
    %p133 = scmp.ne.s32.totalorder %s119, %s120
    %p134 = scmp.eq.s32.totalorder %s16, 7
    %p135 = por %p133, %p134
    %p137 = scmp.ne.s32.totalorder %s120, %s136
    %p138 = scmp.eq.s32.totalorder %s16, 0
    %p139 = por %p137, %p138
    %s140 = ssub.s32 %s17, %s29
    %s141 = ssub.s32 %s18, %s25
    %s142 = sor.u32 %s140, %s141
    %p143 = scmp.eq.s32.totalorder %s142, 0
    %s145 = sadd.s32 %s144, 1
    %s146 = scalar_select %p143, %s144, %s145
    %p149 = pneg %p143
    %p150 = scmp.eq.s32.totalorder %s10, 7
    %p151 = por %p149, %p150
    %p152 = scmp.ne.s32.totalorder %s144, %s147
    %p153 = scmp.eq.s32.totalorder %s10, 0
    %p154 = por %p152, %p153
    %p155 = scmp.ne.s32.totalorder %s144, %s147
    %p156 = scmp.eq.s32.totalorder %s15, 7
    %p157 = por %p155, %p156
    %p158 = scmp.ne.s32.totalorder %s147, %s148
    %p159 = scmp.eq.s32.totalorder %s15, 0
    %p160 = por %p158, %p159
    %p161 = scmp.ne.s32.totalorder %s147, %s148
    %p162 = scmp.eq.s32.totalorder %s16, 7
    %p163 = por %p161, %p162
    %p165 = scmp.ne.s32.totalorder %s148, %s164
    %p166 = scmp.eq.s32.totalorder %s16, 0
    %p167 = por %p165, %p166
    %p168 = scmp.le.s32.totalorder 1, %s10
    %p169 = scmp.lt.s32.totalorder %s10, 9
    %p170 = pnand %p168, %p169
    %p171 = pneg %p170
    // Predicated region
    $region9: #{transformer_forward.27} parent=5 // pred_check
      _
    $region10: #{transformer_forward.27} parent=5 // pred_check_branch
      %173 = sbr.rel (%p170) target = $region12
    $region11: #{transformer_forward.27} parent=5 // pred_region
      %s174 = ssub.s32 %s10, 1
    $region12: #{transformer_forward.27} parent=5 // pred_fallthru
      _
    %p175 = scmp.lt.s32.totalorder %s10, 8
    // Predicated region
    $region13: #{transformer_forward.27} parent=5 // pred_check
      %p176 = pneg %p175
    $region14: #{transformer_forward.27} parent=5 // pred_check_branch
      %178 = sbr.rel (%p176) target = $region16
    $region15: #{transformer_forward.27} parent=5 // pred_region
      // Predicated region
      $region17: #{transformer_forward.27} parent=15 // pred_check
        %p179 = pneg %p44
      $region18: #{transformer_forward.27} parent=15 // pred_check_branch
        %181 = sbr.rel (%p179) target = $region20
      $region19: #{transformer_forward.27} parent=15 // pred_region
        %p182 = scmp.lt.s32.totalorder %s17, 1
        %s183 = scalar_select %p182, %s17, 1
        %p184 = scmp.lt.s32.totalorder %s18, 3
        %s185 = scalar_select %p184, %s18, 3
        %s186 = smul.addr %s185, 2
        %s187 = smul.addr %s183, 8
        %s188 = sadd.s32 %s186, %s187
        %s189 = smul.addr %s188, 4
        %s190 = scalar_lea.vmem %s0, %s189
      $region20: #{transformer_forward.27} parent=15 // pred_fallthru
        _
      // Predicated region
      $region21: #{transformer_forward.27} parent=15 // pred_check
        %p191 = pneg %p72
      $region22: #{transformer_forward.27} parent=15 // pred_check_branch
        %193 = sbr.rel (%p191) target = $region24
      $region23: #{transformer_forward.27} parent=15 // pred_region
        %p194 = scmp.lt.s32.totalorder %s17, 1
        %s195 = scalar_select %p194, %s17, 1
        %p196 = scmp.lt.s32.totalorder %s18, 3
        %s197 = scalar_select %p196, %s18, 3
        %s198 = smul.addr %s197, 2
        %s199 = smul.addr %s195, 8
        %s200 = sadd.s32 %s198, %s199
        %s201 = smul.addr %s200, 4
        %s202 = scalar_lea.vmem %s1, %s201
      $region24: #{transformer_forward.27} parent=15 // pred_fallthru
        _
      // Predicated region
      $region25: #{transformer_forward.27} parent=15 // pred_check
        %p203 = pneg %p100
      $region26: #{transformer_forward.27} parent=15 // pred_check_branch
        %205 = sbr.rel (%p203) target = $region28
      $region27: #{transformer_forward.27} parent=15 // pred_region
        %p206 = scmp.lt.s32.totalorder %s17, 1
        %s207 = scalar_select %p206, %s17, 1
        %p208 = scmp.lt.s32.totalorder %s18, 3
        %s209 = scalar_select %p208, %s18, 3
        %s210 = smul.addr %s209, 2
        %s211 = smul.addr %s207, 8
        %s212 = sadd.s32 %s210, %s211
        %s213 = smul.addr %s212, 4
        %s214 = scalar_lea.vmem %s2, %s213
      $region28: #{transformer_forward.27} parent=15 // pred_fallthru
        _
      // Predicated region
      $region29: #{transformer_forward.27} parent=15 // pred_check
        %p215 = pneg %p126
      $region30: #{transformer_forward.27} parent=15 // pred_check_branch
        %217 = sbr.rel (%p215) target = $region32
      $region31: #{transformer_forward.27} parent=15 // pred_region
        %p218 = scmp.lt.s32.totalorder %s17, 1
        %s219 = scalar_select %p218, %s17, 1
        %s220 = scalar_lea.vmem %s3, %s219
      $region32: #{transformer_forward.27} parent=15 // pred_fallthru
        _
    $region16: #{transformer_forward.27} parent=5 // pred_fallthru
      _
    %p221 = scmp.le.s32.totalorder 1, %s10
    %p222 = scmp.lt.s32.totalorder %s10, 9
    %p223 = pnand %p221, %p222
    %p224 = pneg %p223
    // Predicated region
    $region33: #{transformer_forward.27} parent=5 // pred_check
      _
    $region34: #{transformer_forward.27} parent=5 // pred_check_branch
      %226 = sbr.rel (%p223) target = $region36
    $region35: #{transformer_forward.27} parent=5 // pred_region
      %s227 = ssub.s32 %s10, 1
      %p228 = scmp.lt.s32.totalorder %s19, 1
      %s229 = scalar_select %p228, %s19, 1
      %p230 = scmp.lt.s32.totalorder %s20, 3
      %s231 = scalar_select %p230, %s20, 3
      %s232 = smul.addr %s231, 2
      %s233 = smul.addr %s229, 8
      %s234 = sadd.s32 %s232, %s233
      %s235 = smul.addr %s234, 4
      %s236 = scalar_lea.vmem %s0, %s235
      %p237 = pneg %p50
      %p238 = pneg %p47
      %p239 = scmp.lt.s32.totalorder %s19, 1
      %s240 = scalar_select %p239, %s19, 1
      %p241 = scmp.lt.s32.totalorder %s20, 3
      %s242 = scalar_select %p241, %s20, 3
      %s243 = smul.addr %s242, 2
      %s244 = smul.addr %s240, 8
      %s245 = sadd.s32 %s243, %s244
      %s246 = smul.addr %s245, 4
      %s247 = scalar_lea.vmem %s1, %s246
      %p248 = pneg %p78
      %p249 = pneg %p75
      %p250 = scmp.lt.s32.totalorder %s19, 1
      %s251 = scalar_select %p250, %s19, 1
      %p252 = scmp.lt.s32.totalorder %s20, 3
      %s253 = scalar_select %p252, %s20, 3
      %s254 = smul.addr %s253, 2
      %s255 = smul.addr %s251, 8
      %s256 = sadd.s32 %s254, %s255
      %s257 = smul.addr %s256, 4
      %s258 = scalar_lea.vmem %s2, %s257
      %p259 = pneg %p106
      %p260 = pneg %p103
      %p261 = scmp.lt.s32.totalorder %s19, 1
      %s262 = scalar_select %p261, %s19, 1
      %s263 = scalar_lea.vmem %s3, %s262
      %p264 = pneg %p132
      %p265 = pneg %p129
      %p266 = pneg %p160
      %p267 = pneg %p157
      %p268 = scmp.lt.s32.totalorder %s19, 1
      %s269 = scalar_select %p268, %s19, 1
      %p270 = scmp.lt.s32.totalorder %s20, 3
      %s271 = scalar_select %p270, %s20, 3
      %s272 = smul.addr %s271, 2
      %s273 = smul.addr %s269, 8
      %s274 = sadd.s32 %s272, %s273
      %s275 = smul.addr %s274, 4
      %s276 = scalar_lea.vmem %s4, %s275
      %p277 = scmp.lt.s32.totalorder %s19, 1
      %s278 = scalar_select %p277, %s19, 1
      %p279 = scmp.lt.s32.totalorder %s20, 3
      %s280 = scalar_select %p279, %s20, 3
      %s281 = smul.addr %s280, 2
      %s282 = smul.addr %s278, 8
      %s283 = sadd.s32 %s281, %s282
      %s284 = smul.addr %s283, 4
      %s285 = scalar_lea.vmem %s0, %s284
      %p286 = scmp.lt.s32.totalorder %s19, 1
      %s287 = scalar_select %p286, %s19, 1
      %p288 = scmp.lt.s32.totalorder %s20, 3
      %s289 = scalar_select %p288, %s20, 3
      %s290 = smul.addr %s289, 2
      %s291 = smul.addr %s287, 8
      %s292 = sadd.s32 %s290, %s291
      %s293 = smul.addr %s292, 4
      %s294 = scalar_lea.vmem %s1, %s293
      %p295 = scmp.lt.s32.totalorder %s19, 1
      %s296 = scalar_select %p295, %s19, 1
      %p297 = scmp.lt.s32.totalorder %s20, 3
      %s298 = scalar_select %p297, %s20, 3
      %s299 = smul.addr %s298, 2
      %s300 = smul.addr %s296, 8
      %s301 = sadd.s32 %s299, %s300
      %s302 = smul.addr %s301, 4
      %s303 = scalar_lea.vmem %s2, %s302
      %p304 = scmp.lt.s32.totalorder %s19, 1
      %s305 = scalar_select %p304, %s19, 1
      %s306 = scalar_lea.vmem %s3, %s305
      %p307 = scmp.lt.s32.totalorder %s19, 1
      %s308 = scalar_select %p307, %s19, 1
      %p309 = scmp.lt.s32.totalorder %s20, 3
      %s310 = scalar_select %p309, %s20, 3
      %s311 = smul.addr %s310, 2
      %s312 = smul.addr %s308, 8
      %s313 = sadd.s32 %s311, %s312
      %s314 = smul.addr %s313, 4
      %s315 = scalar_lea.vmem %s4, %s314
      %v317 = vld [vmem:[%s285] sm:$0xf]
      %v318 = vld [vmem:[%s285 + $0x4] sm:$0x1]
      %v319 = vld [vmem:[%s294] sm:$0xf]
      %v320 = vld [vmem:[%s294 + $0x4] sm:$0x1]
      %v321 = vld [vmem:[%s303] sm:$0xf]
      %v322 = vld [vmem:[%s303 + $0x4] sm:$0x1]
      %v325 = vunpack.c.l.b16 %v317
      %v326 = vunpack.c.l.b16 %v318
      %v327 = vpack.c.b16 %v326, %v325
      %v330 = vunpack.c.l.b16 %v319
      %v331 = vunpack.c.l.b16 %v320
      %v332 = vpack.c.b16 %v331, %v330
      %vm333 = vcmask 64512
      %v335 = vsel %vm333, %v327, 0
      %v338 = vsel %vm333, %v332, 0
      %340 = vmatprep.subr.bf16.mxu0 0
      %341 = vmatpush1.bf16.xpose.msra.mxu0 %v338
      %342 = vmatprep.subr.bf16.mxu0 0
      %343 = vmatpush1.bf16.xpose.msra.mxu0 0
      %344 = vmatprep.subr.bf16.mxu0 0
      %345 = vmatpush1.bf16.xpose.msra.mxu0 0
      %346 = vmatprep.subr.bf16.mxu0 0
      %347 = vmatpush1.bf16.xpose.msra.mxu0 0
      %348 = vmatprep.subr.bf16.mxu0 0
      %349 = vmatpush1.bf16.xpose.msra.mxu0 0
      %350 = vmatprep.subr.bf16.mxu0 0
      %351 = vmatpush1.bf16.xpose.msra.mxu0 0
      %352 = vmatprep.subr.bf16.mxu0 0
      %353 = vmatpush1.bf16.xpose.msra.mxu0 0
      %354 = vmatprep.subr.bf16.mxu0 0
      %355 = vmatpush1.bf16.xpose.msra.mxu0 0
      %356 = vmatprep.subr.bf16.mxu0 0
      %357 = vmatpush1.bf16.xpose.msra.mxu0 0
      %358 = vmatprep.subr.bf16.mxu0 0
      %359 = vmatpush1.bf16.xpose.msra.mxu0 0
      %360 = vmatprep.subr.bf16.mxu0 0
      %361 = vmatpush1.bf16.xpose.msra.mxu0 0
      %362 = vmatprep.subr.bf16.mxu0 0
      %363 = vmatpush1.bf16.xpose.msra.mxu0 0
      %364 = vmatprep.subr.bf16.mxu0 0
      %365 = vmatpush1.bf16.xpose.msra.mxu0 0
      %366 = vmatprep.subr.bf16.mxu0 0
      %367 = vmatpush1.bf16.xpose.msra.mxu0 0
      %368 = vmatprep.subr.bf16.mxu0 0
      %369 = vmatpush1.bf16.xpose.msra.mxu0 0
      %370 = vmatprep.subr.bf16.mxu0 0
      %371 = vmatpush1.bf16.xpose.msra.mxu0 0
      %372 = vmatprep.mubr.bf16.mxu0 0
      %373 = vmatmul.mubr.bf16.gmra.mrb[0].mxu0 %v335
      %v374 = vpop.f32.mrb[0].mxu0
      %v375 = vadd.f32 0.0, %v374
      %v376 = vpop.f32.mrb[0].mxu0
      %v377 = vpop.f32.mrb[0].mxu0
      %v378 = vadd.f32 0.0, %v377
      %v379 = vpop.f32.mrb[0].mxu0
      %380 = vdwg.mxu0
      %v381 = vmul.f32 %v375, 0.35355338
      %v382 = vmul.f32 %v378, 0.35355338
      %v383 = vld [vmem:[%s306] sm:$0x1]
      %v385 = vlaneseq
      %v386 = vshrl.u32 %v385, 7
      %v387 = vsub.s32 0, %v386
      %v388 = vrot.slane %v383, %v387
      %v390 = vadd.f32 %v381, %v388
      %v391 = vadd.f32 %v382, %v388
      %vm392 = vcmask 80896
      %v393 = vsel %vm392, %v390, -inf
      %394 = vmax.xlane.f32.xlu0 %v393
      %v395 = vpop.xlane.xlu0 %394
      %vm396 = vcmask 74752
      %v397 = vsel %vm396, %v391, -inf
      %398 = vmax.xlane.f32.xlu0 %v397
      %v399 = vpop.xlane.xlu0 %398
      %v400 = vsub.f32 %v390, %v395
      %v401 = vsub.f32 %v391, %v399
      %v402 = vmul.f32 %v400, 1.442695
      %v403 = vpow.pop %v402
      %v404 = vmul.f32 %v401, 1.442695
      %v405 = vpow.pop %v404
      %v406 = vsel %vm392, %v403, 0.0
      %407 = vadd.xlane.f32.xlu0 %v406
      %v408 = vpop.xlane.xlu0 %407
      %v409 = vsel %vm396, %v405, 0.0
      %410 = vadd.xlane.f32.xlu0 %v409
      %v411 = vpop.xlane.xlu0 %410
      %v412 = vrcp.pop %v408
      %v413 = vrcp.pop %v411
      %v414 = vmul.f32 %v403, %v412
      %v415 = vmul.f32 %v405, %v413
      %v416 = vpack.c.bf16 %v415, %v414
      %v419 = vunpack.c.l.b16 %v321
      %v420 = vunpack.c.l.b16 %v322
      %v421 = vpack.c.b16 %v420, %v419
      %v423 = vsel %vm392, %v416, 0
      %vm425 = vcmask 1044480
      %v427 = vsel %vm425, %v421, 0
      %429 = vmatprep.subr.bf16.mxu0 0
      %430 = vmatpush1.bf16.msra.mxu0 %v427
      %431 = vmatprep.subr.bf16.mxu0 0
      %432 = vmatpush1.bf16.msra.mxu0 0
      %433 = vmatprep.subr.bf16.mxu0 0
      %434 = vmatpush1.bf16.msra.mxu0 0
      %435 = vmatprep.subr.bf16.mxu0 0
      %436 = vmatpush1.bf16.msra.mxu0 0
      %437 = vmatprep.subr.bf16.mxu0 0
      %438 = vmatpush1.bf16.msra.mxu0 0
      %439 = vmatprep.subr.bf16.mxu0 0
      %440 = vmatpush1.bf16.msra.mxu0 0
      %441 = vmatprep.subr.bf16.mxu0 0
      %442 = vmatpush1.bf16.msra.mxu0 0
      %443 = vmatprep.subr.bf16.mxu0 0
      %444 = vmatpush1.bf16.msra.mxu0 0
      %445 = vmatprep.subr.bf16.mxu0 0
      %446 = vmatpush1.bf16.msra.mxu0 0
      %447 = vmatprep.subr.bf16.mxu0 0
      %448 = vmatpush1.bf16.msra.mxu0 0
      %449 = vmatprep.subr.bf16.mxu0 0
      %450 = vmatpush1.bf16.msra.mxu0 0
      %451 = vmatprep.subr.bf16.mxu0 0
      %452 = vmatpush1.bf16.msra.mxu0 0
      %453 = vmatprep.subr.bf16.mxu0 0
      %454 = vmatpush1.bf16.msra.mxu0 0
      %455 = vmatprep.subr.bf16.mxu0 0
      %456 = vmatpush1.bf16.msra.mxu0 0
      %457 = vmatprep.subr.bf16.mxu0 0
      %458 = vmatpush1.bf16.msra.mxu0 0
      %459 = vmatprep.subr.bf16.mxu0 0
      %460 = vmatpush1.bf16.msra.mxu0 0
      %461 = vmatprep.mubr.bf16.mxu0 0
      %462 = vmatmul.mubr.bf16.gmra.mrb[0].mxu0 %v423
      %v463 = vpop.f32.mrb[0].mxu0
      %v464 = vadd.f32 0.0, %v463
      %v465 = vpop.f32.mrb[0].mxu0
      %v466 = vpop.f32.mrb[0].mxu0
      %v467 = vadd.f32 0.0, %v466
      %v468 = vpop.f32.mrb[0].mxu0
      %469 = vdwg.mxu0
      %v470 = vpack.c.bf16 %v467, %v464
      %v472 = vunpack.c.l.b16 %v470
      %v473 = vunpack.c.h.b16 %v470
      %v474 = vpack.c.b16 %v472, %v472
      %v475 = vpack.c.b16 %v473, %v473
      %vm478 = vcmask 60416
      %479 = vst.msk [vmem:[%s315] sm:$0xf] %vm478, %v474
      %vm480 = vcmask 57344
      %481 = vst.msk [vmem:[%s315 + $0x4] sm:$0x1] %vm480, %v475
      %p482 = scmp.lt.s32.totalorder %s19, 1
      %s483 = scalar_select %p482, %s19, 1
      %p484 = scmp.lt.s32.totalorder %s20, 3
      %s485 = scalar_select %p484, %s20, 3
      %s486 = smul.addr %s485, 2
      %s487 = smul.addr %s483, 8
      %s488 = sadd.s32 %s486, %s487
      %s489 = smul.addr %s488, 4
      %s490 = scalar_lea.vmem %s4, %s489
      // Predicated region
      $region37: #{transformer_forward.27} parent=35 // pred_check
        %p491 = pneg %p157
      $region38: #{transformer_forward.27} parent=35 // pred_check_branch
        %493 = sbr.rel (%p491) target = $region40
      $region39: #{transformer_forward.27} parent=35 // pred_region
        _
      $region40: #{transformer_forward.27} parent=35 // pred_fallthru
        _
    $region36: #{transformer_forward.27} parent=5 // pred_fallthru
      _
    %p494 = scmp.le.s32.totalorder 2, %s10
    // Predicated region
    $region41: #{transformer_forward.27} parent=5 // pred_check
      %p495 = pneg %p494
    $region42: #{transformer_forward.27} parent=5 // pred_check_branch
      %497 = sbr.rel (%p495) target = $region44
    $region43: #{transformer_forward.27} parent=5 // pred_region
      %s498 = ssub.s32 %s10, 2
      // Predicated region
      $region45: #{transformer_forward.27} parent=43 // pred_check
        %p499 = pneg %p163
      $region46: #{transformer_forward.27} parent=43 // pred_check_branch
        %501 = sbr.rel (%p499) target = $region48
      $region47: #{transformer_forward.27} parent=43 // pred_region
        %p502 = scmp.lt.s32.totalorder %s21, 1
        %s503 = scalar_select %p502, %s21, 1
        %p504 = scmp.lt.s32.totalorder %s22, 3
        %s505 = scalar_select %p504, %s22, 3
        %s506 = smul.addr %s505, 2
        %s507 = smul.addr %s503, 8
        %s508 = sadd.s32 %s506, %s507
        %s509 = smul.addr %s508, 4
        %s510 = scalar_lea.vmem %s4, %s509
      $region48: #{transformer_forward.27} parent=43 // pred_fallthru
        _
    $region44: #{transformer_forward.27} parent=5 // pred_fallthru
      _
  $region6: #{transformer_forward.27} parent=0 // loop_footer
    %s14 = sadd.s32 1, %s10
  $region7: #{transformer_forward.27} parent=0 // loop_footer_branch
    %9 = sbr.rel target = $region3
  $region8: #{transformer_forward.27} parent=0 // loop_exit
    _

// kernel: transformer_forward.28
$region0: #{transformer_forward.28}
  #allocation0 [shape = 'u32[]', space=smem, size = 0x4, offset = 0x4, fixed_abs, tag = 'smem constant byte address 0x4 - core index']
  #allocation1 [shape = 'u32[144,128]{1,0:T(1,128)}', space=vmem, size = 0x12000, scoped, tag = 'internal scratch']
  #allocation2 [shape = 'f32[20,32]{1,0:T(8,128)}', space=vmem, size = 0x3000, scoped, tag = 'scratch operand']
  %s0 = inlined_call_operand.vmem [shape: bf16[20,32], index: 0, kind: input, shape index: {}]
  %s1 = inlined_call_operand.vmem [shape: bf16[32,32], index: 1, kind: input, shape index: {}]
  %s2 = inlined_call_operand.vmem [shape: f32[1,32], index: 2, kind: input, shape index: {}]
  %s3 = inlined_call_operand.vmem [shape: bf16[20,32], index: 3, kind: input, shape index: {}]
  %s4 = inlined_call_operand.vmem [shape: f32[1,32], index: 4, kind: input, shape index: {}]
  %s5 = inlined_call_operand.vmem [shape: f32[1,32], index: 5, kind: input, shape index: {}]
  %s6 = inlined_call_operand.vmem [shape: bf16[20,32], index: 6, kind: output, shape index: {}]
  %s7 = sld [smem:[#allocation0]]
  $region42: #{transformer_forward.28} parent=0
    _
  %s9 = ssub.s32 1, %s7
  %s10 = scalar_select 0, %s9, %s7
  // Predicated region
  $region2: #{transformer_forward.28} parent=0 // pred_check
    _
  $region3: #{transformer_forward.28} parent=0 // pred_check_branch
    %12 = sbr.rel (0) target = $region5
  $region4: #{transformer_forward.28} parent=0 // pred_region
    _
  $region5: #{transformer_forward.28} parent=0 // pred_fallthru
    _
  // Predicated region
  $region6: #{transformer_forward.28} parent=0 // pred_check
    _
  $region7: #{transformer_forward.28} parent=0 // pred_check_branch
    %14 = sbr.rel (0) target = $region9
  $region8: #{transformer_forward.28} parent=0 // pred_region
    _
  $region9: #{transformer_forward.28} parent=0 // pred_fallthru
    _
  // Predicated region
  $region10: #{transformer_forward.28} parent=0 // pred_check
    _
  $region11: #{transformer_forward.28} parent=0 // pred_check_branch
    %16 = sbr.rel (0) target = $region13
  $region12: #{transformer_forward.28} parent=0 // pred_region
    _
  $region13: #{transformer_forward.28} parent=0 // pred_fallthru
    _
  // Predicated region
  $region14: #{transformer_forward.28} parent=0 // pred_check
    _
  $region15: #{transformer_forward.28} parent=0 // pred_check_branch
    %18 = sbr.rel (0) target = $region17
  $region16: #{transformer_forward.28} parent=0 // pred_region
    _
  $region17: #{transformer_forward.28} parent=0 // pred_fallthru
    _
  // Predicated region
  $region18: #{transformer_forward.28} parent=0 // pred_check
    _
  $region19: #{transformer_forward.28} parent=0 // pred_check_branch
    %20 = sbr.rel (0) target = $region21
  $region20: #{transformer_forward.28} parent=0 // pred_region
    _
  $region21: #{transformer_forward.28} parent=0 // pred_fallthru
    _
  // Predicated region
  $region22: #{transformer_forward.28} parent=0 // pred_check
    _
  $region23: #{transformer_forward.28} parent=0 // pred_check_branch
    %22 = sbr.rel (0) target = $region25
  $region24: #{transformer_forward.28} parent=0 // pred_region
    _
  $region25: #{transformer_forward.28} parent=0 // pred_fallthru
    _
  %p24 = scmp.eq.s32.totalorder 0, 0
  // Predicated region
  $region26: #{transformer_forward.28} parent=0 // pred_check
    %p25 = pneg %p24
  $region27: #{transformer_forward.28} parent=0 // pred_check_branch
    %27 = sbr.rel (%p25) target = $region29
  $region28: #{transformer_forward.28} parent=0 // pred_region
    %vm28 = vcmask 261120
    %29 = vst.msk [vmem:[#allocation2] sm:$0xff] %vm28, 0.0
    %30 = vst.msk [vmem:[#allocation2 + $0x8] sm:$0xff] %vm28, 0.0
    %vm31 = vcmask 257024
    %32 = vst.msk [vmem:[#allocation2 + $0x10] sm:$0xf] %vm31, 0.0
  $region29: #{transformer_forward.28} parent=0 // pred_fallthru
    _
  %v33 = vld [vmem:[#allocation2] sm:$0xff]
  %v34 = vld [vmem:[#allocation2 + $0x8] sm:$0xff]
  %v35 = vld [vmem:[#allocation2 + $0x10] sm:$0xf]
  %v36 = vld [vmem:[%s0] sm:$0xf]
  %v37 = vld [vmem:[%s0 + $0x4] sm:$0xf]
  %v38 = vld [vmem:[%s0 + $0x8] sm:$0x3]
  %v39 = vld [vmem:[%s1] sm:$0xf]
  %v40 = vld [vmem:[%s1 + $0x4] sm:$0xf]
  %v41 = vld [vmem:[%s1 + $0x8] sm:$0xf]
  %v42 = vld [vmem:[%s1 + $0xc] sm:$0xf]
  %v46 = vunpack.c.l.b16 %v36
  %v47 = vunpack.c.l.b16 %v37
  %v48 = vunpack.c.l.b16 %v38
  %v49 = vpack.c.b16 %v47, %v46
  %v50 = vpack.c.b16 %v48, %v48
  %v55 = vunpack.c.l.b16 %v39
  %v56 = vunpack.c.l.b16 %v40
  %v57 = vunpack.c.l.b16 %v41
  %v58 = vunpack.c.l.b16 %v42
  %v59 = vpack.c.b16 %v56, %v55
  %v60 = vpack.c.b16 %v58, %v57
  %vm63 = vcmask 261120
  %v65 = vsel %vm63, %v49, 0
  %v68 = vsel %vm63, %v50, 0
  %70 = vmatprep.subr.bf16.mxu0 0
  %71 = vmatpush1.bf16.msra.mxu0 %v59
  %72 = vmatprep.subr.bf16.mxu0 0
  %73 = vmatpush1.bf16.msra.mxu0 %v60
  %74 = vmatprep.subr.bf16.mxu0 0
  %75 = vmatpush1.bf16.msra.mxu0 0
  %76 = vmatprep.subr.bf16.mxu0 0
  %77 = vmatpush1.bf16.msra.mxu0 0
  %78 = vmatprep.subr.bf16.mxu0 0
  %79 = vmatpush1.bf16.msra.mxu0 0
  %80 = vmatprep.subr.bf16.mxu0 0
  %81 = vmatpush1.bf16.msra.mxu0 0
  %82 = vmatprep.subr.bf16.mxu0 0
  %83 = vmatpush1.bf16.msra.mxu0 0
  %84 = vmatprep.subr.bf16.mxu0 0
  %85 = vmatpush1.bf16.msra.mxu0 0
  %86 = vmatprep.subr.bf16.mxu0 0
  %87 = vmatpush1.bf16.msra.mxu0 0
  %88 = vmatprep.subr.bf16.mxu0 0
  %89 = vmatpush1.bf16.msra.mxu0 0
  %90 = vmatprep.subr.bf16.mxu0 0
  %91 = vmatpush1.bf16.msra.mxu0 0
  %92 = vmatprep.subr.bf16.mxu0 0
  %93 = vmatpush1.bf16.msra.mxu0 0
  %94 = vmatprep.subr.bf16.mxu0 0
  %95 = vmatpush1.bf16.msra.mxu0 0
  %96 = vmatprep.subr.bf16.mxu0 0
  %97 = vmatpush1.bf16.msra.mxu0 0
  %98 = vmatprep.subr.bf16.mxu0 0
  %99 = vmatpush1.bf16.msra.mxu0 0
  %100 = vmatprep.subr.bf16.mxu0 0
  %101 = vmatpush1.bf16.msra.mxu0 0
  %102 = vmatprep.mubr.bf16.mxu0 0
  %103 = vmatmul.mubr.bf16.gmra.mrb[0].mxu0 %v65
  %v104 = vpop.f32.mrb[0].mxu0
  %v105 = vadd.f32 0.0, %v104
  %v106 = vpop.f32.mrb[0].mxu0
  %v107 = vpop.f32.mrb[0].mxu0
  %v108 = vadd.f32 0.0, %v107
  %v109 = vpop.f32.mrb[0].mxu0
  %110 = vmatprep.mubr.bf16.mxu0 0
  %111 = vmatmul.mubr.bf16.gmra.mrb[0].mxu0 %v68
  %v112 = vpop.f32.mrb[0].mxu0
  %v113 = vadd.f32 0.0, %v112
  %v114 = vpop.f32.mrb[0].mxu0
  %v115 = vpop.f32.mrb[0].mxu0
  %v116 = vpop.f32.mrb[0].mxu0
  %117 = vdwg.mxu0
  %v118 = vadd.f32 %v33, %v105
  %v119 = vadd.f32 %v34, %v108
  %v120 = vadd.f32 %v35, %v113
  %121 = vst.msk [vmem:[#allocation2] sm:$0xff] %vm63, %v118
  %122 = vst.msk [vmem:[#allocation2 + $0x8] sm:$0xff] %vm63, %v119
  %vm123 = vcmask 257024
  %124 = vst.msk [vmem:[#allocation2 + $0x10] sm:$0xf] %vm123, %v120
  // Predicated region
  $region30: #{transformer_forward.28} parent=0 // pred_check
    %p125 = pneg %p24
  $region31: #{transformer_forward.28} parent=0 // pred_check_branch
    %127 = sbr.rel (%p125) target = $region33
  $region32: #{transformer_forward.28} parent=0 // pred_region
    %v128 = vld [vmem:[#allocation2] sm:$0xff]
    %v129 = vld [vmem:[#allocation2 + $0x8] sm:$0xff]
    %v130 = vld [vmem:[#allocation2 + $0x10] sm:$0xf]
    %v131 = vld [vmem:[%s2] sm:$0x1]
    %v133 = vlaneseq
    %v134 = vshrl.u32 %v133, 7
    %v135 = vsub.s32 0, %v134
    %v136 = vrot.slane %v131, %v135
    %v138 = vadd.f32 %v128, %v136
    %v139 = vadd.f32 %v129, %v136
    %v140 = vadd.f32 %v130, %v136
    %v141 = vld [vmem:[%s3] sm:$0xf]
    %v142 = vld [vmem:[%s3 + $0x4] sm:$0xf]
    %v143 = vld [vmem:[%s3 + $0x8] sm:$0x3]
    %v144 = vunpack.c.l.bf16 %v141
    %v145 = vunpack.c.l.bf16 %v142
    %v146 = vunpack.c.l.bf16 %v143
    %v147 = vadd.f32 %v138, %v144
    %v148 = vadd.f32 %v139, %v145
    %v149 = vadd.f32 %v140, %v146
    %v150 = vsel %vm63, %v147, 0.0
    %151 = vadd.xlane.f32.xlu0 %v150
    %v152 = vpop.xlane.xlu0 %151
    %v153 = vsel %vm63, %v148, 0.0
    %154 = vadd.xlane.f32.xlu0 %v153
    %v155 = vpop.xlane.xlu0 %154
    %v156 = vsel %vm123, %v149, 0.0
    %157 = vadd.xlane.f32.xlu0 %v156
    %v158 = vpop.xlane.xlu0 %157
    %v159 = vrcp.pop 32.0
    %v160 = vmul.f32 %v152, %v159
    %v161 = vmul.f32 %v155, %v159
    %v162 = vmul.f32 %v158, %v159
    %v163 = vsub.f32 %v147, %v160
    %v164 = vsub.f32 %v148, %v161
    %v165 = vsub.f32 %v149, %v162
    %v166 = vmul.f32 %v163, %v163
    %v167 = vmul.f32 %v164, %v164
    %v168 = vmul.f32 %v165, %v165
    %v169 = vsel %vm63, %v166, 0.0
    %170 = vadd.xlane.f32.xlu0 %v169
    %v171 = vpop.xlane.xlu0 %170
    %v172 = vsel %vm63, %v167, 0.0
    %173 = vadd.xlane.f32.xlu0 %v172
    %v174 = vpop.xlane.xlu0 %173
    %v175 = vsel %vm123, %v168, 0.0
    %176 = vadd.xlane.f32.xlu0 %v175
    %v177 = vpop.xlane.xlu0 %176
    %v178 = vmul.f32 %v171, %v159
    %v179 = vmul.f32 %v174, %v159
    %v180 = vmul.f32 %v177, %v159
    %v181 = vadd.f32 %v178, 1e-05
    %v182 = vadd.f32 %v179, 1e-05
    %v183 = vadd.f32 %v180, 1e-05
    %v184 = vrsqrt.pop %v181
    %v185 = vrsqrt.pop %v182
    %v186 = vrsqrt.pop %v183
    %v187 = vmul.f32 %v163, %v184
    %v188 = vmul.f32 %v164, %v185
    %v189 = vmul.f32 %v165, %v186
    %v190 = vld [vmem:[%s4] sm:$0x1]
    %v192 = vlaneseq
    %v193 = vshrl.u32 %v192, 7
    %v194 = vsub.s32 0, %v193
    %v195 = vrot.slane %v190, %v194
    %v197 = vmul.f32 %v187, %v195
    %v198 = vmul.f32 %v188, %v195
    %v199 = vmul.f32 %v189, %v195
    %v200 = vld [vmem:[%s5] sm:$0x1]
    %v202 = vlaneseq
    %v203 = vshrl.u32 %v202, 7
    %v204 = vsub.s32 0, %v203
    %v205 = vrot.slane %v200, %v204
    %v207 = vadd.f32 %v197, %v205
    %v208 = vadd.f32 %v198, %v205
    %v209 = vadd.f32 %v199, %v205
    %v210 = vpack.c.bf16 %v208, %v207
    %v211 = vpack.c.bf16 %v209, %v209
    %v214 = vunpack.c.l.b16 %v210
    %v215 = vunpack.c.h.b16 %v210
    %v216 = vunpack.c.l.b16 %v211
    %v217 = vpack.c.b16 %v214, %v214
    %v218 = vpack.c.b16 %v215, %v215
    %v219 = vpack.c.b16 %v216, %v216
    %223 = vst.msk [vmem:[%s6] sm:$0xf] %vm123, %v217
    %224 = vst.msk [vmem:[%s6 + $0x4] sm:$0xf] %vm123, %v218
    %vm225 = vcmask 254976
    %226 = vst.msk [vmem:[%s6 + $0x8] sm:$0x3] %vm225, %v219
  $region33: #{transformer_forward.28} parent=0 // pred_fallthru
    _
  // Predicated region
  $region34: #{transformer_forward.28} parent=0 // pred_check
    _
  $region35: #{transformer_forward.28} parent=0 // pred_check_branch
    %228 = sbr.rel (0) target = $region37
  $region36: #{transformer_forward.28} parent=0 // pred_region
    _
  $region37: #{transformer_forward.28} parent=0 // pred_fallthru
    _
  // Predicated region
  $region38: #{transformer_forward.28} parent=0 // pred_check
    _
  $region39: #{transformer_forward.28} parent=0 // pred_check_branch
    %230 = sbr.rel (0) target = $region41
  $region40: #{transformer_forward.28} parent=0 // pred_region
    _
  $region41: #{transformer_forward.28} parent=0 // pred_fallthru
    _

// kernel: transformer_forward.29
$region0: #{transformer_forward.29}
  #allocation0 [shape = 'u32[]', space=smem, size = 0x4, offset = 0x4, fixed_abs, tag = 'smem constant byte address 0x4 - core index']
  #allocation1 [shape = 'u32[144,128]{1,0:T(1,128)}', space=vmem, size = 0x12000, scoped, tag = 'internal scratch']
  %s0 = inlined_call_operand.vmem [shape: bf16[20,32], index: 0, kind: input, shape index: {}]
  %s1 = inlined_call_operand.vmem [shape: bf16[32,64], index: 1, kind: input, shape index: {}]
  %s2 = inlined_call_operand.vmem [shape: f32[1,64], index: 2, kind: input, shape index: {}]
  %s3 = inlined_call_operand.vmem [shape: bf16[64,32], index: 3, kind: input, shape index: {}]
  %s4 = inlined_call_operand.vmem [shape: f32[1,32], index: 4, kind: input, shape index: {}]
  %s5 = inlined_call_operand.vmem [shape: f32[1,32], index: 5, kind: input, shape index: {}]
  %s6 = inlined_call_operand.vmem [shape: f32[1,32], index: 6, kind: input, shape index: {}]
  %s7 = inlined_call_operand.vmem [shape: bf16[20,32], index: 7, kind: output, shape index: {}]
  %s8 = sld [smem:[#allocation0]]
  $region38: #{transformer_forward.29} parent=0
    _
  %s10 = ssub.s32 1, %s8
  %s11 = scalar_select 0, %s10, %s8
  // Predicated region
  $region2: #{transformer_forward.29} parent=0 // pred_check
    _
  $region3: #{transformer_forward.29} parent=0 // pred_check_branch
    %13 = sbr.rel (0) target = $region5
  $region4: #{transformer_forward.29} parent=0 // pred_region
    _
  $region5: #{transformer_forward.29} parent=0 // pred_fallthru
    _
  // Predicated region
  $region6: #{transformer_forward.29} parent=0 // pred_check
    _
  $region7: #{transformer_forward.29} parent=0 // pred_check_branch
    %15 = sbr.rel (0) target = $region9
  $region8: #{transformer_forward.29} parent=0 // pred_region
    _
  $region9: #{transformer_forward.29} parent=0 // pred_fallthru
    _
  // Predicated region
  $region10: #{transformer_forward.29} parent=0 // pred_check
    _
  $region11: #{transformer_forward.29} parent=0 // pred_check_branch
    %17 = sbr.rel (0) target = $region13
  $region12: #{transformer_forward.29} parent=0 // pred_region
    _
  $region13: #{transformer_forward.29} parent=0 // pred_fallthru
    _
  // Predicated region
  $region14: #{transformer_forward.29} parent=0 // pred_check
    _
  $region15: #{transformer_forward.29} parent=0 // pred_check_branch
    %19 = sbr.rel (0) target = $region17
  $region16: #{transformer_forward.29} parent=0 // pred_region
    _
  $region17: #{transformer_forward.29} parent=0 // pred_fallthru
    _
  // Predicated region
  $region18: #{transformer_forward.29} parent=0 // pred_check
    _
  $region19: #{transformer_forward.29} parent=0 // pred_check_branch
    %21 = sbr.rel (0) target = $region21
  $region20: #{transformer_forward.29} parent=0 // pred_region
    _
  $region21: #{transformer_forward.29} parent=0 // pred_fallthru
    _
  // Predicated region
  $region22: #{transformer_forward.29} parent=0 // pred_check
    _
  $region23: #{transformer_forward.29} parent=0 // pred_check_branch
    %23 = sbr.rel (0) target = $region25
  $region24: #{transformer_forward.29} parent=0 // pred_region
    _
  $region25: #{transformer_forward.29} parent=0 // pred_fallthru
    _
  // Predicated region
  $region26: #{transformer_forward.29} parent=0 // pred_check
    _
  $region27: #{transformer_forward.29} parent=0 // pred_check_branch
    %25 = sbr.rel (0) target = $region29
  $region28: #{transformer_forward.29} parent=0 // pred_region
    _
  $region29: #{transformer_forward.29} parent=0 // pred_fallthru
    _
  %v27 = vld [vmem:[%s0] sm:$0xf]
  %v28 = vld [vmem:[%s0 + $0x4] sm:$0xf]
  %v29 = vld [vmem:[%s0 + $0x8] sm:$0x3]
  %v30 = vld [vmem:[%s1] sm:$0xf]
  %v31 = vld [vmem:[%s1 + $0x4] sm:$0xf]
  %v32 = vld [vmem:[%s1 + $0x8] sm:$0xf]
  %v33 = vld [vmem:[%s1 + $0xc] sm:$0xf]
  %v34 = vld [vmem:[%s2] sm:$0x1]
  %v36 = vlaneseq
  %v37 = vshrl.u32 %v36, 7
  %v38 = vsub.s32 0, %v37
  %v39 = vrot.slane %v34, %v38
  %v44 = vunpack.c.l.b16 %v27
  %v45 = vunpack.c.l.b16 %v28
  %v46 = vunpack.c.l.b16 %v29
  %v47 = vpack.c.b16 %v45, %v44
  %v48 = vpack.c.b16 %v46, %v46
  %v53 = vunpack.c.l.b16 %v30
  %v54 = vunpack.c.l.b16 %v31
  %v55 = vunpack.c.l.b16 %v32
  %v56 = vunpack.c.l.b16 %v33
  %v57 = vpack.c.b16 %v54, %v53
  %v58 = vpack.c.b16 %v56, %v55
  %vm61 = vcmask 261120
  %v63 = vsel %vm61, %v47, 0
  %v66 = vsel %vm61, %v48, 0
  %68 = vmatprep.subr.bf16.mxu0 0
  %69 = vmatpush1.bf16.msra.mxu0 %v57
  %70 = vmatprep.subr.bf16.mxu0 0
  %71 = vmatpush1.bf16.msra.mxu0 %v58
  %72 = vmatprep.subr.bf16.mxu0 0
  %73 = vmatpush1.bf16.msra.mxu0 0
  %74 = vmatprep.subr.bf16.mxu0 0
  %75 = vmatpush1.bf16.msra.mxu0 0
  %76 = vmatprep.subr.bf16.mxu0 0
  %77 = vmatpush1.bf16.msra.mxu0 0
  %78 = vmatprep.subr.bf16.mxu0 0
  %79 = vmatpush1.bf16.msra.mxu0 0
  %80 = vmatprep.subr.bf16.mxu0 0
  %81 = vmatpush1.bf16.msra.mxu0 0
  %82 = vmatprep.subr.bf16.mxu0 0
  %83 = vmatpush1.bf16.msra.mxu0 0
  %84 = vmatprep.subr.bf16.mxu0 0
  %85 = vmatpush1.bf16.msra.mxu0 0
  %86 = vmatprep.subr.bf16.mxu0 0
  %87 = vmatpush1.bf16.msra.mxu0 0
  %88 = vmatprep.subr.bf16.mxu0 0
  %89 = vmatpush1.bf16.msra.mxu0 0
  %90 = vmatprep.subr.bf16.mxu0 0
  %91 = vmatpush1.bf16.msra.mxu0 0
  %92 = vmatprep.subr.bf16.mxu0 0
  %93 = vmatpush1.bf16.msra.mxu0 0
  %94 = vmatprep.subr.bf16.mxu0 0
  %95 = vmatpush1.bf16.msra.mxu0 0
  %96 = vmatprep.subr.bf16.mxu0 0
  %97 = vmatpush1.bf16.msra.mxu0 0
  %98 = vmatprep.subr.bf16.mxu0 0
  %99 = vmatpush1.bf16.msra.mxu0 0
  %100 = vmatprep.mubr.bf16.mxu0 0
  %101 = vmatmul.mubr.bf16.gmra.mrb[0].mxu0 %v63
  %v102 = vpop.f32.mrb[0].mxu0
  %v103 = vadd.f32 %v39, %v102
  %v104 = vpop.f32.mrb[0].mxu0
  %v105 = vpop.f32.mrb[0].mxu0
  %v106 = vadd.f32 %v39, %v105
  %v107 = vpop.f32.mrb[0].mxu0
  %108 = vmatprep.mubr.bf16.mxu0 0
  %109 = vmatmul.mubr.bf16.gmra.mrb[0].mxu0 %v66
  %v110 = vpop.f32.mrb[0].mxu0
  %v111 = vadd.f32 %v39, %v110
  %v112 = vpop.f32.mrb[0].mxu0
  %v113 = vpop.f32.mrb[0].mxu0
  %v114 = vpop.f32.mrb[0].mxu0
  %115 = vdwg.mxu0
  %v116 = vmul.f32 %v103, 0.5
  %v117 = vmul.f32 %v106, 0.5
  %v118 = vmul.f32 %v111, 0.5
  %v119 = vmul.f32 %v103, 0.70710677
  %v120 = vmul.f32 %v106, 0.70710677
  %v121 = vmul.f32 %v111, 0.70710677
  %v122 = verf.f32.pop %v119
  %v123 = verf.f32.pop %v120
  %v124 = verf.f32.pop %v121
  %v125 = vadd.f32 %v122, 1.0
  %v126 = vadd.f32 %v123, 1.0
  %v127 = vadd.f32 %v124, 1.0
  %v128 = vmul.f32 %v116, %v125
  %v129 = vmul.f32 %v117, %v126
  %v130 = vmul.f32 %v118, %v127
  %v131 = vpack.c.bf16 %v129, %v128
  %v132 = vpack.c.bf16 %v130, %v130
  %v133 = vld [vmem:[%s3] sm:$0xf]
  %v134 = vld [vmem:[%s3 + $0x4] sm:$0xf]
  %v135 = vld [vmem:[%s3 + $0x8] sm:$0xf]
  %v136 = vld [vmem:[%s3 + $0xc] sm:$0xf]
  %v137 = vld [vmem:[%s3 + $0x10] sm:$0xf]
  %v138 = vld [vmem:[%s3 + $0x14] sm:$0xf]
  %v139 = vld [vmem:[%s3 + $0x18] sm:$0xf]
  %v140 = vld [vmem:[%s3 + $0x1c] sm:$0xf]
  %v141 = vld [vmem:[%s4] sm:$0x1]
  %v143 = vlaneseq
  %v144 = vshrl.u32 %v143, 7
  %v145 = vsub.s32 0, %v144
  %v146 = vrot.slane %v141, %v145
  %v156 = vunpack.c.l.b16 %v133
  %v157 = vunpack.c.l.b16 %v134
  %v158 = vunpack.c.l.b16 %v135
  %v159 = vunpack.c.l.b16 %v136
  %v160 = vunpack.c.l.b16 %v137
  %v161 = vunpack.c.l.b16 %v138
  %v162 = vunpack.c.l.b16 %v139
  %v163 = vunpack.c.l.b16 %v140
  %v164 = vpack.c.b16 %v157, %v156
  %v165 = vpack.c.b16 %v159, %v158
  %v166 = vpack.c.b16 %v161, %v160
  %v167 = vpack.c.b16 %v163, %v162
  %vm172 = vcmask 523264
  %v174 = vsel %vm172, %v131, 0
  %v177 = vsel %vm172, %v132, 0
  %179 = vmatprep.subr.bf16.mxu0 0
  %180 = vmatpush1.bf16.msra.mxu0 %v164
  %181 = vmatprep.subr.bf16.mxu0 0
  %182 = vmatpush1.bf16.msra.mxu0 %v165
  %183 = vmatprep.subr.bf16.mxu0 0
  %184 = vmatpush1.bf16.msra.mxu0 %v166
  %185 = vmatprep.subr.bf16.mxu0 0
  %186 = vmatpush1.bf16.msra.mxu0 %v167
  %187 = vmatprep.subr.bf16.mxu0 0
  %188 = vmatpush1.bf16.msra.mxu0 0
  %189 = vmatprep.subr.bf16.mxu0 0
  %190 = vmatpush1.bf16.msra.mxu0 0
  %191 = vmatprep.subr.bf16.mxu0 0
  %192 = vmatpush1.bf16.msra.mxu0 0
  %193 = vmatprep.subr.bf16.mxu0 0
  %194 = vmatpush1.bf16.msra.mxu0 0
  %195 = vmatprep.subr.bf16.mxu0 0
  %196 = vmatpush1.bf16.msra.mxu0 0
  %197 = vmatprep.subr.bf16.mxu0 0
  %198 = vmatpush1.bf16.msra.mxu0 0
  %199 = vmatprep.subr.bf16.mxu0 0
  %200 = vmatpush1.bf16.msra.mxu0 0
  %201 = vmatprep.subr.bf16.mxu0 0
  %202 = vmatpush1.bf16.msra.mxu0 0
  %203 = vmatprep.subr.bf16.mxu0 0
  %204 = vmatpush1.bf16.msra.mxu0 0
  %205 = vmatprep.subr.bf16.mxu0 0
  %206 = vmatpush1.bf16.msra.mxu0 0
  %207 = vmatprep.subr.bf16.mxu0 0
  %208 = vmatpush1.bf16.msra.mxu0 0
  %209 = vmatprep.subr.bf16.mxu0 0
  %210 = vmatpush1.bf16.msra.mxu0 0
  %211 = vmatprep.mubr.bf16.mxu0 0
  %212 = vmatmul.mubr.bf16.gmra.mrb[0].mxu0 %v174
  %v213 = vpop.f32.mrb[0].mxu0
  %v214 = vadd.f32 %v146, %v213
  %v215 = vpop.f32.mrb[0].mxu0
  %v216 = vpop.f32.mrb[0].mxu0
  %v217 = vadd.f32 %v146, %v216
  %v218 = vpop.f32.mrb[0].mxu0
  %219 = vmatprep.mubr.bf16.mxu0 0
  %220 = vmatmul.mubr.bf16.gmra.mrb[0].mxu0 %v177
  %v221 = vpop.f32.mrb[0].mxu0
  %v222 = vadd.f32 %v146, %v221
  %v223 = vpop.f32.mrb[0].mxu0
  %v224 = vpop.f32.mrb[0].mxu0
  %v225 = vpop.f32.mrb[0].mxu0
  %226 = vdwg.mxu0
  %v227 = vunpack.c.l.bf16 %v27
  %v228 = vunpack.c.l.bf16 %v28
  %v229 = vunpack.c.l.bf16 %v29
  %v230 = vadd.f32 %v214, %v227
  %v231 = vadd.f32 %v217, %v228
  %v232 = vadd.f32 %v222, %v229
  %v233 = vsel %vm61, %v230, 0.0
  %234 = vadd.xlane.f32.xlu0 %v233
  %v235 = vpop.xlane.xlu0 %234
  %v236 = vsel %vm61, %v231, 0.0
  %237 = vadd.xlane.f32.xlu0 %v236
  %v238 = vpop.xlane.xlu0 %237
  %vm239 = vcmask 257024
  %v240 = vsel %vm239, %v232, 0.0
  %241 = vadd.xlane.f32.xlu0 %v240
  %v242 = vpop.xlane.xlu0 %241
  %v243 = vrcp.pop 32.0
  %v244 = vmul.f32 %v235, %v243
  %v245 = vmul.f32 %v238, %v243
  %v246 = vmul.f32 %v242, %v243
  %v247 = vsub.f32 %v230, %v244
  %v248 = vsub.f32 %v231, %v245
  %v249 = vsub.f32 %v232, %v246
  %v250 = vmul.f32 %v247, %v247
  %v251 = vmul.f32 %v248, %v248
  %v252 = vmul.f32 %v249, %v249
  %v253 = vsel %vm61, %v250, 0.0
  %254 = vadd.xlane.f32.xlu0 %v253
  %v255 = vpop.xlane.xlu0 %254
  %v256 = vsel %vm61, %v251, 0.0
  %257 = vadd.xlane.f32.xlu0 %v256
  %v258 = vpop.xlane.xlu0 %257
  %v259 = vsel %vm239, %v252, 0.0
  %260 = vadd.xlane.f32.xlu0 %v259
  %v261 = vpop.xlane.xlu0 %260
  %v262 = vmul.f32 %v255, %v243
  %v263 = vmul.f32 %v258, %v243
  %v264 = vmul.f32 %v261, %v243
  %v265 = vadd.f32 %v262, 1e-05
  %v266 = vadd.f32 %v263, 1e-05
  %v267 = vadd.f32 %v264, 1e-05
  %v268 = vrsqrt.pop %v265
  %v269 = vrsqrt.pop %v266
  %v270 = vrsqrt.pop %v267
  %v271 = vmul.f32 %v247, %v268
  %v272 = vmul.f32 %v248, %v269
  %v273 = vmul.f32 %v249, %v270
  %v274 = vld [vmem:[%s5] sm:$0x1]
  %v276 = vlaneseq
  %v277 = vshrl.u32 %v276, 7
  %v278 = vsub.s32 0, %v277
  %v279 = vrot.slane %v274, %v278
  %v281 = vmul.f32 %v271, %v279
  %v282 = vmul.f32 %v272, %v279
  %v283 = vmul.f32 %v273, %v279
  %v284 = vld [vmem:[%s6] sm:$0x1]
  %v286 = vlaneseq
  %v287 = vshrl.u32 %v286, 7
  %v288 = vsub.s32 0, %v287
  %v289 = vrot.slane %v284, %v288
  %v291 = vadd.f32 %v281, %v289
  %v292 = vadd.f32 %v282, %v289
  %v293 = vadd.f32 %v283, %v289
  %v294 = vpack.c.bf16 %v292, %v291
  %v295 = vpack.c.bf16 %v293, %v293
  %v298 = vunpack.c.l.b16 %v294
  %v299 = vunpack.c.h.b16 %v294
  %v300 = vunpack.c.l.b16 %v295
  %v301 = vpack.c.b16 %v298, %v298
  %v302 = vpack.c.b16 %v299, %v299
  %v303 = vpack.c.b16 %v300, %v300
  %307 = vst.msk [vmem:[%s7] sm:$0xf] %vm239, %v301
  %308 = vst.msk [vmem:[%s7 + $0x4] sm:$0xf] %vm239, %v302
  %vm309 = vcmask 254976
  %310 = vst.msk [vmem:[%s7 + $0x8] sm:$0x3] %vm309, %v303
  // Predicated region
  $region30: #{transformer_forward.29} parent=0 // pred_check
    _
  $region31: #{transformer_forward.29} parent=0 // pred_check_branch
    %312 = sbr.rel (0) target = $region33
  $region32: #{transformer_forward.29} parent=0 // pred_region
    _
  $region33: #{transformer_forward.29} parent=0 // pred_fallthru
    _
  // Predicated region
  $region34: #{transformer_forward.29} parent=0 // pred_check
    _
  $region35: #{transformer_forward.29} parent=0 // pred_check_branch
    %314 = sbr.rel (0) target = $region37
  $region36: #{transformer_forward.29} parent=0 // pred_region
    _
  $region37: #{transformer_forward.29} parent=0 // pred_fallthru
    _

// kernel: transformer_forward.34
$region0: #{transformer_forward.34}
  #allocation0 [shape = 'u32[]', space=smem, size = 0x4, offset = 0x4, fixed_abs, tag = 'smem constant byte address 0x4 - core index']
  #allocation1 [shape = 'u32[144,128]{1,0:T(1,128)}', space=vmem, size = 0x12000, scoped, tag = 'internal scratch']
  #allocation2 [shape = 'f32[20,64]{1,0:T(8,128)}', space=vmem, size = 0x3000, scoped, tag = 'scratch operand']
  %s0 = inlined_call_operand.vmem [shape: bf16[20,32], index: 0, kind: input, shape index: {}]
  %s1 = inlined_call_operand.vmem [shape: bf16[32,64], index: 1, kind: input, shape index: {}]
  %s2 = inlined_call_operand.vmem [shape: f32[1,64], index: 2, kind: input, shape index: {}]
  %s3 = inlined_call_operand.vmem [shape: bf16[20,64], index: 3, kind: output, shape index: {}]
  %s4 = sld [smem:[#allocation0]]
  $region30: #{transformer_forward.34} parent=0
    _
  %s6 = ssub.s32 1, %s4
  %s7 = scalar_select 0, %s6, %s4
  // Predicated region
  $region2: #{transformer_forward.34} parent=0 // pred_check
    _
  $region3: #{transformer_forward.34} parent=0 // pred_check_branch
    %9 = sbr.rel (0) target = $region5
  $region4: #{transformer_forward.34} parent=0 // pred_region
    _
  $region5: #{transformer_forward.34} parent=0 // pred_fallthru
    _
  // Predicated region
  $region6: #{transformer_forward.34} parent=0 // pred_check
    _
  $region7: #{transformer_forward.34} parent=0 // pred_check_branch
    %11 = sbr.rel (0) target = $region9
  $region8: #{transformer_forward.34} parent=0 // pred_region
    _
  $region9: #{transformer_forward.34} parent=0 // pred_fallthru
    _
  // Predicated region
  $region10: #{transformer_forward.34} parent=0 // pred_check
    _
  $region11: #{transformer_forward.34} parent=0 // pred_check_branch
    %13 = sbr.rel (0) target = $region13
  $region12: #{transformer_forward.34} parent=0 // pred_region
    _
  $region13: #{transformer_forward.34} parent=0 // pred_fallthru
    _
  %p15 = scmp.eq.s32.totalorder 0, 0
  // Predicated region
  $region14: #{transformer_forward.34} parent=0 // pred_check
    %p16 = pneg %p15
  $region15: #{transformer_forward.34} parent=0 // pred_check_branch
    %18 = sbr.rel (%p16) target = $region17
  $region16: #{transformer_forward.34} parent=0 // pred_region
    %vm19 = vcmask 523264
    %20 = vst.msk [vmem:[#allocation2] sm:$0xff] %vm19, 0.0
    %21 = vst.msk [vmem:[#allocation2 + $0x8] sm:$0xff] %vm19, 0.0
    %vm22 = vcmask 519168
    %23 = vst.msk [vmem:[#allocation2 + $0x10] sm:$0xf] %vm22, 0.0
  $region17: #{transformer_forward.34} parent=0 // pred_fallthru
    _
  %v24 = vld [vmem:[#allocation2] sm:$0xff]
  %v25 = vld [vmem:[#allocation2 + $0x8] sm:$0xff]
  %v26 = vld [vmem:[#allocation2 + $0x10] sm:$0xf]
  %v27 = vld [vmem:[%s0] sm:$0xf]
  %v28 = vld [vmem:[%s0 + $0x4] sm:$0xf]
  %v29 = vld [vmem:[%s0 + $0x8] sm:$0x3]
  %v30 = vld [vmem:[%s1] sm:$0xf]
  %v31 = vld [vmem:[%s1 + $0x4] sm:$0xf]
  %v32 = vld [vmem:[%s1 + $0x8] sm:$0xf]
  %v33 = vld [vmem:[%s1 + $0xc] sm:$0xf]
  %v37 = vunpack.c.l.b16 %v27
  %v38 = vunpack.c.l.b16 %v28
  %v39 = vunpack.c.l.b16 %v29
  %v40 = vpack.c.b16 %v38, %v37
  %v41 = vpack.c.b16 %v39, %v39
  %v46 = vunpack.c.l.b16 %v30
  %v47 = vunpack.c.l.b16 %v31
  %v48 = vunpack.c.l.b16 %v32
  %v49 = vunpack.c.l.b16 %v33
  %v50 = vpack.c.b16 %v47, %v46
  %v51 = vpack.c.b16 %v49, %v48
  %vm54 = vcmask 261120
  %v56 = vsel %vm54, %v40, 0
  %v59 = vsel %vm54, %v41, 0
  %61 = vmatprep.subr.bf16.mxu0 0
  %62 = vmatpush1.bf16.msra.mxu0 %v50
  %63 = vmatprep.subr.bf16.mxu0 0
  %64 = vmatpush1.bf16.msra.mxu0 %v51
  %65 = vmatprep.subr.bf16.mxu0 0
  %66 = vmatpush1.bf16.msra.mxu0 0
  %67 = vmatprep.subr.bf16.mxu0 0
  %68 = vmatpush1.bf16.msra.mxu0 0
  %69 = vmatprep.subr.bf16.mxu0 0
  %70 = vmatpush1.bf16.msra.mxu0 0
  %71 = vmatprep.subr.bf16.mxu0 0
  %72 = vmatpush1.bf16.msra.mxu0 0
  %73 = vmatprep.subr.bf16.mxu0 0
  %74 = vmatpush1.bf16.msra.mxu0 0
  %75 = vmatprep.subr.bf16.mxu0 0
  %76 = vmatpush1.bf16.msra.mxu0 0
  %77 = vmatprep.subr.bf16.mxu0 0
  %78 = vmatpush1.bf16.msra.mxu0 0
  %79 = vmatprep.subr.bf16.mxu0 0
  %80 = vmatpush1.bf16.msra.mxu0 0
  %81 = vmatprep.subr.bf16.mxu0 0
  %82 = vmatpush1.bf16.msra.mxu0 0
  %83 = vmatprep.subr.bf16.mxu0 0
  %84 = vmatpush1.bf16.msra.mxu0 0
  %85 = vmatprep.subr.bf16.mxu0 0
  %86 = vmatpush1.bf16.msra.mxu0 0
  %87 = vmatprep.subr.bf16.mxu0 0
  %88 = vmatpush1.bf16.msra.mxu0 0
  %89 = vmatprep.subr.bf16.mxu0 0
  %90 = vmatpush1.bf16.msra.mxu0 0
  %91 = vmatprep.subr.bf16.mxu0 0
  %92 = vmatpush1.bf16.msra.mxu0 0
  %93 = vmatprep.mubr.bf16.mxu0 0
  %94 = vmatmul.mubr.bf16.gmra.mrb[0].mxu0 %v56
  %v95 = vpop.f32.mrb[0].mxu0
  %v96 = vadd.f32 0.0, %v95
  %v97 = vpop.f32.mrb[0].mxu0
  %v98 = vpop.f32.mrb[0].mxu0
  %v99 = vadd.f32 0.0, %v98
  %v100 = vpop.f32.mrb[0].mxu0
  %101 = vmatprep.mubr.bf16.mxu0 0
  %102 = vmatmul.mubr.bf16.gmra.mrb[0].mxu0 %v59
  %v103 = vpop.f32.mrb[0].mxu0
  %v104 = vadd.f32 0.0, %v103
  %v105 = vpop.f32.mrb[0].mxu0
  %v106 = vpop.f32.mrb[0].mxu0
  %v107 = vpop.f32.mrb[0].mxu0
  %108 = vdwg.mxu0
  %v109 = vadd.f32 %v24, %v96
  %v110 = vadd.f32 %v25, %v99
  %v111 = vadd.f32 %v26, %v104
  %vm112 = vcmask 523264
  %113 = vst.msk [vmem:[#allocation2] sm:$0xff] %vm112, %v109
  %114 = vst.msk [vmem:[#allocation2 + $0x8] sm:$0xff] %vm112, %v110
  %vm115 = vcmask 519168
  %116 = vst.msk [vmem:[#allocation2 + $0x10] sm:$0xf] %vm115, %v111
  // Predicated region
  $region18: #{transformer_forward.34} parent=0 // pred_check
    %p117 = pneg %p15
  $region19: #{transformer_forward.34} parent=0 // pred_check_branch
    %119 = sbr.rel (%p117) target = $region21
  $region20: #{transformer_forward.34} parent=0 // pred_region
    %v120 = vld [vmem:[#allocation2] sm:$0xff]
    %v121 = vld [vmem:[#allocation2 + $0x8] sm:$0xff]
    %v122 = vld [vmem:[#allocation2 + $0x10] sm:$0xf]
    %v123 = vld [vmem:[%s2] sm:$0x1]
    %v125 = vlaneseq
    %v126 = vshrl.u32 %v125, 7
    %v127 = vsub.s32 0, %v126
    %v128 = vrot.slane %v123, %v127
    %v130 = vadd.f32 %v120, %v128
    %v131 = vadd.f32 %v121, %v128
    %v132 = vadd.f32 %v122, %v128
    %v133 = vpack.c.bf16 %v131, %v130
    %v134 = vpack.c.bf16 %v132, %v132
    %v137 = vunpack.c.l.b16 %v133
    %v138 = vunpack.c.h.b16 %v133
    %v139 = vunpack.c.l.b16 %v134
    %v140 = vpack.c.b16 %v137, %v137
    %v141 = vpack.c.b16 %v138, %v138
    %v142 = vpack.c.b16 %v139, %v139
    %146 = vst.msk [vmem:[%s3] sm:$0xf] %vm115, %v140
    %147 = vst.msk [vmem:[%s3 + $0x4] sm:$0xf] %vm115, %v141
    %vm148 = vcmask 517120
    %149 = vst.msk [vmem:[%s3 + $0x8] sm:$0x3] %vm148, %v142
  $region21: #{transformer_forward.34} parent=0 // pred_fallthru
    _
  // Predicated region
  $region22: #{transformer_forward.34} parent=0 // pred_check
    _
  $region23: #{transformer_forward.34} parent=0 // pred_check_branch
    %151 = sbr.rel (0) target = $region25
  $region24: #{transformer_forward.34} parent=0 // pred_region
    _
  $region25: #{transformer_forward.34} parent=0 // pred_fallthru
    _
  // Predicated region
  $region26: #{transformer_forward.34} parent=0 // pred_check
    _
  $region27: #{transformer_forward.34} parent=0 // pred_check_branch
    %153 = sbr.rel (0) target = $region29
  $region28: #{transformer_forward.34} parent=0 // pred_region
    _
  $region29: #{transformer_forward.34} parent=0 // pred_fallthru
    _

// kernel: transformer_forward.35
$region0: #{transformer_forward.35}
  #allocation0 [shape = 'u32[]', space=smem, size = 0x4, offset = 0x4, fixed_abs, tag = 'smem constant byte address 0x4 - core index']
  #allocation1 [shape = 'u32[144,128]{1,0:T(1,128)}', space=vmem, size = 0x12000, scoped, tag = 'internal scratch']
  #allocation2 [shape = 'f32[16,96]{1,0:T(8,128)}', space=vmem, size = 0x2000, scoped, tag = 'scratch operand']
  %s0 = inlined_call_operand.vmem [shape: bf16[16,32], index: 0, kind: input, shape index: {}]
  %s1 = inlined_call_operand.vmem [shape: bf16[32,96], index: 1, kind: input, shape index: {}]
  %s2 = inlined_call_operand.vmem [shape: f32[1,96], index: 2, kind: input, shape index: {}]
  %s3 = inlined_call_operand.vmem [shape: bf16[16,96], index: 3, kind: output, shape index: {}]
  %s4 = sld [smem:[#allocation0]]
  $region30: #{transformer_forward.35} parent=0
    _
  %s6 = ssub.s32 1, %s4
  %s7 = scalar_select 0, %s6, %s4
  // Predicated region
  $region2: #{transformer_forward.35} parent=0 // pred_check
    _
  $region3: #{transformer_forward.35} parent=0 // pred_check_branch
    %9 = sbr.rel (0) target = $region5
  $region4: #{transformer_forward.35} parent=0 // pred_region
    _
  $region5: #{transformer_forward.35} parent=0 // pred_fallthru
    _
  // Predicated region
  $region6: #{transformer_forward.35} parent=0 // pred_check
    _
  $region7: #{transformer_forward.35} parent=0 // pred_check_branch
    %11 = sbr.rel (0) target = $region9
  $region8: #{transformer_forward.35} parent=0 // pred_region
    _
  $region9: #{transformer_forward.35} parent=0 // pred_fallthru
    _
  // Predicated region
  $region10: #{transformer_forward.35} parent=0 // pred_check
    _
  $region11: #{transformer_forward.35} parent=0 // pred_check_branch
    %13 = sbr.rel (0) target = $region13
  $region12: #{transformer_forward.35} parent=0 // pred_region
    _
  $region13: #{transformer_forward.35} parent=0 // pred_fallthru
    _
  %p15 = scmp.eq.s32.totalorder 0, 0
  // Predicated region
  $region14: #{transformer_forward.35} parent=0 // pred_check
    %p16 = pneg %p15
  $region15: #{transformer_forward.35} parent=0 // pred_check_branch
    %18 = sbr.rel (%p16) target = $region17
  $region16: #{transformer_forward.35} parent=0 // pred_region
    %vm19 = vcmask 785408
    %20 = vst.msk [vmem:[#allocation2] sm:$0xff] %vm19, 0.0
    %21 = vst.msk [vmem:[#allocation2 + $0x8] sm:$0xff] %vm19, 0.0
  $region17: #{transformer_forward.35} parent=0 // pred_fallthru
    _
  %v22 = vld [vmem:[#allocation2] sm:$0xff]
  %v23 = vld [vmem:[#allocation2 + $0x8] sm:$0xff]
  %v24 = vld [vmem:[%s0] sm:$0xf]
  %v25 = vld [vmem:[%s0 + $0x4] sm:$0xf]
  %v26 = vld [vmem:[%s1] sm:$0xf]
  %v27 = vld [vmem:[%s1 + $0x4] sm:$0xf]
  %v28 = vld [vmem:[%s1 + $0x8] sm:$0xf]
  %v29 = vld [vmem:[%s1 + $0xc] sm:$0xf]
  %v32 = vunpack.c.l.b16 %v24
  %v33 = vunpack.c.l.b16 %v25
  %v34 = vpack.c.b16 %v33, %v32
  %v39 = vunpack.c.l.b16 %v26
  %v40 = vunpack.c.l.b16 %v27
  %v41 = vunpack.c.l.b16 %v28
  %v42 = vunpack.c.l.b16 %v29
  %v43 = vpack.c.b16 %v40, %v39
  %v44 = vpack.c.b16 %v42, %v41
  %vm47 = vcmask 261120
  %v49 = vsel %vm47, %v34, 0
  %51 = vmatprep.subr.bf16.mxu0 0
  %52 = vmatpush1.bf16.msra.mxu0 %v43
  %53 = vmatprep.subr.bf16.mxu0 0
  %54 = vmatpush1.bf16.msra.mxu0 %v44
  %55 = vmatprep.subr.bf16.mxu0 0
  %56 = vmatpush1.bf16.msra.mxu0 0
  %57 = vmatprep.subr.bf16.mxu0 0
  %58 = vmatpush1.bf16.msra.mxu0 0
  %59 = vmatprep.subr.bf16.mxu0 0
  %60 = vmatpush1.bf16.msra.mxu0 0
  %61 = vmatprep.subr.bf16.mxu0 0
  %62 = vmatpush1.bf16.msra.mxu0 0
  %63 = vmatprep.subr.bf16.mxu0 0
  %64 = vmatpush1.bf16.msra.mxu0 0
  %65 = vmatprep.subr.bf16.mxu0 0
  %66 = vmatpush1.bf16.msra.mxu0 0
  %67 = vmatprep.subr.bf16.mxu0 0
  %68 = vmatpush1.bf16.msra.mxu0 0
  %69 = vmatprep.subr.bf16.mxu0 0
  %70 = vmatpush1.bf16.msra.mxu0 0
  %71 = vmatprep.subr.bf16.mxu0 0
  %72 = vmatpush1.bf16.msra.mxu0 0
  %73 = vmatprep.subr.bf16.mxu0 0
  %74 = vmatpush1.bf16.msra.mxu0 0
  %75 = vmatprep.subr.bf16.mxu0 0
  %76 = vmatpush1.bf16.msra.mxu0 0
  %77 = vmatprep.subr.bf16.mxu0 0
  %78 = vmatpush1.bf16.msra.mxu0 0
  %79 = vmatprep.subr.bf16.mxu0 0
  %80 = vmatpush1.bf16.msra.mxu0 0
  %81 = vmatprep.subr.bf16.mxu0 0
  %82 = vmatpush1.bf16.msra.mxu0 0
  %83 = vmatprep.mubr.bf16.mxu0 0
  %84 = vmatmul.mubr.bf16.gmra.mrb[0].mxu0 %v49
  %v85 = vpop.f32.mrb[0].mxu0
  %v86 = vadd.f32 0.0, %v85
  %v87 = vpop.f32.mrb[0].mxu0
  %v88 = vpop.f32.mrb[0].mxu0
  %v89 = vadd.f32 0.0, %v88
  %v90 = vpop.f32.mrb[0].mxu0
  %91 = vdwg.mxu0
  %v92 = vadd.f32 %v22, %v86
  %v93 = vadd.f32 %v23, %v89
  %vm94 = vcmask 785408
  %95 = vst.msk [vmem:[#allocation2] sm:$0xff] %vm94, %v92
  %96 = vst.msk [vmem:[#allocation2 + $0x8] sm:$0xff] %vm94, %v93
  // Predicated region
  $region18: #{transformer_forward.35} parent=0 // pred_check
    %p97 = pneg %p15
  $region19: #{transformer_forward.35} parent=0 // pred_check_branch
    %99 = sbr.rel (%p97) target = $region21
  $region20: #{transformer_forward.35} parent=0 // pred_region
    %v100 = vld [vmem:[#allocation2] sm:$0xff]
    %v101 = vld [vmem:[#allocation2 + $0x8] sm:$0xff]
    %v102 = vld [vmem:[%s2] sm:$0x1]
    %v104 = vlaneseq
    %v105 = vshrl.u32 %v104, 7
    %v106 = vsub.s32 0, %v105
    %v107 = vrot.slane %v102, %v106
    %v109 = vadd.f32 %v100, %v107
    %v110 = vadd.f32 %v101, %v107
    %v111 = vpack.c.bf16 %v110, %v109
    %v113 = vunpack.c.l.b16 %v111
    %v114 = vunpack.c.h.b16 %v111
    %v115 = vpack.c.b16 %v113, %v113
    %v116 = vpack.c.b16 %v114, %v114
    %vm119 = vcmask 781312
    %120 = vst.msk [vmem:[%s3] sm:$0xf] %vm119, %v115
    %121 = vst.msk [vmem:[%s3 + $0x4] sm:$0xf] %vm119, %v116
  $region21: #{transformer_forward.35} parent=0 // pred_fallthru
    _
  // Predicated region
  $region22: #{transformer_forward.35} parent=0 // pred_check
    _
  $region23: #{transformer_forward.35} parent=0 // pred_check_branch
    %123 = sbr.rel (0) target = $region25
  $region24: #{transformer_forward.35} parent=0 // pred_region
    _
  $region25: #{transformer_forward.35} parent=0 // pred_fallthru
    _
  // Predicated region
  $region26: #{transformer_forward.35} parent=0 // pred_check
    _
  $region27: #{transformer_forward.35} parent=0 // pred_check_branch
    %125 = sbr.rel (0) target = $region29
  $region28: #{transformer_forward.35} parent=0 // pred_region
    _
  $region29: #{transformer_forward.35} parent=0 // pred_fallthru
    _

// kernel: transformer_forward.36
$region0: #{transformer_forward.36}
  #allocation0 [shape = 'u32[]', space=smem, size = 0x4, offset = 0x4, fixed_abs, tag = 'smem constant byte address 0x4 - core index']
  #allocation1 [shape = 'u32[144,128]{1,0:T(1,128)}', space=vmem, size = 0x12000, scoped, tag = 'internal scratch']
  %s0 = inlined_call_operand.vmem [shape: bf16[2,4,8,8], index: 0, kind: input, shape index: {}]
  %s1 = inlined_call_operand.vmem [shape: bf16[2,4,8,8], index: 1, kind: input, shape index: {}]
  %s2 = inlined_call_operand.vmem [shape: bf16[2,4,8,8], index: 2, kind: input, shape index: {}]
  %s3 = inlined_call_operand.vmem [shape: f32[2,1,8], index: 3, kind: input, shape index: {}]
  %s4 = inlined_call_operand.vmem [shape: bf16[2,4,8,8], index: 4, kind: output, shape index: {}]
  %s5 = sld [smem:[#allocation0]]
  $region49: #{transformer_forward.36} parent=0
    _
  %s7 = ssub.s32 1, %s5
  %s8 = scalar_select 0, %s7, %s5
  loop: start=0, step=1, limit=10
  $region2: #{transformer_forward.36} parent=0 // loop_pre_header
    _
  $region3: #{transformer_forward.36} parent=0 // loop_header
    %s10 = sphi 0, %s14
    %p11 = scmp.ge.s32.totalorder %s10, 10
    %s17 = sphi 0, %s29
    %s18 = sphi 0, %s25
    %s19 = sphi 0, %s17
    %s20 = sphi 0, %s18
    %s21 = sphi 0, %s19
    %s22 = sphi 0, %s20
    %s34 = sphi 0, %s36
    %s37 = sphi 0, %s34
    %s38 = sphi 0, %s37
    %s54 = sphi 0, %s38
    %s62 = sphi 0, %s64
    %s65 = sphi 0, %s62
    %s66 = sphi 0, %s65
    %s82 = sphi 0, %s66
    %s90 = sphi 0, %s92
    %s93 = sphi 0, %s90
    %s94 = sphi 0, %s93
    %s110 = sphi 0, %s94
    %s116 = sphi 0, %s118
    %s119 = sphi 0, %s116
    %s120 = sphi 0, %s119
    %s136 = sphi 0, %s120
    %s144 = sphi 0, %s146
    %s147 = sphi 0, %s144
    %s148 = sphi 0, %s147
    %s164 = sphi 0, %s148
  $region4: #{transformer_forward.36} parent=0 // loop_header_branch
    %13 = sbr.rel (%p11) target = $region8
  $region5: #{transformer_forward.36} parent=0 // loop_body
    %s15 = ssub.s32 %s10, 1
    %s16 = ssub.s32 %s10, 2
    %s23 = sadd.s32 1, %s18
    %p24 = scmp.ge.s32.totalorder %s23, 4
    %s25 = scalar_select %p24, 0, %s23
    %s26 = sadd.s32 1, %s17
    %s27 = scalar_select %p24, %s26, %s17
    %p28 = scmp.ge.s32.totalorder %s27, 2
    %s29 = scalar_select %p28, 0, %s27
    %s30 = ssub.s32 %s17, %s29
    %s31 = ssub.s32 %s18, %s25
    %s32 = sor.u32 %s30, %s31
    %p33 = scmp.eq.s32.totalorder %s32, 0
    %s35 = sadd.s32 %s34, 1
    %s36 = scalar_select %p33, %s34, %s35
    %p39 = pneg %p33
    %p40 = scmp.eq.s32.totalorder %s10, 7
    %p41 = por %p39, %p40
    %p42 = scmp.ne.s32.totalorder %s34, %s37
    %p43 = scmp.eq.s32.totalorder %s10, 0
    %p44 = por %p42, %p43
    %p45 = scmp.ne.s32.totalorder %s34, %s37
    %p46 = scmp.eq.s32.totalorder %s15, 7
    %p47 = por %p45, %p46
    %p48 = scmp.ne.s32.totalorder %s37, %s38
    %p49 = scmp.eq.s32.totalorder %s15, 0
    %p50 = por %p48, %p49
    %p51 = scmp.ne.s32.totalorder %s37, %s38
    %p52 = scmp.eq.s32.totalorder %s16, 7
    %p53 = por %p51, %p52
    %p55 = scmp.ne.s32.totalorder %s38, %s54
    %p56 = scmp.eq.s32.totalorder %s16, 0
    %p57 = por %p55, %p56
    %s58 = ssub.s32 %s17, %s29
    %s59 = ssub.s32 %s18, %s25
    %s60 = sor.u32 %s58, %s59
    %p61 = scmp.eq.s32.totalorder %s60, 0
    %s63 = sadd.s32 %s62, 1
    %s64 = scalar_select %p61, %s62, %s63
    %p67 = pneg %p61
    %p68 = scmp.eq.s32.totalorder %s10, 7
    %p69 = por %p67, %p68
    %p70 = scmp.ne.s32.totalorder %s62, %s65
    %p71 = scmp.eq.s32.totalorder %s10, 0
    %p72 = por %p70, %p71
    %p73 = scmp.ne.s32.totalorder %s62, %s65
    %p74 = scmp.eq.s32.totalorder %s15, 7
    %p75 = por %p73, %p74
    %p76 = scmp.ne.s32.totalorder %s65, %s66
    %p77 = scmp.eq.s32.totalorder %s15, 0
    %p78 = por %p76, %p77
    %p79 = scmp.ne.s32.totalorder %s65, %s66
    %p80 = scmp.eq.s32.totalorder %s16, 7
    %p81 = por %p79, %p80
    %p83 = scmp.ne.s32.totalorder %s66, %s82
    %p84 = scmp.eq.s32.totalorder %s16, 0
    %p85 = por %p83, %p84
    %s86 = ssub.s32 %s17, %s29
    %s87 = ssub.s32 %s18, %s25
    %s88 = sor.u32 %s86, %s87
    %p89 = scmp.eq.s32.totalorder %s88, 0
    %s91 = sadd.s32 %s90, 1
    %s92 = scalar_select %p89, %s90, %s91
    %p95 = pneg %p89
    %p96 = scmp.eq.s32.totalorder %s10, 7
    %p97 = por %p95, %p96
    %p98 = scmp.ne.s32.totalorder %s90, %s93
    %p99 = scmp.eq.s32.totalorder %s10, 0
    %p100 = por %p98, %p99
    %p101 = scmp.ne.s32.totalorder %s90, %s93
    %p102 = scmp.eq.s32.totalorder %s15, 7
    %p103 = por %p101, %p102
    %p104 = scmp.ne.s32.totalorder %s93, %s94
    %p105 = scmp.eq.s32.totalorder %s15, 0
    %p106 = por %p104, %p105
    %p107 = scmp.ne.s32.totalorder %s93, %s94
    %p108 = scmp.eq.s32.totalorder %s16, 7
    %p109 = por %p107, %p108
    %p111 = scmp.ne.s32.totalorder %s94, %s110
    %p112 = scmp.eq.s32.totalorder %s16, 0
    %p113 = por %p111, %p112
    %s114 = ssub.s32 %s17, %s29
    %p115 = scmp.eq.s32.totalorder %s114, 0
    %s117 = sadd.s32 %s116, 1
    %s118 = scalar_select %p115, %s116, %s117
    %p121 = pneg %p115
    %p122 = scmp.eq.s32.totalorder %s10, 7
    %p123 = por %p121, %p122
    %p124 = scmp.ne.s32.totalorder %s116, %s119
    %p125 = scmp.eq.s32.totalorder %s10, 0
    %p126 = por %p124, %p125
    %p127 = scmp.ne.s32.totalorder %s116, %s119
    %p128 = scmp.eq.s32.totalorder %s15, 7
    %p129 = por %p127, %p128
    %p130 = scmp.ne.s32.totalorder %s119, %s120
    %p131 = scmp.eq.s32.totalorder %s15, 0
    %p132 = por %p130, %p131
    %p133 = scmp.ne.s32.totalorder %s119, %s120
    %p134 = scmp.eq.s32.totalorder %s16, 7
    %p135 = por %p133, %p134
    %p137 = scmp.ne.s32.totalorder %s120, %s136
    %p138 = scmp.eq.s32.totalorder %s16, 0
    %p139 = por %p137, %p138
    %s140 = ssub.s32 %s17, %s29
    %s141 = ssub.s32 %s18, %s25
    %s142 = sor.u32 %s140, %s141
    %p143 = scmp.eq.s32.totalorder %s142, 0
    %s145 = sadd.s32 %s144, 1
    %s146 = scalar_select %p143, %s144, %s145
    %p149 = pneg %p143
    %p150 = scmp.eq.s32.totalorder %s10, 7
    %p151 = por %p149, %p150
    %p152 = scmp.ne.s32.totalorder %s144, %s147
    %p153 = scmp.eq.s32.totalorder %s10, 0
    %p154 = por %p152, %p153
    %p155 = scmp.ne.s32.totalorder %s144, %s147
    %p156 = scmp.eq.s32.totalorder %s15, 7
    %p157 = por %p155, %p156
    %p158 = scmp.ne.s32.totalorder %s147, %s148
    %p159 = scmp.eq.s32.totalorder %s15, 0
    %p160 = por %p158, %p159
    %p161 = scmp.ne.s32.totalorder %s147, %s148
    %p162 = scmp.eq.s32.totalorder %s16, 7
    %p163 = por %p161, %p162
    %p165 = scmp.ne.s32.totalorder %s148, %s164
    %p166 = scmp.eq.s32.totalorder %s16, 0
    %p167 = por %p165, %p166
    %p168 = scmp.le.s32.totalorder 1, %s10
    %p169 = scmp.lt.s32.totalorder %s10, 9
    %p170 = pnand %p168, %p169
    %p171 = pneg %p170
    // Predicated region
    $region9: #{transformer_forward.36} parent=5 // pred_check
      _
    $region10: #{transformer_forward.36} parent=5 // pred_check_branch
      %173 = sbr.rel (%p170) target = $region12
    $region11: #{transformer_forward.36} parent=5 // pred_region
      %s174 = ssub.s32 %s10, 1
    $region12: #{transformer_forward.36} parent=5 // pred_fallthru
      _
    %p175 = scmp.lt.s32.totalorder %s10, 8
    // Predicated region
    $region13: #{transformer_forward.36} parent=5 // pred_check
      %p176 = pneg %p175
    $region14: #{transformer_forward.36} parent=5 // pred_check_branch
      %178 = sbr.rel (%p176) target = $region16
    $region15: #{transformer_forward.36} parent=5 // pred_region
      // Predicated region
      $region17: #{transformer_forward.36} parent=15 // pred_check
        %p179 = pneg %p44
      $region18: #{transformer_forward.36} parent=15 // pred_check_branch
        %181 = sbr.rel (%p179) target = $region20
      $region19: #{transformer_forward.36} parent=15 // pred_region
        %p182 = scmp.lt.s32.totalorder %s17, 1
        %s183 = scalar_select %p182, %s17, 1
        %p184 = scmp.lt.s32.totalorder %s18, 3
        %s185 = scalar_select %p184, %s18, 3
        %s186 = smul.addr %s183, 4
        %s187 = sadd.s32 %s185, %s186
        %s188 = smul.addr %s187, 4
        %s189 = scalar_lea.vmem %s0, %s188
      $region20: #{transformer_forward.36} parent=15 // pred_fallthru
        _
      // Predicated region
      $region21: #{transformer_forward.36} parent=15 // pred_check
        %p190 = pneg %p72
      $region22: #{transformer_forward.36} parent=15 // pred_check_branch
        %192 = sbr.rel (%p190) target = $region24
      $region23: #{transformer_forward.36} parent=15 // pred_region
        %p193 = scmp.lt.s32.totalorder %s17, 1
        %s194 = scalar_select %p193, %s17, 1
        %p195 = scmp.lt.s32.totalorder %s18, 3
        %s196 = scalar_select %p195, %s18, 3
        %s197 = smul.addr %s194, 4
        %s198 = sadd.s32 %s196, %s197
        %s199 = smul.addr %s198, 4
        %s200 = scalar_lea.vmem %s1, %s199
      $region24: #{transformer_forward.36} parent=15 // pred_fallthru
        _
      // Predicated region
      $region25: #{transformer_forward.36} parent=15 // pred_check
        %p201 = pneg %p100
      $region26: #{transformer_forward.36} parent=15 // pred_check_branch
        %203 = sbr.rel (%p201) target = $region28
      $region27: #{transformer_forward.36} parent=15 // pred_region
        %p204 = scmp.lt.s32.totalorder %s17, 1
        %s205 = scalar_select %p204, %s17, 1
        %p206 = scmp.lt.s32.totalorder %s18, 3
        %s207 = scalar_select %p206, %s18, 3
        %s208 = smul.addr %s205, 4
        %s209 = sadd.s32 %s207, %s208
        %s210 = smul.addr %s209, 4
        %s211 = scalar_lea.vmem %s2, %s210
      $region28: #{transformer_forward.36} parent=15 // pred_fallthru
        _
      // Predicated region
      $region29: #{transformer_forward.36} parent=15 // pred_check
        %p212 = pneg %p126
      $region30: #{transformer_forward.36} parent=15 // pred_check_branch
        %214 = sbr.rel (%p212) target = $region32
      $region31: #{transformer_forward.36} parent=15 // pred_region
        %p215 = scmp.lt.s32.totalorder %s17, 1
        %s216 = scalar_select %p215, %s17, 1
        %s217 = scalar_lea.vmem %s3, %s216
      $region32: #{transformer_forward.36} parent=15 // pred_fallthru
        _
    $region16: #{transformer_forward.36} parent=5 // pred_fallthru
      _
    %p218 = scmp.le.s32.totalorder 1, %s10
    %p219 = scmp.lt.s32.totalorder %s10, 9
    %p220 = pnand %p218, %p219
    %p221 = pneg %p220
    // Predicated region
    $region33: #{transformer_forward.36} parent=5 // pred_check
      _
    $region34: #{transformer_forward.36} parent=5 // pred_check_branch
      %223 = sbr.rel (%p220) target = $region36
    $region35: #{transformer_forward.36} parent=5 // pred_region
      %s224 = ssub.s32 %s10, 1
      %p225 = scmp.lt.s32.totalorder %s19, 1
      %s226 = scalar_select %p225, %s19, 1
      %p227 = scmp.lt.s32.totalorder %s20, 3
      %s228 = scalar_select %p227, %s20, 3
      %s229 = smul.addr %s226, 4
      %s230 = sadd.s32 %s228, %s229
      %s231 = smul.addr %s230, 4
      %s232 = scalar_lea.vmem %s0, %s231
      %p233 = pneg %p50
      %p234 = pneg %p47
      %p235 = scmp.lt.s32.totalorder %s19, 1
      %s236 = scalar_select %p235, %s19, 1
      %p237 = scmp.lt.s32.totalorder %s20, 3
      %s238 = scalar_select %p237, %s20, 3
      %s239 = smul.addr %s236, 4
      %s240 = sadd.s32 %s238, %s239
      %s241 = smul.addr %s240, 4
      %s242 = scalar_lea.vmem %s1, %s241
      %p243 = pneg %p78
      %p244 = pneg %p75
      %p245 = scmp.lt.s32.totalorder %s19, 1
      %s246 = scalar_select %p245, %s19, 1
      %p247 = scmp.lt.s32.totalorder %s20, 3
      %s248 = scalar_select %p247, %s20, 3
      %s249 = smul.addr %s246, 4
      %s250 = sadd.s32 %s248, %s249
      %s251 = smul.addr %s250, 4
      %s252 = scalar_lea.vmem %s2, %s251
      %p253 = pneg %p106
      %p254 = pneg %p103
      %p255 = scmp.lt.s32.totalorder %s19, 1
      %s256 = scalar_select %p255, %s19, 1
      %s257 = scalar_lea.vmem %s3, %s256
      %p258 = pneg %p132
      %p259 = pneg %p129
      %p260 = pneg %p160
      %p261 = pneg %p157
      %p262 = scmp.lt.s32.totalorder %s19, 1
      %s263 = scalar_select %p262, %s19, 1
      %p264 = scmp.lt.s32.totalorder %s20, 3
      %s265 = scalar_select %p264, %s20, 3
      %s266 = smul.addr %s263, 4
      %s267 = sadd.s32 %s265, %s266
      %s268 = smul.addr %s267, 4
      %s269 = scalar_lea.vmem %s4, %s268
      %p270 = scmp.lt.s32.totalorder %s19, 1
      %s271 = scalar_select %p270, %s19, 1
      %p272 = scmp.lt.s32.totalorder %s20, 3
      %s273 = scalar_select %p272, %s20, 3
      %s274 = smul.addr %s271, 4
      %s275 = sadd.s32 %s273, %s274
      %s276 = smul.addr %s275, 4
      %s277 = scalar_lea.vmem %s0, %s276
      %p278 = scmp.lt.s32.totalorder %s19, 1
      %s279 = scalar_select %p278, %s19, 1
      %p280 = scmp.lt.s32.totalorder %s20, 3
      %s281 = scalar_select %p280, %s20, 3
      %s282 = smul.addr %s279, 4
      %s283 = sadd.s32 %s281, %s282
      %s284 = smul.addr %s283, 4
      %s285 = scalar_lea.vmem %s1, %s284
      %p286 = scmp.lt.s32.totalorder %s19, 1
      %s287 = scalar_select %p286, %s19, 1
      %p288 = scmp.lt.s32.totalorder %s20, 3
      %s289 = scalar_select %p288, %s20, 3
      %s290 = smul.addr %s287, 4
      %s291 = sadd.s32 %s289, %s290
      %s292 = smul.addr %s291, 4
      %s293 = scalar_lea.vmem %s2, %s292
      %p294 = scmp.lt.s32.totalorder %s19, 1
      %s295 = scalar_select %p294, %s19, 1
      %s296 = scalar_lea.vmem %s3, %s295
      %p297 = scmp.lt.s32.totalorder %s19, 1
      %s298 = scalar_select %p297, %s19, 1
      %p299 = scmp.lt.s32.totalorder %s20, 3
      %s300 = scalar_select %p299, %s20, 3
      %s301 = smul.addr %s298, 4
      %s302 = sadd.s32 %s300, %s301
      %s303 = smul.addr %s302, 4
      %s304 = scalar_lea.vmem %s4, %s303
      %v306 = vld [vmem:[%s277] sm:$0xf]
      %v307 = vld [vmem:[%s285] sm:$0xf]
      %v308 = vld [vmem:[%s293] sm:$0xf]
      %vm309 = vcmask 64512
      %v311 = vsel %vm309, %v306, 0
      %v314 = vsel %vm309, %v307, 0
      %316 = vmatprep.subr.bf16.mxu0 0
      %317 = vmatpush1.bf16.xpose.msra.mxu0 %v314
      %318 = vmatprep.subr.bf16.mxu0 0
      %319 = vmatpush1.bf16.xpose.msra.mxu0 0
      %320 = vmatprep.subr.bf16.mxu0 0
      %321 = vmatpush1.bf16.xpose.msra.mxu0 0
      %322 = vmatprep.subr.bf16.mxu0 0
      %323 = vmatpush1.bf16.xpose.msra.mxu0 0
      %324 = vmatprep.subr.bf16.mxu0 0
      %325 = vmatpush1.bf16.xpose.msra.mxu0 0
      %326 = vmatprep.subr.bf16.mxu0 0
      %327 = vmatpush1.bf16.xpose.msra.mxu0 0
      %328 = vmatprep.subr.bf16.mxu0 0
      %329 = vmatpush1.bf16.xpose.msra.mxu0 0
      %330 = vmatprep.subr.bf16.mxu0 0
      %331 = vmatpush1.bf16.xpose.msra.mxu0 0
      %332 = vmatprep.subr.bf16.mxu0 0
      %333 = vmatpush1.bf16.xpose.msra.mxu0 0
      %334 = vmatprep.subr.bf16.mxu0 0
      %335 = vmatpush1.bf16.xpose.msra.mxu0 0
      %336 = vmatprep.subr.bf16.mxu0 0
      %337 = vmatpush1.bf16.xpose.msra.mxu0 0
      %338 = vmatprep.subr.bf16.mxu0 0
      %339 = vmatpush1.bf16.xpose.msra.mxu0 0
      %340 = vmatprep.subr.bf16.mxu0 0
      %341 = vmatpush1.bf16.xpose.msra.mxu0 0
      %342 = vmatprep.subr.bf16.mxu0 0
      %343 = vmatpush1.bf16.xpose.msra.mxu0 0
      %344 = vmatprep.subr.bf16.mxu0 0
      %345 = vmatpush1.bf16.xpose.msra.mxu0 0
      %346 = vmatprep.subr.bf16.mxu0 0
      %347 = vmatpush1.bf16.xpose.msra.mxu0 0
      %348 = vmatprep.mubr.bf16.mxu0 0
      %349 = vmatmul.mubr.bf16.gmra.mrb[0].mxu0 %v311
      %v350 = vpop.f32.mrb[0].mxu0
      %v351 = vadd.f32 0.0, %v350
      %v352 = vpop.f32.mrb[0].mxu0
      %v353 = vpop.f32.mrb[0].mxu0
      %v354 = vpop.f32.mrb[0].mxu0
      %355 = vdwg.mxu0
      %v356 = vmul.f32 %v351, 0.35355338
      %v357 = vld [vmem:[%s296] sm:$0x1]
      %v359 = vlaneseq
      %v360 = vshrl.u32 %v359, 7
      %v361 = vsub.s32 0, %v360
      %v362 = vrot.slane %v357, %v361
      %v364 = vadd.f32 %v356, %v362
      %v365 = vlaneseq
      %v366 = vshrl.u32 %v365, 7
      %v367 = vlaneseq
      %v368 = vand.u32 %v367, 127
      %vm369 = vcmp.le.s32.totalorder %v368, %v366
      %v370 = vsel %vm369, %v364, -1e+30
      %v371 = vsel %vm309, %v370, -inf
      %372 = vmax.xlane.f32.xlu0 %v371
      %v373 = vpop.xlane.xlu0 %372
      %v374 = vsub.f32 %v370, %v373
      %v375 = vmul.f32 %v374, 1.442695
      %v376 = vpow.pop %v375
      %v377 = vsel %vm309, %v376, 0.0
      %378 = vadd.xlane.f32.xlu0 %v377
      %v379 = vpop.xlane.xlu0 %378
      %v380 = vrcp.pop %v379
      %v381 = vmul.f32 %v376, %v380
      %v382 = vpack.c.bf16 %v381, %v381
      %v384 = vsel %vm309, %v382, 0
      %vm386 = vcmask 1043456
      %v388 = vsel %vm386, %v308, 0
      %390 = vmatprep.subr.bf16.mxu0 0
      %391 = vmatpush1.bf16.msra.mxu0 %v388
      %392 = vmatprep.subr.bf16.mxu0 0
      %393 = vmatpush1.bf16.msra.mxu0 0
      %394 = vmatprep.subr.bf16.mxu0 0
      %395 = vmatpush1.bf16.msra.mxu0 0
      %396 = vmatprep.subr.bf16.mxu0 0
      %397 = vmatpush1.bf16.msra.mxu0 0
      %398 = vmatprep.subr.bf16.mxu0 0
      %399 = vmatpush1.bf16.msra.mxu0 0
      %400 = vmatprep.subr.bf16.mxu0 0
      %401 = vmatpush1.bf16.msra.mxu0 0
      %402 = vmatprep.subr.bf16.mxu0 0
      %403 = vmatpush1.bf16.msra.mxu0 0
      %404 = vmatprep.subr.bf16.mxu0 0
      %405 = vmatpush1.bf16.msra.mxu0 0
      %406 = vmatprep.subr.bf16.mxu0 0
      %407 = vmatpush1.bf16.msra.mxu0 0
      %408 = vmatprep.subr.bf16.mxu0 0
      %409 = vmatpush1.bf16.msra.mxu0 0
      %410 = vmatprep.subr.bf16.mxu0 0
      %411 = vmatpush1.bf16.msra.mxu0 0
      %412 = vmatprep.subr.bf16.mxu0 0
      %413 = vmatpush1.bf16.msra.mxu0 0
      %414 = vmatprep.subr.bf16.mxu0 0
      %415 = vmatpush1.bf16.msra.mxu0 0
      %416 = vmatprep.subr.bf16.mxu0 0
      %417 = vmatpush1.bf16.msra.mxu0 0
      %418 = vmatprep.subr.bf16.mxu0 0
      %419 = vmatpush1.bf16.msra.mxu0 0
      %420 = vmatprep.subr.bf16.mxu0 0
      %421 = vmatpush1.bf16.msra.mxu0 0
      %422 = vmatprep.mubr.bf16.mxu0 0
      %423 = vmatmul.mubr.bf16.gmra.mrb[0].mxu0 %v384
      %v424 = vpop.f32.mrb[0].mxu0
      %v425 = vadd.f32 0.0, %v424
      %v426 = vpop.f32.mrb[0].mxu0
      %v427 = vpop.f32.mrb[0].mxu0
      %v428 = vpop.f32.mrb[0].mxu0
      %429 = vdwg.mxu0
      %v430 = vpack.c.bf16 %v425, %v425
      %vm431 = vcmask 60416
      %432 = vst.msk [vmem:[%s304] sm:$0xf] %vm431, %v430
      %p433 = scmp.lt.s32.totalorder %s19, 1
      %s434 = scalar_select %p433, %s19, 1
      %p435 = scmp.lt.s32.totalorder %s20, 3
      %s436 = scalar_select %p435, %s20, 3
      %s437 = smul.addr %s434, 4
      %s438 = sadd.s32 %s436, %s437
      %s439 = smul.addr %s438, 4
      %s440 = scalar_lea.vmem %s4, %s439
      // Predicated region
      $region37: #{transformer_forward.36} parent=35 // pred_check
        %p441 = pneg %p157
      $region38: #{transformer_forward.36} parent=35 // pred_check_branch
        %443 = sbr.rel (%p441) target = $region40
      $region39: #{transformer_forward.36} parent=35 // pred_region
        _
      $region40: #{transformer_forward.36} parent=35 // pred_fallthru
        _
    $region36: #{transformer_forward.36} parent=5 // pred_fallthru
      _
    %p444 = scmp.le.s32.totalorder 2, %s10
    // Predicated region
    $region41: #{transformer_forward.36} parent=5 // pred_check
      %p445 = pneg %p444
    $region42: #{transformer_forward.36} parent=5 // pred_check_branch
      %447 = sbr.rel (%p445) target = $region44
    $region43: #{transformer_forward.36} parent=5 // pred_region
      %s448 = ssub.s32 %s10, 2
      // Predicated region
      $region45: #{transformer_forward.36} parent=43 // pred_check
        %p449 = pneg %p163
      $region46: #{transformer_forward.36} parent=43 // pred_check_branch
        %451 = sbr.rel (%p449) target = $region48
      $region47: #{transformer_forward.36} parent=43 // pred_region
        %p452 = scmp.lt.s32.totalorder %s21, 1
        %s453 = scalar_select %p452, %s21, 1
        %p454 = scmp.lt.s32.totalorder %s22, 3
        %s455 = scalar_select %p454, %s22, 3
        %s456 = smul.addr %s453, 4
        %s457 = sadd.s32 %s455, %s456
        %s458 = smul.addr %s457, 4
        %s459 = scalar_lea.vmem %s4, %s458
      $region48: #{transformer_forward.36} parent=43 // pred_fallthru
        _
    $region44: #{transformer_forward.36} parent=5 // pred_fallthru
      _
  $region6: #{transformer_forward.36} parent=0 // loop_footer
    %s14 = sadd.s32 1, %s10
  $region7: #{transformer_forward.36} parent=0 // loop_footer_branch
    %9 = sbr.rel target = $region3
  $region8: #{transformer_forward.36} parent=0 // loop_exit
    _

// kernel: transformer_forward.38
$region0: #{transformer_forward.38}
  #allocation0 [shape = 'u32[]', space=smem, size = 0x4, offset = 0x4, fixed_abs, tag = 'smem constant byte address 0x4 - core index']
  #allocation1 [shape = 'u32[144,128]{1,0:T(1,128)}', space=vmem, size = 0x12000, scoped, tag = 'internal scratch']
  #allocation2 [shape = 'f32[16,32]{1,0:T(8,128)}', space=vmem, size = 0x2000, scoped, tag = 'scratch operand']
  %s0 = inlined_call_operand.vmem [shape: bf16[16,32], index: 0, kind: input, shape index: {}]
  %s1 = inlined_call_operand.vmem [shape: bf16[32,32], index: 1, kind: input, shape index: {}]
  %s2 = inlined_call_operand.vmem [shape: f32[1,32], index: 2, kind: input, shape index: {}]
  %s3 = inlined_call_operand.vmem [shape: bf16[16,32], index: 3, kind: output, shape index: {}]
  %s4 = sld [smem:[#allocation0]]
  $region30: #{transformer_forward.38} parent=0
    _
  %s6 = ssub.s32 1, %s4
  %s7 = scalar_select 0, %s6, %s4
  // Predicated region
  $region2: #{transformer_forward.38} parent=0 // pred_check
    _
  $region3: #{transformer_forward.38} parent=0 // pred_check_branch
    %9 = sbr.rel (0) target = $region5
  $region4: #{transformer_forward.38} parent=0 // pred_region
    _
  $region5: #{transformer_forward.38} parent=0 // pred_fallthru
    _
  // Predicated region
  $region6: #{transformer_forward.38} parent=0 // pred_check
    _
  $region7: #{transformer_forward.38} parent=0 // pred_check_branch
    %11 = sbr.rel (0) target = $region9
  $region8: #{transformer_forward.38} parent=0 // pred_region
    _
  $region9: #{transformer_forward.38} parent=0 // pred_fallthru
    _
  // Predicated region
  $region10: #{transformer_forward.38} parent=0 // pred_check
    _
  $region11: #{transformer_forward.38} parent=0 // pred_check_branch
    %13 = sbr.rel (0) target = $region13
  $region12: #{transformer_forward.38} parent=0 // pred_region
    _
  $region13: #{transformer_forward.38} parent=0 // pred_fallthru
    _
  %p15 = scmp.eq.s32.totalorder 0, 0
  // Predicated region
  $region14: #{transformer_forward.38} parent=0 // pred_check
    %p16 = pneg %p15
  $region15: #{transformer_forward.38} parent=0 // pred_check_branch
    %18 = sbr.rel (%p16) target = $region17
  $region16: #{transformer_forward.38} parent=0 // pred_region
    %vm19 = vcmask 261120
    %20 = vst.msk [vmem:[#allocation2] sm:$0xff] %vm19, 0.0
    %21 = vst.msk [vmem:[#allocation2 + $0x8] sm:$0xff] %vm19, 0.0
  $region17: #{transformer_forward.38} parent=0 // pred_fallthru
    _
  %v22 = vld [vmem:[#allocation2] sm:$0xff]
  %v23 = vld [vmem:[#allocation2 + $0x8] sm:$0xff]
  %v24 = vld [vmem:[%s0] sm:$0xf]
  %v25 = vld [vmem:[%s0 + $0x4] sm:$0xf]
  %v26 = vld [vmem:[%s1] sm:$0xf]
  %v27 = vld [vmem:[%s1 + $0x4] sm:$0xf]
  %v28 = vld [vmem:[%s1 + $0x8] sm:$0xf]
  %v29 = vld [vmem:[%s1 + $0xc] sm:$0xf]
  %v32 = vunpack.c.l.b16 %v24
  %v33 = vunpack.c.l.b16 %v25
  %v34 = vpack.c.b16 %v33, %v32
  %v39 = vunpack.c.l.b16 %v26
  %v40 = vunpack.c.l.b16 %v27
  %v41 = vunpack.c.l.b16 %v28
  %v42 = vunpack.c.l.b16 %v29
  %v43 = vpack.c.b16 %v40, %v39
  %v44 = vpack.c.b16 %v42, %v41
  %vm47 = vcmask 261120
  %v49 = vsel %vm47, %v34, 0
  %51 = vmatprep.subr.bf16.mxu0 0
  %52 = vmatpush1.bf16.msra.mxu0 %v43
  %53 = vmatprep.subr.bf16.mxu0 0
  %54 = vmatpush1.bf16.msra.mxu0 %v44
  %55 = vmatprep.subr.bf16.mxu0 0
  %56 = vmatpush1.bf16.msra.mxu0 0
  %57 = vmatprep.subr.bf16.mxu0 0
  %58 = vmatpush1.bf16.msra.mxu0 0
  %59 = vmatprep.subr.bf16.mxu0 0
  %60 = vmatpush1.bf16.msra.mxu0 0
  %61 = vmatprep.subr.bf16.mxu0 0
  %62 = vmatpush1.bf16.msra.mxu0 0
  %63 = vmatprep.subr.bf16.mxu0 0
  %64 = vmatpush1.bf16.msra.mxu0 0
  %65 = vmatprep.subr.bf16.mxu0 0
  %66 = vmatpush1.bf16.msra.mxu0 0
  %67 = vmatprep.subr.bf16.mxu0 0
  %68 = vmatpush1.bf16.msra.mxu0 0
  %69 = vmatprep.subr.bf16.mxu0 0
  %70 = vmatpush1.bf16.msra.mxu0 0
  %71 = vmatprep.subr.bf16.mxu0 0
  %72 = vmatpush1.bf16.msra.mxu0 0
  %73 = vmatprep.subr.bf16.mxu0 0
  %74 = vmatpush1.bf16.msra.mxu0 0
  %75 = vmatprep.subr.bf16.mxu0 0
  %76 = vmatpush1.bf16.msra.mxu0 0
  %77 = vmatprep.subr.bf16.mxu0 0
  %78 = vmatpush1.bf16.msra.mxu0 0
  %79 = vmatprep.subr.bf16.mxu0 0
  %80 = vmatpush1.bf16.msra.mxu0 0
  %81 = vmatprep.subr.bf16.mxu0 0
  %82 = vmatpush1.bf16.msra.mxu0 0
  %83 = vmatprep.mubr.bf16.mxu0 0
  %84 = vmatmul.mubr.bf16.gmra.mrb[0].mxu0 %v49
  %v85 = vpop.f32.mrb[0].mxu0
  %v86 = vadd.f32 0.0, %v85
  %v87 = vpop.f32.mrb[0].mxu0
  %v88 = vpop.f32.mrb[0].mxu0
  %v89 = vadd.f32 0.0, %v88
  %v90 = vpop.f32.mrb[0].mxu0
  %91 = vdwg.mxu0
  %v92 = vadd.f32 %v22, %v86
  %v93 = vadd.f32 %v23, %v89
  %94 = vst.msk [vmem:[#allocation2] sm:$0xff] %vm47, %v92
  %95 = vst.msk [vmem:[#allocation2 + $0x8] sm:$0xff] %vm47, %v93
  // Predicated region
  $region18: #{transformer_forward.38} parent=0 // pred_check
    %p96 = pneg %p15
  $region19: #{transformer_forward.38} parent=0 // pred_check_branch
    %98 = sbr.rel (%p96) target = $region21
  $region20: #{transformer_forward.38} parent=0 // pred_region
    %v99 = vld [vmem:[#allocation2] sm:$0xff]
    %v100 = vld [vmem:[#allocation2 + $0x8] sm:$0xff]
    %v101 = vld [vmem:[%s2] sm:$0x1]
    %v103 = vlaneseq
    %v104 = vshrl.u32 %v103, 7
    %v105 = vsub.s32 0, %v104
    %v106 = vrot.slane %v101, %v105
    %v108 = vadd.f32 %v99, %v106
    %v109 = vadd.f32 %v100, %v106
    %v110 = vpack.c.bf16 %v109, %v108
    %v112 = vunpack.c.l.b16 %v110
    %v113 = vunpack.c.h.b16 %v110
    %v114 = vpack.c.b16 %v112, %v112
    %v115 = vpack.c.b16 %v113, %v113
    %vm118 = vcmask 257024
    %119 = vst.msk [vmem:[%s3] sm:$0xf] %vm118, %v114
    %120 = vst.msk [vmem:[%s3 + $0x4] sm:$0xf] %vm118, %v115
  $region21: #{transformer_forward.38} parent=0 // pred_fallthru
    _
  // Predicated region
  $region22: #{transformer_forward.38} parent=0 // pred_check
    _
  $region23: #{transformer_forward.38} parent=0 // pred_check_branch
    %122 = sbr.rel (0) target = $region25
  $region24: #{transformer_forward.38} parent=0 // pred_region
    _
  $region25: #{transformer_forward.38} parent=0 // pred_fallthru
    _
  // Predicated region
  $region26: #{transformer_forward.38} parent=0 // pred_check
    _
  $region27: #{transformer_forward.38} parent=0 // pred_check_branch
    %124 = sbr.rel (0) target = $region29
  $region28: #{transformer_forward.38} parent=0 // pred_region
    _
  $region29: #{transformer_forward.38} parent=0 // pred_fallthru
    _

// kernel: transformer_forward.37
$region0: #{transformer_forward.37}
  #allocation0 [shape = 'u32[]', space=smem, size = 0x4, offset = 0x4, fixed_abs, tag = 'smem constant byte address 0x4 - core index']
  #allocation1 [shape = 'u32[144,128]{1,0:T(1,128)}', space=vmem, size = 0x12000, scoped, tag = 'internal scratch']
  #allocation2 [shape = 'f32[16,32]{1,0:T(8,128)}', space=vmem, size = 0x2000, scoped, tag = 'scratch operand']
  %s0 = inlined_call_operand.vmem [shape: bf16[16,32], index: 0, kind: input, shape index: {}]
  %s1 = inlined_call_operand.vmem [shape: bf16[32,32], index: 1, kind: input, shape index: {}]
  %s2 = inlined_call_operand.vmem [shape: f32[1,32], index: 2, kind: input, shape index: {}]
  %s3 = inlined_call_operand.vmem [shape: bf16[16,32], index: 3, kind: input, shape index: {}]
  %s4 = inlined_call_operand.vmem [shape: f32[1,32], index: 4, kind: input, shape index: {}]
  %s5 = inlined_call_operand.vmem [shape: f32[1,32], index: 5, kind: input, shape index: {}]
  %s6 = inlined_call_operand.vmem [shape: bf16[16,32], index: 6, kind: output, shape index: {}]
  %s7 = sld [smem:[#allocation0]]
  $region42: #{transformer_forward.37} parent=0
    _
  %s9 = ssub.s32 1, %s7
  %s10 = scalar_select 0, %s9, %s7
  // Predicated region
  $region2: #{transformer_forward.37} parent=0 // pred_check
    _
  $region3: #{transformer_forward.37} parent=0 // pred_check_branch
    %12 = sbr.rel (0) target = $region5
  $region4: #{transformer_forward.37} parent=0 // pred_region
    _
  $region5: #{transformer_forward.37} parent=0 // pred_fallthru
    _
  // Predicated region
  $region6: #{transformer_forward.37} parent=0 // pred_check
    _
  $region7: #{transformer_forward.37} parent=0 // pred_check_branch
    %14 = sbr.rel (0) target = $region9
  $region8: #{transformer_forward.37} parent=0 // pred_region
    _
  $region9: #{transformer_forward.37} parent=0 // pred_fallthru
    _
  // Predicated region
  $region10: #{transformer_forward.37} parent=0 // pred_check
    _
  $region11: #{transformer_forward.37} parent=0 // pred_check_branch
    %16 = sbr.rel (0) target = $region13
  $region12: #{transformer_forward.37} parent=0 // pred_region
    _
  $region13: #{transformer_forward.37} parent=0 // pred_fallthru
    _
  // Predicated region
  $region14: #{transformer_forward.37} parent=0 // pred_check
    _
  $region15: #{transformer_forward.37} parent=0 // pred_check_branch
    %18 = sbr.rel (0) target = $region17
  $region16: #{transformer_forward.37} parent=0 // pred_region
    _
  $region17: #{transformer_forward.37} parent=0 // pred_fallthru
    _
  // Predicated region
  $region18: #{transformer_forward.37} parent=0 // pred_check
    _
  $region19: #{transformer_forward.37} parent=0 // pred_check_branch
    %20 = sbr.rel (0) target = $region21
  $region20: #{transformer_forward.37} parent=0 // pred_region
    _
  $region21: #{transformer_forward.37} parent=0 // pred_fallthru
    _
  // Predicated region
  $region22: #{transformer_forward.37} parent=0 // pred_check
    _
  $region23: #{transformer_forward.37} parent=0 // pred_check_branch
    %22 = sbr.rel (0) target = $region25
  $region24: #{transformer_forward.37} parent=0 // pred_region
    _
  $region25: #{transformer_forward.37} parent=0 // pred_fallthru
    _
  %p24 = scmp.eq.s32.totalorder 0, 0
  // Predicated region
  $region26: #{transformer_forward.37} parent=0 // pred_check
    %p25 = pneg %p24
  $region27: #{transformer_forward.37} parent=0 // pred_check_branch
    %27 = sbr.rel (%p25) target = $region29
  $region28: #{transformer_forward.37} parent=0 // pred_region
    %vm28 = vcmask 261120
    %29 = vst.msk [vmem:[#allocation2] sm:$0xff] %vm28, 0.0
    %30 = vst.msk [vmem:[#allocation2 + $0x8] sm:$0xff] %vm28, 0.0
  $region29: #{transformer_forward.37} parent=0 // pred_fallthru
    _
  %v31 = vld [vmem:[#allocation2] sm:$0xff]
  %v32 = vld [vmem:[#allocation2 + $0x8] sm:$0xff]
  %v33 = vld [vmem:[%s0] sm:$0xf]
  %v34 = vld [vmem:[%s0 + $0x4] sm:$0xf]
  %v35 = vld [vmem:[%s1] sm:$0xf]
  %v36 = vld [vmem:[%s1 + $0x4] sm:$0xf]
  %v37 = vld [vmem:[%s1 + $0x8] sm:$0xf]
  %v38 = vld [vmem:[%s1 + $0xc] sm:$0xf]
  %v41 = vunpack.c.l.b16 %v33
  %v42 = vunpack.c.l.b16 %v34
  %v43 = vpack.c.b16 %v42, %v41
  %v48 = vunpack.c.l.b16 %v35
  %v49 = vunpack.c.l.b16 %v36
  %v50 = vunpack.c.l.b16 %v37
  %v51 = vunpack.c.l.b16 %v38
  %v52 = vpack.c.b16 %v49, %v48
  %v53 = vpack.c.b16 %v51, %v50
  %vm56 = vcmask 261120
  %v58 = vsel %vm56, %v43, 0
  %60 = vmatprep.subr.bf16.mxu0 0
  %61 = vmatpush1.bf16.msra.mxu0 %v52
  %62 = vmatprep.subr.bf16.mxu0 0
  %63 = vmatpush1.bf16.msra.mxu0 %v53
  %64 = vmatprep.subr.bf16.mxu0 0
  %65 = vmatpush1.bf16.msra.mxu0 0
  %66 = vmatprep.subr.bf16.mxu0 0
  %67 = vmatpush1.bf16.msra.mxu0 0
  %68 = vmatprep.subr.bf16.mxu0 0
  %69 = vmatpush1.bf16.msra.mxu0 0
  %70 = vmatprep.subr.bf16.mxu0 0
  %71 = vmatpush1.bf16.msra.mxu0 0
  %72 = vmatprep.subr.bf16.mxu0 0
  %73 = vmatpush1.bf16.msra.mxu0 0
  %74 = vmatprep.subr.bf16.mxu0 0
  %75 = vmatpush1.bf16.msra.mxu0 0
  %76 = vmatprep.subr.bf16.mxu0 0
  %77 = vmatpush1.bf16.msra.mxu0 0
  %78 = vmatprep.subr.bf16.mxu0 0
  %79 = vmatpush1.bf16.msra.mxu0 0
  %80 = vmatprep.subr.bf16.mxu0 0
  %81 = vmatpush1.bf16.msra.mxu0 0
  %82 = vmatprep.subr.bf16.mxu0 0
  %83 = vmatpush1.bf16.msra.mxu0 0
  %84 = vmatprep.subr.bf16.mxu0 0
  %85 = vmatpush1.bf16.msra.mxu0 0
  %86 = vmatprep.subr.bf16.mxu0 0
  %87 = vmatpush1.bf16.msra.mxu0 0
  %88 = vmatprep.subr.bf16.mxu0 0
  %89 = vmatpush1.bf16.msra.mxu0 0
  %90 = vmatprep.subr.bf16.mxu0 0
  %91 = vmatpush1.bf16.msra.mxu0 0
  %92 = vmatprep.mubr.bf16.mxu0 0
  %93 = vmatmul.mubr.bf16.gmra.mrb[0].mxu0 %v58
  %v94 = vpop.f32.mrb[0].mxu0
  %v95 = vadd.f32 0.0, %v94
  %v96 = vpop.f32.mrb[0].mxu0
  %v97 = vpop.f32.mrb[0].mxu0
  %v98 = vadd.f32 0.0, %v97
  %v99 = vpop.f32.mrb[0].mxu0
  %100 = vdwg.mxu0
  %v101 = vadd.f32 %v31, %v95
  %v102 = vadd.f32 %v32, %v98
  %103 = vst.msk [vmem:[#allocation2] sm:$0xff] %vm56, %v101
  %104 = vst.msk [vmem:[#allocation2 + $0x8] sm:$0xff] %vm56, %v102
  // Predicated region
  $region30: #{transformer_forward.37} parent=0 // pred_check
    %p105 = pneg %p24
  $region31: #{transformer_forward.37} parent=0 // pred_check_branch
    %107 = sbr.rel (%p105) target = $region33
  $region32: #{transformer_forward.37} parent=0 // pred_region
    %v108 = vld [vmem:[#allocation2] sm:$0xff]
    %v109 = vld [vmem:[#allocation2 + $0x8] sm:$0xff]
    %v110 = vld [vmem:[%s2] sm:$0x1]
    %v112 = vlaneseq
    %v113 = vshrl.u32 %v112, 7
    %v114 = vsub.s32 0, %v113
    %v115 = vrot.slane %v110, %v114
    %v117 = vadd.f32 %v108, %v115
    %v118 = vadd.f32 %v109, %v115
    %v119 = vld [vmem:[%s3] sm:$0xf]
    %v120 = vld [vmem:[%s3 + $0x4] sm:$0xf]
    %v121 = vunpack.c.l.bf16 %v119
    %v122 = vunpack.c.l.bf16 %v120
    %v123 = vadd.f32 %v117, %v121
    %v124 = vadd.f32 %v118, %v122
    %v125 = vsel %vm56, %v123, 0.0
    %126 = vadd.xlane.f32.xlu0 %v125
    %v127 = vpop.xlane.xlu0 %126
    %v128 = vsel %vm56, %v124, 0.0
    %129 = vadd.xlane.f32.xlu0 %v128
    %v130 = vpop.xlane.xlu0 %129
    %v131 = vrcp.pop 32.0
    %v132 = vmul.f32 %v127, %v131
    %v133 = vmul.f32 %v130, %v131
    %v134 = vsub.f32 %v123, %v132
    %v135 = vsub.f32 %v124, %v133
    %v136 = vmul.f32 %v134, %v134
    %v137 = vmul.f32 %v135, %v135
    %v138 = vsel %vm56, %v136, 0.0
    %139 = vadd.xlane.f32.xlu0 %v138
    %v140 = vpop.xlane.xlu0 %139
    %v141 = vsel %vm56, %v137, 0.0
    %142 = vadd.xlane.f32.xlu0 %v141
    %v143 = vpop.xlane.xlu0 %142
    %v144 = vmul.f32 %v140, %v131
    %v145 = vmul.f32 %v143, %v131
    %v146 = vadd.f32 %v144, 1e-05
    %v147 = vadd.f32 %v145, 1e-05
    %v148 = vrsqrt.pop %v146
    %v149 = vrsqrt.pop %v147
    %v150 = vmul.f32 %v134, %v148
    %v151 = vmul.f32 %v135, %v149
    %v152 = vld [vmem:[%s4] sm:$0x1]
    %v154 = vlaneseq
    %v155 = vshrl.u32 %v154, 7
    %v156 = vsub.s32 0, %v155
    %v157 = vrot.slane %v152, %v156
    %v159 = vmul.f32 %v150, %v157
    %v160 = vmul.f32 %v151, %v157
    %v161 = vld [vmem:[%s5] sm:$0x1]
    %v163 = vlaneseq
    %v164 = vshrl.u32 %v163, 7
    %v165 = vsub.s32 0, %v164
    %v166 = vrot.slane %v161, %v165
    %v168 = vadd.f32 %v159, %v166
    %v169 = vadd.f32 %v160, %v166
    %v170 = vpack.c.bf16 %v169, %v168
    %v172 = vunpack.c.l.b16 %v170
    %v173 = vunpack.c.h.b16 %v170
    %v174 = vpack.c.b16 %v172, %v172
    %v175 = vpack.c.b16 %v173, %v173
    %vm178 = vcmask 257024
    %179 = vst.msk [vmem:[%s6] sm:$0xf] %vm178, %v174
    %180 = vst.msk [vmem:[%s6 + $0x4] sm:$0xf] %vm178, %v175
  $region33: #{transformer_forward.37} parent=0 // pred_fallthru
    _
  // Predicated region
  $region34: #{transformer_forward.37} parent=0 // pred_check
    _
  $region35: #{transformer_forward.37} parent=0 // pred_check_branch
    %182 = sbr.rel (0) target = $region37
  $region36: #{transformer_forward.37} parent=0 // pred_region
    _
  $region37: #{transformer_forward.37} parent=0 // pred_fallthru
    _
  // Predicated region
  $region38: #{transformer_forward.37} parent=0 // pred_check
    _
  $region39: #{transformer_forward.37} parent=0 // pred_check_branch
    %184 = sbr.rel (0) target = $region41
  $region40: #{transformer_forward.37} parent=0 // pred_region
    _
  $region41: #{transformer_forward.37} parent=0 // pred_fallthru
    _

// kernel: transformer_forward.39
$region0: #{transformer_forward.39}
  #allocation0 [shape = 'u32[]', space=smem, size = 0x4, offset = 0x4, fixed_abs, tag = 'smem constant byte address 0x4 - core index']
  #allocation1 [shape = 'u32[144,128]{1,0:T(1,128)}', space=vmem, size = 0x12000, scoped, tag = 'internal scratch']
  %s0 = inlined_call_operand.vmem [shape: bf16[2,4,8,8], index: 0, kind: input, shape index: {}]
  %s1 = inlined_call_operand.vmem [shape: bf16[2,4,10,8], index: 1, kind: input, shape index: {}]
  %s2 = inlined_call_operand.vmem [shape: bf16[2,4,10,8], index: 2, kind: input, shape index: {}]
  %s3 = inlined_call_operand.vmem [shape: f32[2,1,10], index: 3, kind: input, shape index: {}]
  %s4 = inlined_call_operand.vmem [shape: bf16[2,4,8,8], index: 4, kind: output, shape index: {}]
  %s5 = sld [smem:[#allocation0]]
  $region49: #{transformer_forward.39} parent=0
    _
  %s7 = ssub.s32 1, %s5
  %s8 = scalar_select 0, %s7, %s5
  loop: start=0, step=1, limit=10
  $region2: #{transformer_forward.39} parent=0 // loop_pre_header
    _
  $region3: #{transformer_forward.39} parent=0 // loop_header
    %s10 = sphi 0, %s14
    %p11 = scmp.ge.s32.totalorder %s10, 10
    %s17 = sphi 0, %s29
    %s18 = sphi 0, %s25
    %s19 = sphi 0, %s17
    %s20 = sphi 0, %s18
    %s21 = sphi 0, %s19
    %s22 = sphi 0, %s20
    %s34 = sphi 0, %s36
    %s37 = sphi 0, %s34
    %s38 = sphi 0, %s37
    %s54 = sphi 0, %s38
    %s62 = sphi 0, %s64
    %s65 = sphi 0, %s62
    %s66 = sphi 0, %s65
    %s82 = sphi 0, %s66
    %s90 = sphi 0, %s92
    %s93 = sphi 0, %s90
    %s94 = sphi 0, %s93
    %s110 = sphi 0, %s94
    %s116 = sphi 0, %s118
    %s119 = sphi 0, %s116
    %s120 = sphi 0, %s119
    %s136 = sphi 0, %s120
    %s144 = sphi 0, %s146
    %s147 = sphi 0, %s144
    %s148 = sphi 0, %s147
    %s164 = sphi 0, %s148
  $region4: #{transformer_forward.39} parent=0 // loop_header_branch
    %13 = sbr.rel (%p11) target = $region8
  $region5: #{transformer_forward.39} parent=0 // loop_body
    %s15 = ssub.s32 %s10, 1
    %s16 = ssub.s32 %s10, 2
    %s23 = sadd.s32 1, %s18
    %p24 = scmp.ge.s32.totalorder %s23, 4
    %s25 = scalar_select %p24, 0, %s23
    %s26 = sadd.s32 1, %s17
    %s27 = scalar_select %p24, %s26, %s17
    %p28 = scmp.ge.s32.totalorder %s27, 2
    %s29 = scalar_select %p28, 0, %s27
    %s30 = ssub.s32 %s17, %s29
    %s31 = ssub.s32 %s18, %s25
    %s32 = sor.u32 %s30, %s31
    %p33 = scmp.eq.s32.totalorder %s32, 0
    %s35 = sadd.s32 %s34, 1
    %s36 = scalar_select %p33, %s34, %s35
    %p39 = pneg %p33
    %p40 = scmp.eq.s32.totalorder %s10, 7
    %p41 = por %p39, %p40
    %p42 = scmp.ne.s32.totalorder %s34, %s37
    %p43 = scmp.eq.s32.totalorder %s10, 0
    %p44 = por %p42, %p43
    %p45 = scmp.ne.s32.totalorder %s34, %s37
    %p46 = scmp.eq.s32.totalorder %s15, 7
    %p47 = por %p45, %p46
    %p48 = scmp.ne.s32.totalorder %s37, %s38
    %p49 = scmp.eq.s32.totalorder %s15, 0
    %p50 = por %p48, %p49
    %p51 = scmp.ne.s32.totalorder %s37, %s38
    %p52 = scmp.eq.s32.totalorder %s16, 7
    %p53 = por %p51, %p52
    %p55 = scmp.ne.s32.totalorder %s38, %s54
    %p56 = scmp.eq.s32.totalorder %s16, 0
    %p57 = por %p55, %p56
    %s58 = ssub.s32 %s17, %s29
    %s59 = ssub.s32 %s18, %s25
    %s60 = sor.u32 %s58, %s59
    %p61 = scmp.eq.s32.totalorder %s60, 0
    %s63 = sadd.s32 %s62, 1
    %s64 = scalar_select %p61, %s62, %s63
    %p67 = pneg %p61
    %p68 = scmp.eq.s32.totalorder %s10, 7
    %p69 = por %p67, %p68
    %p70 = scmp.ne.s32.totalorder %s62, %s65
    %p71 = scmp.eq.s32.totalorder %s10, 0
    %p72 = por %p70, %p71
    %p73 = scmp.ne.s32.totalorder %s62, %s65
    %p74 = scmp.eq.s32.totalorder %s15, 7
    %p75 = por %p73, %p74
    %p76 = scmp.ne.s32.totalorder %s65, %s66
    %p77 = scmp.eq.s32.totalorder %s15, 0
    %p78 = por %p76, %p77
    %p79 = scmp.ne.s32.totalorder %s65, %s66
    %p80 = scmp.eq.s32.totalorder %s16, 7
    %p81 = por %p79, %p80
    %p83 = scmp.ne.s32.totalorder %s66, %s82
    %p84 = scmp.eq.s32.totalorder %s16, 0
    %p85 = por %p83, %p84
    %s86 = ssub.s32 %s17, %s29
    %s87 = ssub.s32 %s18, %s25
    %s88 = sor.u32 %s86, %s87
    %p89 = scmp.eq.s32.totalorder %s88, 0
    %s91 = sadd.s32 %s90, 1
    %s92 = scalar_select %p89, %s90, %s91
    %p95 = pneg %p89
    %p96 = scmp.eq.s32.totalorder %s10, 7
    %p97 = por %p95, %p96
    %p98 = scmp.ne.s32.totalorder %s90, %s93
    %p99 = scmp.eq.s32.totalorder %s10, 0
    %p100 = por %p98, %p99
    %p101 = scmp.ne.s32.totalorder %s90, %s93
    %p102 = scmp.eq.s32.totalorder %s15, 7
    %p103 = por %p101, %p102
    %p104 = scmp.ne.s32.totalorder %s93, %s94
    %p105 = scmp.eq.s32.totalorder %s15, 0
    %p106 = por %p104, %p105
    %p107 = scmp.ne.s32.totalorder %s93, %s94
    %p108 = scmp.eq.s32.totalorder %s16, 7
    %p109 = por %p107, %p108
    %p111 = scmp.ne.s32.totalorder %s94, %s110
    %p112 = scmp.eq.s32.totalorder %s16, 0
    %p113 = por %p111, %p112
    %s114 = ssub.s32 %s17, %s29
    %p115 = scmp.eq.s32.totalorder %s114, 0
    %s117 = sadd.s32 %s116, 1
    %s118 = scalar_select %p115, %s116, %s117
    %p121 = pneg %p115
    %p122 = scmp.eq.s32.totalorder %s10, 7
    %p123 = por %p121, %p122
    %p124 = scmp.ne.s32.totalorder %s116, %s119
    %p125 = scmp.eq.s32.totalorder %s10, 0
    %p126 = por %p124, %p125
    %p127 = scmp.ne.s32.totalorder %s116, %s119
    %p128 = scmp.eq.s32.totalorder %s15, 7
    %p129 = por %p127, %p128
    %p130 = scmp.ne.s32.totalorder %s119, %s120
    %p131 = scmp.eq.s32.totalorder %s15, 0
    %p132 = por %p130, %p131
    %p133 = scmp.ne.s32.totalorder %s119, %s120
    %p134 = scmp.eq.s32.totalorder %s16, 7
    %p135 = por %p133, %p134
    %p137 = scmp.ne.s32.totalorder %s120, %s136
    %p138 = scmp.eq.s32.totalorder %s16, 0
    %p139 = por %p137, %p138
    %s140 = ssub.s32 %s17, %s29
    %s141 = ssub.s32 %s18, %s25
    %s142 = sor.u32 %s140, %s141
    %p143 = scmp.eq.s32.totalorder %s142, 0
    %s145 = sadd.s32 %s144, 1
    %s146 = scalar_select %p143, %s144, %s145
    %p149 = pneg %p143
    %p150 = scmp.eq.s32.totalorder %s10, 7
    %p151 = por %p149, %p150
    %p152 = scmp.ne.s32.totalorder %s144, %s147
    %p153 = scmp.eq.s32.totalorder %s10, 0
    %p154 = por %p152, %p153
    %p155 = scmp.ne.s32.totalorder %s144, %s147
    %p156 = scmp.eq.s32.totalorder %s15, 7
    %p157 = por %p155, %p156
    %p158 = scmp.ne.s32.totalorder %s147, %s148
    %p159 = scmp.eq.s32.totalorder %s15, 0
    %p160 = por %p158, %p159
    %p161 = scmp.ne.s32.totalorder %s147, %s148
    %p162 = scmp.eq.s32.totalorder %s16, 7
    %p163 = por %p161, %p162
    %p165 = scmp.ne.s32.totalorder %s148, %s164
    %p166 = scmp.eq.s32.totalorder %s16, 0
    %p167 = por %p165, %p166
    %p168 = scmp.le.s32.totalorder 1, %s10
    %p169 = scmp.lt.s32.totalorder %s10, 9
    %p170 = pnand %p168, %p169
    %p171 = pneg %p170
    // Predicated region
    $region9: #{transformer_forward.39} parent=5 // pred_check
      _
    $region10: #{transformer_forward.39} parent=5 // pred_check_branch
      %173 = sbr.rel (%p170) target = $region12
    $region11: #{transformer_forward.39} parent=5 // pred_region
      %s174 = ssub.s32 %s10, 1
    $region12: #{transformer_forward.39} parent=5 // pred_fallthru
      _
    %p175 = scmp.lt.s32.totalorder %s10, 8
    // Predicated region
    $region13: #{transformer_forward.39} parent=5 // pred_check
      %p176 = pneg %p175
    $region14: #{transformer_forward.39} parent=5 // pred_check_branch
      %178 = sbr.rel (%p176) target = $region16
    $region15: #{transformer_forward.39} parent=5 // pred_region
      // Predicated region
      $region17: #{transformer_forward.39} parent=15 // pred_check
        %p179 = pneg %p44
      $region18: #{transformer_forward.39} parent=15 // pred_check_branch
        %181 = sbr.rel (%p179) target = $region20
      $region19: #{transformer_forward.39} parent=15 // pred_region
        %p182 = scmp.lt.s32.totalorder %s17, 1
        %s183 = scalar_select %p182, %s17, 1
        %p184 = scmp.lt.s32.totalorder %s18, 3
        %s185 = scalar_select %p184, %s18, 3
        %s186 = smul.addr %s183, 4
        %s187 = sadd.s32 %s185, %s186
        %s188 = smul.addr %s187, 4
        %s189 = scalar_lea.vmem %s0, %s188
      $region20: #{transformer_forward.39} parent=15 // pred_fallthru
        _
      // Predicated region
      $region21: #{transformer_forward.39} parent=15 // pred_check
        %p190 = pneg %p72
      $region22: #{transformer_forward.39} parent=15 // pred_check_branch
        %192 = sbr.rel (%p190) target = $region24
      $region23: #{transformer_forward.39} parent=15 // pred_region
        %p193 = scmp.lt.s32.totalorder %s17, 1
        %s194 = scalar_select %p193, %s17, 1
        %p195 = scmp.lt.s32.totalorder %s18, 3
        %s196 = scalar_select %p195, %s18, 3
        %s197 = smul.addr %s196, 2
        %s198 = smul.addr %s194, 8
        %s199 = sadd.s32 %s197, %s198
        %s200 = smul.addr %s199, 4
        %s201 = scalar_lea.vmem %s1, %s200
      $region24: #{transformer_forward.39} parent=15 // pred_fallthru
        _
      // Predicated region
      $region25: #{transformer_forward.39} parent=15 // pred_check
        %p202 = pneg %p100
      $region26: #{transformer_forward.39} parent=15 // pred_check_branch
        %204 = sbr.rel (%p202) target = $region28
      $region27: #{transformer_forward.39} parent=15 // pred_region
        %p205 = scmp.lt.s32.totalorder %s17, 1
        %s206 = scalar_select %p205, %s17, 1
        %p207 = scmp.lt.s32.totalorder %s18, 3
        %s208 = scalar_select %p207, %s18, 3
        %s209 = smul.addr %s208, 2
        %s210 = smul.addr %s206, 8
        %s211 = sadd.s32 %s209, %s210
        %s212 = smul.addr %s211, 4
        %s213 = scalar_lea.vmem %s2, %s212
      $region28: #{transformer_forward.39} parent=15 // pred_fallthru
        _
      // Predicated region
      $region29: #{transformer_forward.39} parent=15 // pred_check
        %p214 = pneg %p126
      $region30: #{transformer_forward.39} parent=15 // pred_check_branch
        %216 = sbr.rel (%p214) target = $region32
      $region31: #{transformer_forward.39} parent=15 // pred_region
        %p217 = scmp.lt.s32.totalorder %s17, 1
        %s218 = scalar_select %p217, %s17, 1
        %s219 = scalar_lea.vmem %s3, %s218
      $region32: #{transformer_forward.39} parent=15 // pred_fallthru
        _
    $region16: #{transformer_forward.39} parent=5 // pred_fallthru
      _
    %p220 = scmp.le.s32.totalorder 1, %s10
    %p221 = scmp.lt.s32.totalorder %s10, 9
    %p222 = pnand %p220, %p221
    %p223 = pneg %p222
    // Predicated region
    $region33: #{transformer_forward.39} parent=5 // pred_check
      _
    $region34: #{transformer_forward.39} parent=5 // pred_check_branch
      %225 = sbr.rel (%p222) target = $region36
    $region35: #{transformer_forward.39} parent=5 // pred_region
      %s226 = ssub.s32 %s10, 1
      %p227 = scmp.lt.s32.totalorder %s19, 1
      %s228 = scalar_select %p227, %s19, 1
      %p229 = scmp.lt.s32.totalorder %s20, 3
      %s230 = scalar_select %p229, %s20, 3
      %s231 = smul.addr %s228, 4
      %s232 = sadd.s32 %s230, %s231
      %s233 = smul.addr %s232, 4
      %s234 = scalar_lea.vmem %s0, %s233
      %p235 = pneg %p50
      %p236 = pneg %p47
      %p237 = scmp.lt.s32.totalorder %s19, 1
      %s238 = scalar_select %p237, %s19, 1
      %p239 = scmp.lt.s32.totalorder %s20, 3
      %s240 = scalar_select %p239, %s20, 3
      %s241 = smul.addr %s240, 2
      %s242 = smul.addr %s238, 8
      %s243 = sadd.s32 %s241, %s242
      %s244 = smul.addr %s243, 4
      %s245 = scalar_lea.vmem %s1, %s244
      %p246 = pneg %p78
      %p247 = pneg %p75
      %p248 = scmp.lt.s32.totalorder %s19, 1
      %s249 = scalar_select %p248, %s19, 1
      %p250 = scmp.lt.s32.totalorder %s20, 3
      %s251 = scalar_select %p250, %s20, 3
      %s252 = smul.addr %s251, 2
      %s253 = smul.addr %s249, 8
      %s254 = sadd.s32 %s252, %s253
      %s255 = smul.addr %s254, 4
      %s256 = scalar_lea.vmem %s2, %s255
      %p257 = pneg %p106
      %p258 = pneg %p103
      %p259 = scmp.lt.s32.totalorder %s19, 1
      %s260 = scalar_select %p259, %s19, 1
      %s261 = scalar_lea.vmem %s3, %s260
      %p262 = pneg %p132
      %p263 = pneg %p129
      %p264 = pneg %p160
      %p265 = pneg %p157
      %p266 = scmp.lt.s32.totalorder %s19, 1
      %s267 = scalar_select %p266, %s19, 1
      %p268 = scmp.lt.s32.totalorder %s20, 3
      %s269 = scalar_select %p268, %s20, 3
      %s270 = smul.addr %s267, 4
      %s271 = sadd.s32 %s269, %s270
      %s272 = smul.addr %s271, 4
      %s273 = scalar_lea.vmem %s4, %s272
      %p274 = scmp.lt.s32.totalorder %s19, 1
      %s275 = scalar_select %p274, %s19, 1
      %p276 = scmp.lt.s32.totalorder %s20, 3
      %s277 = scalar_select %p276, %s20, 3
      %s278 = smul.addr %s275, 4
      %s279 = sadd.s32 %s277, %s278
      %s280 = smul.addr %s279, 4
      %s281 = scalar_lea.vmem %s0, %s280
      %p282 = scmp.lt.s32.totalorder %s19, 1
      %s283 = scalar_select %p282, %s19, 1
      %p284 = scmp.lt.s32.totalorder %s20, 3
      %s285 = scalar_select %p284, %s20, 3
      %s286 = smul.addr %s285, 2
      %s287 = smul.addr %s283, 8
      %s288 = sadd.s32 %s286, %s287
      %s289 = smul.addr %s288, 4
      %s290 = scalar_lea.vmem %s1, %s289
      %p291 = scmp.lt.s32.totalorder %s19, 1
      %s292 = scalar_select %p291, %s19, 1
      %p293 = scmp.lt.s32.totalorder %s20, 3
      %s294 = scalar_select %p293, %s20, 3
      %s295 = smul.addr %s294, 2
      %s296 = smul.addr %s292, 8
      %s297 = sadd.s32 %s295, %s296
      %s298 = smul.addr %s297, 4
      %s299 = scalar_lea.vmem %s2, %s298
      %p300 = scmp.lt.s32.totalorder %s19, 1
      %s301 = scalar_select %p300, %s19, 1
      %s302 = scalar_lea.vmem %s3, %s301
      %p303 = scmp.lt.s32.totalorder %s19, 1
      %s304 = scalar_select %p303, %s19, 1
      %p305 = scmp.lt.s32.totalorder %s20, 3
      %s306 = scalar_select %p305, %s20, 3
      %s307 = smul.addr %s304, 4
      %s308 = sadd.s32 %s306, %s307
      %s309 = smul.addr %s308, 4
      %s310 = scalar_lea.vmem %s4, %s309
      %v312 = vld [vmem:[%s281] sm:$0xf]
      %v313 = vld [vmem:[%s290] sm:$0xf]
      %v314 = vld [vmem:[%s290 + $0x4] sm:$0x1]
      %v315 = vld [vmem:[%s299] sm:$0xf]
      %v316 = vld [vmem:[%s299 + $0x4] sm:$0x1]
      %v319 = vunpack.c.l.b16 %v313
      %v320 = vunpack.c.l.b16 %v314
      %v321 = vpack.c.b16 %v320, %v319
      %vm322 = vcmask 64512
      %v324 = vsel %vm322, %v312, 0
      %v327 = vsel %vm322, %v321, 0
      %329 = vmatprep.subr.bf16.mxu0 0
      %330 = vmatpush1.bf16.xpose.msra.mxu0 %v327
      %331 = vmatprep.subr.bf16.mxu0 0
      %332 = vmatpush1.bf16.xpose.msra.mxu0 0
      %333 = vmatprep.subr.bf16.mxu0 0
      %334 = vmatpush1.bf16.xpose.msra.mxu0 0
      %335 = vmatprep.subr.bf16.mxu0 0
      %336 = vmatpush1.bf16.xpose.msra.mxu0 0
      %337 = vmatprep.subr.bf16.mxu0 0
      %338 = vmatpush1.bf16.xpose.msra.mxu0 0
      %339 = vmatprep.subr.bf16.mxu0 0
      %340 = vmatpush1.bf16.xpose.msra.mxu0 0
      %341 = vmatprep.subr.bf16.mxu0 0
      %342 = vmatpush1.bf16.xpose.msra.mxu0 0
      %343 = vmatprep.subr.bf16.mxu0 0
      %344 = vmatpush1.bf16.xpose.msra.mxu0 0
      %345 = vmatprep.subr.bf16.mxu0 0
      %346 = vmatpush1.bf16.xpose.msra.mxu0 0
      %347 = vmatprep.subr.bf16.mxu0 0
      %348 = vmatpush1.bf16.xpose.msra.mxu0 0
      %349 = vmatprep.subr.bf16.mxu0 0
      %350 = vmatpush1.bf16.xpose.msra.mxu0 0
      %351 = vmatprep.subr.bf16.mxu0 0
      %352 = vmatpush1.bf16.xpose.msra.mxu0 0
      %353 = vmatprep.subr.bf16.mxu0 0
      %354 = vmatpush1.bf16.xpose.msra.mxu0 0
      %355 = vmatprep.subr.bf16.mxu0 0
      %356 = vmatpush1.bf16.xpose.msra.mxu0 0
      %357 = vmatprep.subr.bf16.mxu0 0
      %358 = vmatpush1.bf16.xpose.msra.mxu0 0
      %359 = vmatprep.subr.bf16.mxu0 0
      %360 = vmatpush1.bf16.xpose.msra.mxu0 0
      %361 = vmatprep.mubr.bf16.mxu0 0
      %362 = vmatmul.mubr.bf16.gmra.mrb[0].mxu0 %v324
      %v363 = vpop.f32.mrb[0].mxu0
      %v364 = vadd.f32 0.0, %v363
      %v365 = vpop.f32.mrb[0].mxu0
      %v366 = vpop.f32.mrb[0].mxu0
      %v367 = vpop.f32.mrb[0].mxu0
      %368 = vdwg.mxu0
      %v369 = vmul.f32 %v364, 0.35355338
      %v370 = vld [vmem:[%s302] sm:$0x1]
      %v372 = vlaneseq
      %v373 = vshrl.u32 %v372, 7
      %v374 = vsub.s32 0, %v373
      %v375 = vrot.slane %v370, %v374
      %v377 = vadd.f32 %v369, %v375
      %vm378 = vcmask 80896
      %v379 = vsel %vm378, %v377, -inf
      %380 = vmax.xlane.f32.xlu0 %v379
      %v381 = vpop.xlane.xlu0 %380
      %v382 = vsub.f32 %v377, %v381
      %v383 = vmul.f32 %v382, 1.442695
      %v384 = vpow.pop %v383
      %v385 = vsel %vm378, %v384, 0.0
      %386 = vadd.xlane.f32.xlu0 %v385
      %v387 = vpop.xlane.xlu0 %386
      %v388 = vrcp.pop %v387
      %v389 = vmul.f32 %v384, %v388
      %v390 = vpack.c.bf16 %v389, %v389
      %v393 = vunpack.c.l.b16 %v315
      %v394 = vunpack.c.l.b16 %v316
      %v395 = vpack.c.b16 %v394, %v393
      %v397 = vsel %vm378, %v390, 0
      %vm399 = vcmask 1044480
      %v401 = vsel %vm399, %v395, 0
      %403 = vmatprep.subr.bf16.mxu0 0
      %404 = vmatpush1.bf16.msra.mxu0 %v401
      %405 = vmatprep.subr.bf16.mxu0 0
      %406 = vmatpush1.bf16.msra.mxu0 0
      %407 = vmatprep.subr.bf16.mxu0 0
      %408 = vmatpush1.bf16.msra.mxu0 0
      %409 = vmatprep.subr.bf16.mxu0 0
      %410 = vmatpush1.bf16.msra.mxu0 0
      %411 = vmatprep.subr.bf16.mxu0 0
      %412 = vmatpush1.bf16.msra.mxu0 0
      %413 = vmatprep.subr.bf16.mxu0 0
      %414 = vmatpush1.bf16.msra.mxu0 0
      %415 = vmatprep.subr.bf16.mxu0 0
      %416 = vmatpush1.bf16.msra.mxu0 0
      %417 = vmatprep.subr.bf16.mxu0 0
      %418 = vmatpush1.bf16.msra.mxu0 0
      %419 = vmatprep.subr.bf16.mxu0 0
      %420 = vmatpush1.bf16.msra.mxu0 0
      %421 = vmatprep.subr.bf16.mxu0 0
      %422 = vmatpush1.bf16.msra.mxu0 0
      %423 = vmatprep.subr.bf16.mxu0 0
      %424 = vmatpush1.bf16.msra.mxu0 0
      %425 = vmatprep.subr.bf16.mxu0 0
      %426 = vmatpush1.bf16.msra.mxu0 0
      %427 = vmatprep.subr.bf16.mxu0 0
      %428 = vmatpush1.bf16.msra.mxu0 0
      %429 = vmatprep.subr.bf16.mxu0 0
      %430 = vmatpush1.bf16.msra.mxu0 0
      %431 = vmatprep.subr.bf16.mxu0 0
      %432 = vmatpush1.bf16.msra.mxu0 0
      %433 = vmatprep.subr.bf16.mxu0 0
      %434 = vmatpush1.bf16.msra.mxu0 0
      %435 = vmatprep.mubr.bf16.mxu0 0
      %436 = vmatmul.mubr.bf16.gmra.mrb[0].mxu0 %v397
      %v437 = vpop.f32.mrb[0].mxu0
      %v438 = vadd.f32 0.0, %v437
      %v439 = vpop.f32.mrb[0].mxu0
      %v440 = vpop.f32.mrb[0].mxu0
      %v441 = vpop.f32.mrb[0].mxu0
      %442 = vdwg.mxu0
      %v443 = vpack.c.bf16 %v438, %v438
      %vm444 = vcmask 60416
      %445 = vst.msk [vmem:[%s310] sm:$0xf] %vm444, %v443
      %p446 = scmp.lt.s32.totalorder %s19, 1
      %s447 = scalar_select %p446, %s19, 1
      %p448 = scmp.lt.s32.totalorder %s20, 3
      %s449 = scalar_select %p448, %s20, 3
      %s450 = smul.addr %s447, 4
      %s451 = sadd.s32 %s449, %s450
      %s452 = smul.addr %s451, 4
      %s453 = scalar_lea.vmem %s4, %s452
      // Predicated region
      $region37: #{transformer_forward.39} parent=35 // pred_check
        %p454 = pneg %p157
      $region38: #{transformer_forward.39} parent=35 // pred_check_branch
        %456 = sbr.rel (%p454) target = $region40
      $region39: #{transformer_forward.39} parent=35 // pred_region
        _
      $region40: #{transformer_forward.39} parent=35 // pred_fallthru
        _
    $region36: #{transformer_forward.39} parent=5 // pred_fallthru
      _
    %p457 = scmp.le.s32.totalorder 2, %s10
    // Predicated region
    $region41: #{transformer_forward.39} parent=5 // pred_check
      %p458 = pneg %p457
    $region42: #{transformer_forward.39} parent=5 // pred_check_branch
      %460 = sbr.rel (%p458) target = $region44
    $region43: #{transformer_forward.39} parent=5 // pred_region
      %s461 = ssub.s32 %s10, 2
      // Predicated region
      $region45: #{transformer_forward.39} parent=43 // pred_check
        %p462 = pneg %p163
      $region46: #{transformer_forward.39} parent=43 // pred_check_branch
        %464 = sbr.rel (%p462) target = $region48
      $region47: #{transformer_forward.39} parent=43 // pred_region
        %p465 = scmp.lt.s32.totalorder %s21, 1
        %s466 = scalar_select %p465, %s21, 1
        %p467 = scmp.lt.s32.totalorder %s22, 3
        %s468 = scalar_select %p467, %s22, 3
        %s469 = smul.addr %s466, 4
        %s470 = sadd.s32 %s468, %s469
        %s471 = smul.addr %s470, 4
        %s472 = scalar_lea.vmem %s4, %s471
      $region48: #{transformer_forward.39} parent=43 // pred_fallthru
        _
    $region44: #{transformer_forward.39} parent=5 // pred_fallthru
      _
  $region6: #{transformer_forward.39} parent=0 // loop_footer
    %s14 = sadd.s32 1, %s10
  $region7: #{transformer_forward.39} parent=0 // loop_footer_branch
    %9 = sbr.rel target = $region3
  $region8: #{transformer_forward.39} parent=0 // loop_exit
    _

// kernel: transformer_forward.50
$region0: #{transformer_forward.50}
  #allocation0 [shape = 'u32[]', space=smem, size = 0x4, offset = 0x4, fixed_abs, tag = 'smem constant byte address 0x4 - core index']
  #allocation1 [shape = 'u32[144,128]{1,0:T(1,128)}', space=vmem, size = 0x12000, scoped, tag = 'internal scratch']
  %s0 = inlined_call_operand.vmem [shape: bf16[16,16], index: 0, kind: input, shape index: {}]
  %s1 = inlined_call_operand.vmem [shape: f32[1,16], index: 1, kind: input, shape index: {}]
  %s2 = inlined_call_operand.vmem [shape: f32[1,16], index: 2, kind: input, shape index: {}]
  %s3 = inlined_call_operand.vmem [shape: bf16[16,16], index: 3, kind: output, shape index: {}]
  %s4 = sld [smem:[#allocation0]]
  $region22: #{transformer_forward.50} parent=0
    _
  %s6 = ssub.s32 1, %s4
  %s7 = scalar_select 0, %s6, %s4
  // Predicated region
  $region2: #{transformer_forward.50} parent=0 // pred_check
    _
  $region3: #{transformer_forward.50} parent=0 // pred_check_branch
    %9 = sbr.rel (0) target = $region5
  $region4: #{transformer_forward.50} parent=0 // pred_region
    _
  $region5: #{transformer_forward.50} parent=0 // pred_fallthru
    _
  // Predicated region
  $region6: #{transformer_forward.50} parent=0 // pred_check
    _
  $region7: #{transformer_forward.50} parent=0 // pred_check_branch
    %11 = sbr.rel (0) target = $region9
  $region8: #{transformer_forward.50} parent=0 // pred_region
    _
  $region9: #{transformer_forward.50} parent=0 // pred_fallthru
    _
  // Predicated region
  $region10: #{transformer_forward.50} parent=0 // pred_check
    _
  $region11: #{transformer_forward.50} parent=0 // pred_check_branch
    %13 = sbr.rel (0) target = $region13
  $region12: #{transformer_forward.50} parent=0 // pred_region
    _
  $region13: #{transformer_forward.50} parent=0 // pred_fallthru
    _
  %v14 = vld [vmem:[%s0] sm:$0xf]
  %v15 = vld [vmem:[%s0 + $0x4] sm:$0xf]
  %v16 = vunpack.c.l.bf16 %v14
  %v17 = vunpack.c.l.bf16 %v15
  %vm18 = vcmask 130048
  %v19 = vsel %vm18, %v16, 0.0
  %20 = vadd.xlane.f32.xlu0 %v19
  %v21 = vpop.xlane.xlu0 %20
  %v22 = vsel %vm18, %v17, 0.0
  %23 = vadd.xlane.f32.xlu0 %v22
  %v24 = vpop.xlane.xlu0 %23
  %v25 = vrcp.pop 16.0
  %v26 = vmul.f32 %v21, %v25
  %v27 = vmul.f32 %v24, %v25
  %v28 = vsub.f32 %v16, %v26
  %v29 = vsub.f32 %v17, %v27
  %v30 = vmul.f32 %v28, %v28
  %v31 = vmul.f32 %v29, %v29
  %v32 = vsel %vm18, %v30, 0.0
  %33 = vadd.xlane.f32.xlu0 %v32
  %v34 = vpop.xlane.xlu0 %33
  %v35 = vsel %vm18, %v31, 0.0
  %36 = vadd.xlane.f32.xlu0 %v35
  %v37 = vpop.xlane.xlu0 %36
  %v38 = vmul.f32 %v34, %v25
  %v39 = vmul.f32 %v37, %v25
  %v40 = vadd.f32 %v38, 1e-05
  %v41 = vadd.f32 %v39, 1e-05
  %v42 = vrsqrt.pop %v40
  %v43 = vrsqrt.pop %v41
  %v44 = vmul.f32 %v28, %v42
  %v45 = vmul.f32 %v29, %v43
  %v46 = vld [vmem:[%s1] sm:$0x1]
  %v48 = vlaneseq
  %v49 = vshrl.u32 %v48, 7
  %v50 = vsub.s32 0, %v49
  %v51 = vrot.slane %v46, %v50
  %v53 = vmul.f32 %v44, %v51
  %v54 = vmul.f32 %v45, %v51
  %v55 = vld [vmem:[%s2] sm:$0x1]
  %v57 = vlaneseq
  %v58 = vshrl.u32 %v57, 7
  %v59 = vsub.s32 0, %v58
  %v60 = vrot.slane %v55, %v59
  %v62 = vadd.f32 %v53, %v60
  %v63 = vadd.f32 %v54, %v60
  %v64 = vpack.c.bf16 %v63, %v62
  %v66 = vunpack.c.l.b16 %v64
  %v67 = vunpack.c.h.b16 %v64
  %v68 = vpack.c.b16 %v66, %v66
  %v69 = vpack.c.b16 %v67, %v67
  %vm72 = vcmask 125952
  %73 = vst.msk [vmem:[%s3] sm:$0xf] %vm72, %v68
  %74 = vst.msk [vmem:[%s3 + $0x4] sm:$0xf] %vm72, %v69
  // Predicated region
  $region14: #{transformer_forward.50} parent=0 // pred_check
    _
  $region15: #{transformer_forward.50} parent=0 // pred_check_branch
    %76 = sbr.rel (0) target = $region17
  $region16: #{transformer_forward.50} parent=0 // pred_region
    _
  $region17: #{transformer_forward.50} parent=0 // pred_fallthru
    _
  // Predicated region
  $region18: #{transformer_forward.50} parent=0 // pred_check
    _
  $region19: #{transformer_forward.50} parent=0 // pred_check_branch
    %78 = sbr.rel (0) target = $region21
  $region20: #{transformer_forward.50} parent=0 // pred_region
    _
  $region21: #{transformer_forward.50} parent=0 // pred_fallthru
    _

// kernel: transformer_forward.41
$region0: #{transformer_forward.41}
  #allocation0 [shape = 'u32[]', space=smem, size = 0x4, offset = 0x4, fixed_abs, tag = 'smem constant byte address 0x4 - core index']
  #allocation1 [shape = 'u32[144,128]{1,0:T(1,128)}', space=vmem, size = 0x12000, scoped, tag = 'internal scratch']
  %s0 = inlined_call_operand.vmem [shape: bf16[16,32], index: 0, kind: input, shape index: {}]
  %s1 = inlined_call_operand.vmem [shape: bf16[32,64], index: 1, kind: input, shape index: {}]
  %s2 = inlined_call_operand.vmem [shape: f32[1,64], index: 2, kind: input, shape index: {}]
  %s3 = inlined_call_operand.vmem [shape: bf16[64,32], index: 3, kind: input, shape index: {}]
  %s4 = inlined_call_operand.vmem [shape: f32[1,32], index: 4, kind: input, shape index: {}]
  %s5 = inlined_call_operand.vmem [shape: f32[1,32], index: 5, kind: input, shape index: {}]
  %s6 = inlined_call_operand.vmem [shape: f32[1,32], index: 6, kind: input, shape index: {}]
  %s7 = inlined_call_operand.vmem [shape: bf16[16,32], index: 7, kind: output, shape index: {}]
  %s8 = sld [smem:[#allocation0]]
  $region38: #{transformer_forward.41} parent=0
    _
  %s10 = ssub.s32 1, %s8
  %s11 = scalar_select 0, %s10, %s8
  // Predicated region
  $region2: #{transformer_forward.41} parent=0 // pred_check
    _
  $region3: #{transformer_forward.41} parent=0 // pred_check_branch
    %13 = sbr.rel (0) target = $region5
  $region4: #{transformer_forward.41} parent=0 // pred_region
    _
  $region5: #{transformer_forward.41} parent=0 // pred_fallthru
    _
  // Predicated region
  $region6: #{transformer_forward.41} parent=0 // pred_check
    _
  $region7: #{transformer_forward.41} parent=0 // pred_check_branch
    %15 = sbr.rel (0) target = $region9
  $region8: #{transformer_forward.41} parent=0 // pred_region
    _
  $region9: #{transformer_forward.41} parent=0 // pred_fallthru
    _
  // Predicated region
  $region10: #{transformer_forward.41} parent=0 // pred_check
    _
  $region11: #{transformer_forward.41} parent=0 // pred_check_branch
    %17 = sbr.rel (0) target = $region13
  $region12: #{transformer_forward.41} parent=0 // pred_region
    _
  $region13: #{transformer_forward.41} parent=0 // pred_fallthru
    _
  // Predicated region
  $region14: #{transformer_forward.41} parent=0 // pred_check
    _
  $region15: #{transformer_forward.41} parent=0 // pred_check_branch
    %19 = sbr.rel (0) target = $region17
  $region16: #{transformer_forward.41} parent=0 // pred_region
    _
  $region17: #{transformer_forward.41} parent=0 // pred_fallthru
    _
  // Predicated region
  $region18: #{transformer_forward.41} parent=0 // pred_check
    _
  $region19: #{transformer_forward.41} parent=0 // pred_check_branch
    %21 = sbr.rel (0) target = $region21
  $region20: #{transformer_forward.41} parent=0 // pred_region
    _
  $region21: #{transformer_forward.41} parent=0 // pred_fallthru
    _
  // Predicated region
  $region22: #{transformer_forward.41} parent=0 // pred_check
    _
  $region23: #{transformer_forward.41} parent=0 // pred_check_branch
    %23 = sbr.rel (0) target = $region25
  $region24: #{transformer_forward.41} parent=0 // pred_region
    _
  $region25: #{transformer_forward.41} parent=0 // pred_fallthru
    _
  // Predicated region
  $region26: #{transformer_forward.41} parent=0 // pred_check
    _
  $region27: #{transformer_forward.41} parent=0 // pred_check_branch
    %25 = sbr.rel (0) target = $region29
  $region28: #{transformer_forward.41} parent=0 // pred_region
    _
  $region29: #{transformer_forward.41} parent=0 // pred_fallthru
    _
  %v27 = vld [vmem:[%s0] sm:$0xf]
  %v28 = vld [vmem:[%s0 + $0x4] sm:$0xf]
  %v29 = vld [vmem:[%s1] sm:$0xf]
  %v30 = vld [vmem:[%s1 + $0x4] sm:$0xf]
  %v31 = vld [vmem:[%s1 + $0x8] sm:$0xf]
  %v32 = vld [vmem:[%s1 + $0xc] sm:$0xf]
  %v33 = vld [vmem:[%s2] sm:$0x1]
  %v35 = vlaneseq
  %v36 = vshrl.u32 %v35, 7
  %v37 = vsub.s32 0, %v36
  %v38 = vrot.slane %v33, %v37
  %v42 = vunpack.c.l.b16 %v27
  %v43 = vunpack.c.l.b16 %v28
  %v44 = vpack.c.b16 %v43, %v42
  %v49 = vunpack.c.l.b16 %v29
  %v50 = vunpack.c.l.b16 %v30
  %v51 = vunpack.c.l.b16 %v31
  %v52 = vunpack.c.l.b16 %v32
  %v53 = vpack.c.b16 %v50, %v49
  %v54 = vpack.c.b16 %v52, %v51
  %vm57 = vcmask 261120
  %v59 = vsel %vm57, %v44, 0
  %61 = vmatprep.subr.bf16.mxu0 0
  %62 = vmatpush1.bf16.msra.mxu0 %v53
  %63 = vmatprep.subr.bf16.mxu0 0
  %64 = vmatpush1.bf16.msra.mxu0 %v54
  %65 = vmatprep.subr.bf16.mxu0 0
  %66 = vmatpush1.bf16.msra.mxu0 0
  %67 = vmatprep.subr.bf16.mxu0 0
  %68 = vmatpush1.bf16.msra.mxu0 0
  %69 = vmatprep.subr.bf16.mxu0 0
  %70 = vmatpush1.bf16.msra.mxu0 0
  %71 = vmatprep.subr.bf16.mxu0 0
  %72 = vmatpush1.bf16.msra.mxu0 0
  %73 = vmatprep.subr.bf16.mxu0 0
  %74 = vmatpush1.bf16.msra.mxu0 0
  %75 = vmatprep.subr.bf16.mxu0 0
  %76 = vmatpush1.bf16.msra.mxu0 0
  %77 = vmatprep.subr.bf16.mxu0 0
  %78 = vmatpush1.bf16.msra.mxu0 0
  %79 = vmatprep.subr.bf16.mxu0 0
  %80 = vmatpush1.bf16.msra.mxu0 0
  %81 = vmatprep.subr.bf16.mxu0 0
  %82 = vmatpush1.bf16.msra.mxu0 0
  %83 = vmatprep.subr.bf16.mxu0 0
  %84 = vmatpush1.bf16.msra.mxu0 0
  %85 = vmatprep.subr.bf16.mxu0 0
  %86 = vmatpush1.bf16.msra.mxu0 0
  %87 = vmatprep.subr.bf16.mxu0 0
  %88 = vmatpush1.bf16.msra.mxu0 0
  %89 = vmatprep.subr.bf16.mxu0 0
  %90 = vmatpush1.bf16.msra.mxu0 0
  %91 = vmatprep.subr.bf16.mxu0 0
  %92 = vmatpush1.bf16.msra.mxu0 0
  %93 = vmatprep.mubr.bf16.mxu0 0
  %94 = vmatmul.mubr.bf16.gmra.mrb[0].mxu0 %v59
  %v95 = vpop.f32.mrb[0].mxu0
  %v96 = vadd.f32 %v38, %v95
  %v97 = vpop.f32.mrb[0].mxu0
  %v98 = vpop.f32.mrb[0].mxu0
  %v99 = vadd.f32 %v38, %v98
  %v100 = vpop.f32.mrb[0].mxu0
  %101 = vdwg.mxu0
  %v102 = vmul.f32 %v96, 0.5
  %v103 = vmul.f32 %v99, 0.5
  %v104 = vmul.f32 %v96, 0.70710677
  %v105 = vmul.f32 %v99, 0.70710677
  %v106 = verf.f32.pop %v104
  %v107 = verf.f32.pop %v105
  %v108 = vadd.f32 %v106, 1.0
  %v109 = vadd.f32 %v107, 1.0
  %v110 = vmul.f32 %v102, %v108
  %v111 = vmul.f32 %v103, %v109
  %v112 = vpack.c.bf16 %v111, %v110
  %v113 = vld [vmem:[%s3] sm:$0xf]
  %v114 = vld [vmem:[%s3 + $0x4] sm:$0xf]
  %v115 = vld [vmem:[%s3 + $0x8] sm:$0xf]
  %v116 = vld [vmem:[%s3 + $0xc] sm:$0xf]
  %v117 = vld [vmem:[%s3 + $0x10] sm:$0xf]
  %v118 = vld [vmem:[%s3 + $0x14] sm:$0xf]
  %v119 = vld [vmem:[%s3 + $0x18] sm:$0xf]
  %v120 = vld [vmem:[%s3 + $0x1c] sm:$0xf]
  %v121 = vld [vmem:[%s4] sm:$0x1]
  %v123 = vlaneseq
  %v124 = vshrl.u32 %v123, 7
  %v125 = vsub.s32 0, %v124
  %v126 = vrot.slane %v121, %v125
  %v136 = vunpack.c.l.b16 %v113
  %v137 = vunpack.c.l.b16 %v114
  %v138 = vunpack.c.l.b16 %v115
  %v139 = vunpack.c.l.b16 %v116
  %v140 = vunpack.c.l.b16 %v117
  %v141 = vunpack.c.l.b16 %v118
  %v142 = vunpack.c.l.b16 %v119
  %v143 = vunpack.c.l.b16 %v120
  %v144 = vpack.c.b16 %v137, %v136
  %v145 = vpack.c.b16 %v139, %v138
  %v146 = vpack.c.b16 %v141, %v140
  %v147 = vpack.c.b16 %v143, %v142
  %vm152 = vcmask 523264
  %v154 = vsel %vm152, %v112, 0
  %156 = vmatprep.subr.bf16.mxu0 0
  %157 = vmatpush1.bf16.msra.mxu0 %v144
  %158 = vmatprep.subr.bf16.mxu0 0
  %159 = vmatpush1.bf16.msra.mxu0 %v145
  %160 = vmatprep.subr.bf16.mxu0 0
  %161 = vmatpush1.bf16.msra.mxu0 %v146
  %162 = vmatprep.subr.bf16.mxu0 0
  %163 = vmatpush1.bf16.msra.mxu0 %v147
  %164 = vmatprep.subr.bf16.mxu0 0
  %165 = vmatpush1.bf16.msra.mxu0 0
  %166 = vmatprep.subr.bf16.mxu0 0
  %167 = vmatpush1.bf16.msra.mxu0 0
  %168 = vmatprep.subr.bf16.mxu0 0
  %169 = vmatpush1.bf16.msra.mxu0 0
  %170 = vmatprep.subr.bf16.mxu0 0
  %171 = vmatpush1.bf16.msra.mxu0 0
  %172 = vmatprep.subr.bf16.mxu0 0
  %173 = vmatpush1.bf16.msra.mxu0 0
  %174 = vmatprep.subr.bf16.mxu0 0
  %175 = vmatpush1.bf16.msra.mxu0 0
  %176 = vmatprep.subr.bf16.mxu0 0
  %177 = vmatpush1.bf16.msra.mxu0 0
  %178 = vmatprep.subr.bf16.mxu0 0
  %179 = vmatpush1.bf16.msra.mxu0 0
  %180 = vmatprep.subr.bf16.mxu0 0
  %181 = vmatpush1.bf16.msra.mxu0 0
  %182 = vmatprep.subr.bf16.mxu0 0
  %183 = vmatpush1.bf16.msra.mxu0 0
  %184 = vmatprep.subr.bf16.mxu0 0
  %185 = vmatpush1.bf16.msra.mxu0 0
  %186 = vmatprep.subr.bf16.mxu0 0
  %187 = vmatpush1.bf16.msra.mxu0 0
  %188 = vmatprep.mubr.bf16.mxu0 0
  %189 = vmatmul.mubr.bf16.gmra.mrb[0].mxu0 %v154
  %v190 = vpop.f32.mrb[0].mxu0
  %v191 = vadd.f32 %v126, %v190
  %v192 = vpop.f32.mrb[0].mxu0
  %v193 = vpop.f32.mrb[0].mxu0
  %v194 = vadd.f32 %v126, %v193
  %v195 = vpop.f32.mrb[0].mxu0
  %196 = vdwg.mxu0
  %v197 = vunpack.c.l.bf16 %v27
  %v198 = vunpack.c.l.bf16 %v28
  %v199 = vadd.f32 %v191, %v197
  %v200 = vadd.f32 %v194, %v198
  %v201 = vsel %vm57, %v199, 0.0
  %202 = vadd.xlane.f32.xlu0 %v201
  %v203 = vpop.xlane.xlu0 %202
  %v204 = vsel %vm57, %v200, 0.0
  %205 = vadd.xlane.f32.xlu0 %v204
  %v206 = vpop.xlane.xlu0 %205
  %v207 = vrcp.pop 32.0
  %v208 = vmul.f32 %v203, %v207
  %v209 = vmul.f32 %v206, %v207
  %v210 = vsub.f32 %v199, %v208
  %v211 = vsub.f32 %v200, %v209
  %v212 = vmul.f32 %v210, %v210
  %v213 = vmul.f32 %v211, %v211
  %v214 = vsel %vm57, %v212, 0.0
  %215 = vadd.xlane.f32.xlu0 %v214
  %v216 = vpop.xlane.xlu0 %215
  %v217 = vsel %vm57, %v213, 0.0
  %218 = vadd.xlane.f32.xlu0 %v217
  %v219 = vpop.xlane.xlu0 %218
  %v220 = vmul.f32 %v216, %v207
  %v221 = vmul.f32 %v219, %v207
  %v222 = vadd.f32 %v220, 1e-05
  %v223 = vadd.f32 %v221, 1e-05
  %v224 = vrsqrt.pop %v222
  %v225 = vrsqrt.pop %v223
  %v226 = vmul.f32 %v210, %v224
  %v227 = vmul.f32 %v211, %v225
  %v228 = vld [vmem:[%s5] sm:$0x1]
  %v230 = vlaneseq
  %v231 = vshrl.u32 %v230, 7
  %v232 = vsub.s32 0, %v231
  %v233 = vrot.slane %v228, %v232
  %v235 = vmul.f32 %v226, %v233
  %v236 = vmul.f32 %v227, %v233
  %v237 = vld [vmem:[%s6] sm:$0x1]
  %v239 = vlaneseq
  %v240 = vshrl.u32 %v239, 7
  %v241 = vsub.s32 0, %v240
  %v242 = vrot.slane %v237, %v241
  %v244 = vadd.f32 %v235, %v242
  %v245 = vadd.f32 %v236, %v242
  %v246 = vpack.c.bf16 %v245, %v244
  %v248 = vunpack.c.l.b16 %v246
  %v249 = vunpack.c.h.b16 %v246
  %v250 = vpack.c.b16 %v248, %v248
  %v251 = vpack.c.b16 %v249, %v249
  %vm254 = vcmask 257024
  %255 = vst.msk [vmem:[%s7] sm:$0xf] %vm254, %v250
  %256 = vst.msk [vmem:[%s7 + $0x4] sm:$0xf] %vm254, %v251
  // Predicated region
  $region30: #{transformer_forward.41} parent=0 // pred_check
    _
  $region31: #{transformer_forward.41} parent=0 // pred_check_branch
    %258 = sbr.rel (0) target = $region33
  $region32: #{transformer_forward.41} parent=0 // pred_region
    _
  $region33: #{transformer_forward.41} parent=0 // pred_fallthru
    _
  // Predicated region
  $region34: #{transformer_forward.41} parent=0 // pred_check
    _
  $region35: #{transformer_forward.41} parent=0 // pred_check_branch
    %260 = sbr.rel (0) target = $region37
  $region36: #{transformer_forward.41} parent=0 // pred_region
    _
  $region37: #{transformer_forward.41} parent=0 // pred_fallthru
    _

// kernel: transformer_forward.49
$region0: #{transformer_forward.49}
  #allocation0 [shape = 'u32[]', space=smem, size = 0x4, offset = 0x4, fixed_abs, tag = 'smem constant byte address 0x4 - core index']
  #allocation1 [shape = 'u32[144,128]{1,0:T(1,128)}', space=vmem, size = 0x12000, scoped, tag = 'internal scratch']
  #allocation2 [shape = 'f32[16,16]{1,0:T(8,128)}', space=vmem, size = 0x2000, scoped, tag = 'scratch operand']
  %s0 = inlined_call_operand.vmem [shape: bf16[16,32], index: 0, kind: input, shape index: {}]
  %s1 = inlined_call_operand.vmem [shape: bf16[32,16], index: 1, kind: input, shape index: {}]
  %s2 = inlined_call_operand.vmem [shape: f32[1,16], index: 2, kind: input, shape index: {}]
  %s3 = inlined_call_operand.vmem [shape: bf16[16,16], index: 3, kind: output, shape index: {}]
  %s4 = sld [smem:[#allocation0]]
  $region30: #{transformer_forward.49} parent=0
    _
  %s6 = ssub.s32 1, %s4
  %s7 = scalar_select 0, %s6, %s4
  // Predicated region
  $region2: #{transformer_forward.49} parent=0 // pred_check
    _
  $region3: #{transformer_forward.49} parent=0 // pred_check_branch
    %9 = sbr.rel (0) target = $region5
  $region4: #{transformer_forward.49} parent=0 // pred_region
    _
  $region5: #{transformer_forward.49} parent=0 // pred_fallthru
    _
  // Predicated region
  $region6: #{transformer_forward.49} parent=0 // pred_check
    _
  $region7: #{transformer_forward.49} parent=0 // pred_check_branch
    %11 = sbr.rel (0) target = $region9
  $region8: #{transformer_forward.49} parent=0 // pred_region
    _
  $region9: #{transformer_forward.49} parent=0 // pred_fallthru
    _
  // Predicated region
  $region10: #{transformer_forward.49} parent=0 // pred_check
    _
  $region11: #{transformer_forward.49} parent=0 // pred_check_branch
    %13 = sbr.rel (0) target = $region13
  $region12: #{transformer_forward.49} parent=0 // pred_region
    _
  $region13: #{transformer_forward.49} parent=0 // pred_fallthru
    _
  %p15 = scmp.eq.s32.totalorder 0, 0
  // Predicated region
  $region14: #{transformer_forward.49} parent=0 // pred_check
    %p16 = pneg %p15
  $region15: #{transformer_forward.49} parent=0 // pred_check_branch
    %18 = sbr.rel (%p16) target = $region17
  $region16: #{transformer_forward.49} parent=0 // pred_region
    %vm19 = vcmask 130048
    %20 = vst.msk [vmem:[#allocation2] sm:$0xff] %vm19, 0.0
    %21 = vst.msk [vmem:[#allocation2 + $0x8] sm:$0xff] %vm19, 0.0
  $region17: #{transformer_forward.49} parent=0 // pred_fallthru
    _
  %v22 = vld [vmem:[#allocation2] sm:$0xff]
  %v23 = vld [vmem:[#allocation2 + $0x8] sm:$0xff]
  %v24 = vld [vmem:[%s0] sm:$0xf]
  %v25 = vld [vmem:[%s0 + $0x4] sm:$0xf]
  %v26 = vld [vmem:[%s1] sm:$0xf]
  %v27 = vld [vmem:[%s1 + $0x4] sm:$0xf]
  %v28 = vld [vmem:[%s1 + $0x8] sm:$0xf]
  %v29 = vld [vmem:[%s1 + $0xc] sm:$0xf]
  %v32 = vunpack.c.l.b16 %v24
  %v33 = vunpack.c.l.b16 %v25
  %v34 = vpack.c.b16 %v33, %v32
  %v39 = vunpack.c.l.b16 %v26
  %v40 = vunpack.c.l.b16 %v27
  %v41 = vunpack.c.l.b16 %v28
  %v42 = vunpack.c.l.b16 %v29
  %v43 = vpack.c.b16 %v40, %v39
  %v44 = vpack.c.b16 %v42, %v41
  %vm47 = vcmask 261120
  %v49 = vsel %vm47, %v34, 0
  %51 = vmatprep.subr.bf16.mxu0 0
  %52 = vmatpush1.bf16.msra.mxu0 %v43
  %53 = vmatprep.subr.bf16.mxu0 0
  %54 = vmatpush1.bf16.msra.mxu0 %v44
  %55 = vmatprep.subr.bf16.mxu0 0
  %56 = vmatpush1.bf16.msra.mxu0 0
  %57 = vmatprep.subr.bf16.mxu0 0
  %58 = vmatpush1.bf16.msra.mxu0 0
  %59 = vmatprep.subr.bf16.mxu0 0
  %60 = vmatpush1.bf16.msra.mxu0 0
  %61 = vmatprep.subr.bf16.mxu0 0
  %62 = vmatpush1.bf16.msra.mxu0 0
  %63 = vmatprep.subr.bf16.mxu0 0
  %64 = vmatpush1.bf16.msra.mxu0 0
  %65 = vmatprep.subr.bf16.mxu0 0
  %66 = vmatpush1.bf16.msra.mxu0 0
  %67 = vmatprep.subr.bf16.mxu0 0
  %68 = vmatpush1.bf16.msra.mxu0 0
  %69 = vmatprep.subr.bf16.mxu0 0
  %70 = vmatpush1.bf16.msra.mxu0 0
  %71 = vmatprep.subr.bf16.mxu0 0
  %72 = vmatpush1.bf16.msra.mxu0 0
  %73 = vmatprep.subr.bf16.mxu0 0
  %74 = vmatpush1.bf16.msra.mxu0 0
  %75 = vmatprep.subr.bf16.mxu0 0
  %76 = vmatpush1.bf16.msra.mxu0 0
  %77 = vmatprep.subr.bf16.mxu0 0
  %78 = vmatpush1.bf16.msra.mxu0 0
  %79 = vmatprep.subr.bf16.mxu0 0
  %80 = vmatpush1.bf16.msra.mxu0 0
  %81 = vmatprep.subr.bf16.mxu0 0
  %82 = vmatpush1.bf16.msra.mxu0 0
  %83 = vmatprep.mubr.bf16.mxu0 0
  %84 = vmatmul.mubr.bf16.gmra.mrb[0].mxu0 %v49
  %v85 = vpop.f32.mrb[0].mxu0
  %v86 = vadd.f32 0.0, %v85
  %v87 = vpop.f32.mrb[0].mxu0
  %v88 = vpop.f32.mrb[0].mxu0
  %v89 = vadd.f32 0.0, %v88
  %v90 = vpop.f32.mrb[0].mxu0
  %91 = vdwg.mxu0
  %v92 = vadd.f32 %v22, %v86
  %v93 = vadd.f32 %v23, %v89
  %vm94 = vcmask 130048
  %95 = vst.msk [vmem:[#allocation2] sm:$0xff] %vm94, %v92
  %96 = vst.msk [vmem:[#allocation2 + $0x8] sm:$0xff] %vm94, %v93
  // Predicated region
  $region18: #{transformer_forward.49} parent=0 // pred_check
    %p97 = pneg %p15
  $region19: #{transformer_forward.49} parent=0 // pred_check_branch
    %99 = sbr.rel (%p97) target = $region21
  $region20: #{transformer_forward.49} parent=0 // pred_region
    %v100 = vld [vmem:[#allocation2] sm:$0xff]
    %v101 = vld [vmem:[#allocation2 + $0x8] sm:$0xff]
    %v102 = vld [vmem:[%s2] sm:$0x1]
    %v104 = vlaneseq
    %v105 = vshrl.u32 %v104, 7
    %v106 = vsub.s32 0, %v105
    %v107 = vrot.slane %v102, %v106
    %v109 = vadd.f32 %v100, %v107
    %v110 = vadd.f32 %v101, %v107
    %v111 = vmul.f32 %v109, 0.5
    %v112 = vmul.f32 %v110, 0.5
    %v113 = vmul.f32 %v109, 0.70710677
    %v114 = vmul.f32 %v110, 0.70710677
    %v115 = verf.f32.pop %v113
    %v116 = verf.f32.pop %v114
    %v117 = vadd.f32 %v115, 1.0
    %v118 = vadd.f32 %v116, 1.0
    %v119 = vmul.f32 %v111, %v117
    %v120 = vmul.f32 %v112, %v118
    %v121 = vpack.c.bf16 %v120, %v119
    %v123 = vunpack.c.l.b16 %v121
    %v124 = vunpack.c.h.b16 %v121
    %v125 = vpack.c.b16 %v123, %v123
    %v126 = vpack.c.b16 %v124, %v124
    %vm129 = vcmask 125952
    %130 = vst.msk [vmem:[%s3] sm:$0xf] %vm129, %v125
    %131 = vst.msk [vmem:[%s3 + $0x4] sm:$0xf] %vm129, %v126
  $region21: #{transformer_forward.49} parent=0 // pred_fallthru
    _
  // Predicated region
  $region22: #{transformer_forward.49} parent=0 // pred_check
    _
  $region23: #{transformer_forward.49} parent=0 // pred_check_branch
    %133 = sbr.rel (0) target = $region25
  $region24: #{transformer_forward.49} parent=0 // pred_region
    _
  $region25: #{transformer_forward.49} parent=0 // pred_fallthru
    _
  // Predicated region
  $region26: #{transformer_forward.49} parent=0 // pred_check
    _
  $region27: #{transformer_forward.49} parent=0 // pred_check_branch
    %135 = sbr.rel (0) target = $region29
  $region28: #{transformer_forward.49} parent=0 // pred_region
    _
  $region29: #{transformer_forward.49} parent=0 // pred_fallthru
    _

// kernel: transformer_forward.51
$region0: #{transformer_forward.51}
  #allocation0 [shape = 'u32[]', space=smem, size = 0x4, offset = 0x4, fixed_abs, tag = 'smem constant byte address 0x4 - core index']
  #allocation1 [shape = 'u32[144,128]{1,0:T(1,128)}', space=vmem, size = 0x12000, scoped, tag = 'internal scratch']
  #allocation2 [shape = 'f32[16,29]{1,0:T(8,128)}', space=vmem, size = 0x2000, scoped, tag = 'scratch operand']
  %s0 = inlined_call_operand.vmem [shape: bf16[16,16], index: 0, kind: input, shape index: {}]
  %s1 = inlined_call_operand.vmem [shape: bf16[16,29], index: 1, kind: input, shape index: {}]
  %s2 = inlined_call_operand.vmem [shape: f32[1,29], index: 2, kind: input, shape index: {}]
  %s3 = inlined_call_operand.hbm [shape: f32[16,29], index: 3, kind: output, shape index: {}]
  %s4 = sld [smem:[#allocation0]]
  $region30: #{transformer_forward.51} parent=0
    _
  %s6 = ssub.s32 1, %s4
  %s7 = scalar_select 0, %s6, %s4
  $region1: #{transformer_forward.51} parent=0
    #allocation3 [shape = 'u8[8192]{0}', space=vmem, size = 0x2000, scoped, tag = 'output window, operand 0, single buffered']
    #allocation4 [shape = 's32[1]{0}', space=sflag, size = 0x4, scoped, tag = 'scoped memory for transformer_forward.51']
    %8 = vsyncpa [#allocation4], 0
    // Predicated region
    $region2: #{transformer_forward.51} parent=1 // pred_check
      _
    $region3: #{transformer_forward.51} parent=1 // pred_check_branch
      %10 = sbr.rel (0) target = $region5
    $region4: #{transformer_forward.51} parent=1 // pred_region
      _
    $region5: #{transformer_forward.51} parent=1 // pred_fallthru
      _
    // Predicated region
    $region6: #{transformer_forward.51} parent=1 // pred_check
      _
    $region7: #{transformer_forward.51} parent=1 // pred_check_branch
      %12 = sbr.rel (0) target = $region9
    $region8: #{transformer_forward.51} parent=1 // pred_region
      _
    $region9: #{transformer_forward.51} parent=1 // pred_fallthru
      _
    // Predicated region
    $region10: #{transformer_forward.51} parent=1 // pred_check
      _
    $region11: #{transformer_forward.51} parent=1 // pred_check_branch
      %14 = sbr.rel (0) target = $region13
    $region12: #{transformer_forward.51} parent=1 // pred_region
      _
    $region13: #{transformer_forward.51} parent=1 // pred_fallthru
      _
    %p16 = scmp.eq.s32.totalorder 0, 0
    // Predicated region
    $region14: #{transformer_forward.51} parent=1 // pred_check
      %p17 = pneg %p16
    $region15: #{transformer_forward.51} parent=1 // pred_check_branch
      %19 = sbr.rel (%p17) target = $region17
    $region16: #{transformer_forward.51} parent=1 // pred_region
      %vm20 = vcmask 236544
      %21 = vst.msk [vmem:[#allocation2] sm:$0xff] %vm20, 0.0
      %22 = vst.msk [vmem:[#allocation2 + $0x8] sm:$0xff] %vm20, 0.0
    $region17: #{transformer_forward.51} parent=1 // pred_fallthru
      _
    %v23 = vld [vmem:[#allocation2] sm:$0xff]
    %v24 = vld [vmem:[#allocation2 + $0x8] sm:$0xff]
    %v25 = vld [vmem:[%s0] sm:$0xf]
    %v26 = vld [vmem:[%s0 + $0x4] sm:$0xf]
    %v27 = vld [vmem:[%s1] sm:$0xf]
    %v28 = vld [vmem:[%s1 + $0x4] sm:$0xf]
    %v31 = vunpack.c.l.b16 %v25
    %v32 = vunpack.c.l.b16 %v26
    %v33 = vpack.c.b16 %v32, %v31
    %v36 = vunpack.c.l.b16 %v27
    %v37 = vunpack.c.l.b16 %v28
    %v38 = vpack.c.b16 %v37, %v36
    %vm40 = vcmask 130048
    %v42 = vsel %vm40, %v33, 0
    %44 = vmatprep.subr.bf16.mxu0 0
    %45 = vmatpush1.bf16.msra.mxu0 %v38
    %46 = vmatprep.subr.bf16.mxu0 0
    %47 = vmatpush1.bf16.msra.mxu0 0
    %48 = vmatprep.subr.bf16.mxu0 0
    %49 = vmatpush1.bf16.msra.mxu0 0
    %50 = vmatprep.subr.bf16.mxu0 0
    %51 = vmatpush1.bf16.msra.mxu0 0
    %52 = vmatprep.subr.bf16.mxu0 0
    %53 = vmatpush1.bf16.msra.mxu0 0
    %54 = vmatprep.subr.bf16.mxu0 0
    %55 = vmatpush1.bf16.msra.mxu0 0
    %56 = vmatprep.subr.bf16.mxu0 0
    %57 = vmatpush1.bf16.msra.mxu0 0
    %58 = vmatprep.subr.bf16.mxu0 0
    %59 = vmatpush1.bf16.msra.mxu0 0
    %60 = vmatprep.subr.bf16.mxu0 0
    %61 = vmatpush1.bf16.msra.mxu0 0
    %62 = vmatprep.subr.bf16.mxu0 0
    %63 = vmatpush1.bf16.msra.mxu0 0
    %64 = vmatprep.subr.bf16.mxu0 0
    %65 = vmatpush1.bf16.msra.mxu0 0
    %66 = vmatprep.subr.bf16.mxu0 0
    %67 = vmatpush1.bf16.msra.mxu0 0
    %68 = vmatprep.subr.bf16.mxu0 0
    %69 = vmatpush1.bf16.msra.mxu0 0
    %70 = vmatprep.subr.bf16.mxu0 0
    %71 = vmatpush1.bf16.msra.mxu0 0
    %72 = vmatprep.subr.bf16.mxu0 0
    %73 = vmatpush1.bf16.msra.mxu0 0
    %74 = vmatprep.subr.bf16.mxu0 0
    %75 = vmatpush1.bf16.msra.mxu0 0
    %76 = vmatprep.mubr.bf16.mxu0 0
    %77 = vmatmul.mubr.bf16.gmra.mrb[0].mxu0 %v42
    %v78 = vpop.f32.mrb[0].mxu0
    %v79 = vadd.f32 0.0, %v78
    %v80 = vpop.f32.mrb[0].mxu0
    %v81 = vpop.f32.mrb[0].mxu0
    %v82 = vadd.f32 0.0, %v81
    %v83 = vpop.f32.mrb[0].mxu0
    %84 = vdwg.mxu0
    %v85 = vadd.f32 %v23, %v79
    %v86 = vadd.f32 %v24, %v82
    %vm87 = vcmask 236544
    %88 = vst.msk [vmem:[#allocation2] sm:$0xff] %vm87, %v85
    %89 = vst.msk [vmem:[#allocation2 + $0x8] sm:$0xff] %vm87, %v86
    // Predicated region
    $region18: #{transformer_forward.51} parent=1 // pred_check
      %p90 = pneg %p16
    $region19: #{transformer_forward.51} parent=1 // pred_check_branch
      %92 = sbr.rel (%p90) target = $region21
    $region20: #{transformer_forward.51} parent=1 // pred_region
      %v93 = vld [vmem:[#allocation2] sm:$0xff]
      %v94 = vld [vmem:[#allocation2 + $0x8] sm:$0xff]
      %v95 = vld [vmem:[%s2] sm:$0x1]
      %v97 = vlaneseq
      %v98 = vshrl.u32 %v97, 7
      %v99 = vsub.s32 0, %v98
      %v100 = vrot.slane %v95, %v99
      %v102 = vadd.f32 %v93, %v100
      %v103 = vadd.f32 %v94, %v100
      %104 = vst.msk [vmem:[#allocation3] sm:$0xff] %vm87, %v102
      %105 = vst.msk [vmem:[#allocation3 + $0x8] sm:$0xff] %vm87, %v103
    $region21: #{transformer_forward.51} parent=1 // pred_fallthru
      _
    // Predicated region
    $region22: #{transformer_forward.51} parent=1 // pred_check
      _
    $region23: #{transformer_forward.51} parent=1 // pred_check_branch
      %107 = sbr.rel (0) target = $region25
    $region24: #{transformer_forward.51} parent=1 // pred_region
      %s109 = ssub.s32 256, 256
      %110 = vsyncadd [#allocation4], %s109
      %s111 = sshll.u32 [#allocation3], 4
      %s112 = int_to_ptr.vmem [resolvable:$true] %s111
      %117 = dma.vmem_to_hbm [thread:$0]  %s112, 256, %s3, [#allocation4], 128, 128, 8
    $region25: #{transformer_forward.51} parent=1 // pred_fallthru
      _
    // Predicated region
    $region26: #{transformer_forward.51} parent=1 // pred_check
      _
    $region27: #{transformer_forward.51} parent=1 // pred_check_branch
      %119 = sbr.rel (0) target = $region29
    $region28: #{transformer_forward.51} parent=1 // pred_region
      %120 = dma.done [#allocation4], 256
    $region29: #{transformer_forward.51} parent=1 // pred_fallthru
      _
    %121 = vsyncpa [#allocation4], 1

</llo_original>
